<compile_context>
chip_gen: v7x
topology: tpu7x:2x2x1
jax: 0.10.0
libtpu: 0.0.40
codegen_flags: <defaults>
</compile_context>

<pallas_src>
import functools

import jax
import jax.numpy as jnp
from jax import lax
from jax.experimental import pallas as pl
from jax.experimental.pallas import tpu as pltpu

EPS = 1e-5                       # PyTorch BatchNorm2d default eps
VMEM_LIMIT = 32 * 1024 * 1024    # scoped-VMEM budget, safe headroom on v5e/v6e/v7x


def _round_up(x, m):
    return (x + m - 1) // m * m


# ---------------------------------------------------------------------------
# Kernel 1: tiled matmul + bias + ReLU6 (stem 3x3 via im2col, final 1x1 24->1280)
# Grid = (M tiles, N tiles); K (<=32) fully resident in one block.
# ---------------------------------------------------------------------------
def _matmul_bias_kernel(x_ref, w_ref, b_ref, o_ref, *, relu6):
    y = jnp.dot(x_ref[...], w_ref[...], preferred_element_type=jnp.float32)
    y = y + b_ref[...]
    if relu6:
        y = jnp.clip(y, 0.0, 6.0)
    o_ref[...] = y.astype(o_ref.dtype)


def matmul_bias_act(x2d, w2d, bias, *, relu6, out_dtype):
    """(M, K) @ (K, N) + bias (+ ReLU6), tiled over (M, N) with pipelined BlockSpecs."""
    m, k = x2d.shape
    n = w2d.shape[1]

    # Row tiling: pad M so the grid divides evenly (padded rows sliced off after).
    tm = 512 if m >= 512 else _round_up(m, 8)
    mp = _round_up(m, tm)
    if mp != m:
        x2d = jnp.pad(x2d, ((0, mp - m), (0, 0)))

    # Lane tiling: 256-wide tiles (MXU friendly on v6e/v7x, 2x128 on v5e) when they
    # divide N, otherwise 128, otherwise the full (small) channel count.
    if n % 256 == 0:
        tn = 256
    elif n % 128 == 0:
        tn = 128
    else:
        tn = n

    grid = (mp // tm, n // tn)
    out = pl.pallas_call(
        functools.partial(_matmul_bias_kernel, relu6=relu6),
        grid=grid,
        in_specs=[
            pl.BlockSpec((tm, k), lambda i, j: (i, 0)),
            pl.BlockSpec((k, tn), lambda i, j: (0, j)),
            pl.BlockSpec((1, tn), lambda i, j: (0, j)),
        ],
        out_specs=pl.BlockSpec((tm, tn), lambda i, j: (i, j)),
        out_shape=jax.ShapeDtypeStruct((mp, n), out_dtype),
        compiler_params=pltpu.CompilerParams(
            dimension_semantics=("parallel", "parallel"),
            vmem_limit_bytes=VMEM_LIMIT),
    )(x2d, w2d, bias)
    return out[:m] if mp != m else out


# ---------------------------------------------------------------------------
# Kernel 2: fused InvertedResidual (expand 1x1 -> dw 3x3 -> project 1x1 + res)
# Grid = (batch, output row).  Hidden (6x expanded) activation never hits HBM.
# ---------------------------------------------------------------------------
def _fused_ir_kernel(*refs, stride, use_res, H, W, Wo):
    n_rows = 3 * stride
    x_refs = refs[:n_rows]
    (w_exp_ref, b_exp_ref, w_dw_ref,
     b_dw_ref, w_proj_ref, b_proj_ref) = refs[n_rows:n_rows + 6]
    res_ref = refs[n_rows + 6] if use_res else None
    o_ref = refs[-1]

    o = pl.program_id(1)                      # output row index
    w_exp = w_exp_ref[...]                    # (Cin, Ch) bf16, BN scale folded
    b_exp = b_exp_ref[...]                    # (1, Ch)   f32
    w_dw = w_dw_ref[...]                      # (9, Ch)   f32, BN scale folded
    ch = w_dw.shape[1]

    # Expand (1x1 conv + bias + ReLU6) each needed padded input row, then zero the
    # spatial-padding positions so the depthwise conv sees the same zero-padded
    # hidden tensor as the reference network (expand(0-pad) != 0 because of bias).
    e_rows = {}
    for kh in range(3):
        for p in range(stride):
            x_row = x_refs[kh * stride + p][...]            # (Wc_p, Cin) bf16
            e = jnp.dot(x_row, w_exp, preferred_element_type=jnp.float32) + b_exp
            e = jnp.clip(e, 0.0, 6.0)
            rr = o * stride + kh                            # padded row index
            row_ok = jnp.logical_and(rr >= 1, rr <= H)
            col = lax.broadcasted_iota(jnp.int32, (x_row.shape[0], 1), 0) * stride + p
            col_ok = jnp.logical_and(col >= 1, col <= W)
            e = jnp.where(jnp.logical_and(row_ok, col_ok), e, 0.0)
            e_rows[(kh, p)] = e

    # Depthwise 3x3 (+ bias + ReLU6): 9 static-slice taps, f32 VPU MACs.
    acc = jnp.zeros((Wo, ch), jnp.float32)
    for kh in range(3):
        for kw in range(3):
            p = kw % stride
            j0 = kw // stride
            tap = e_rows[(kh, p)][j0:j0 + Wo, :]
            acc = acc + tap * w_dw[kh * 3 + kw:kh * 3 + kw + 1, :]
    h = jnp.clip(acc + b_dw_ref[...], 0.0, 6.0)

    # Project 1x1 + bias (+ residual); last BN has no activation.
    y = jnp.dot(h.astype(jnp.bfloat16), w_proj_ref[...],
                preferred_element_type=jnp.float32)
    y = y + b_proj_ref[...]
    if use_res:
        y = y + res_ref[...].astype(jnp.float32)
    o_ref[...] = y.astype(o_ref.dtype)


def inverted_residual(x, params, *, stride):
    """Fused InvertedResidual block on NHWC bf16 input."""
    n, h, w, cin = x.shape
    ch = params['w_exp'].shape[1]
    cout = params['w_proj'].shape[1]
    use_res = (stride == 1 and cin == cout)
    ho = (h + 2 - 3) // stride + 1
    wo = (w + 2 - 3) // stride + 1

    xp = jnp.pad(x, ((0, 0), (1, 1), (1, 1), (0, 0)))
    # Column-parity split: makes the stride-`stride` column taps static slices in-kernel.
    cols = [xp[:, :, p::stride, :] for p in range(stride)]

    operands, in_specs = [], []
    for kh in range(3):
        for p in range(stride):
            wc = cols[p].shape[2]
            operands.append(cols[p])
            in_specs.append(pl.BlockSpec(
                (None, None, wc, cin),
                lambda b, o, kh=kh, s=stride: (b, o * s + kh, 0, 0)))

    operands += [params['w_exp'], params['b_exp'], params['w_dw'],
                 params['b_dw'], params['w_proj'], params['b_proj']]
    in_specs += [
        pl.BlockSpec((cin, ch), lambda b, o: (0, 0)),
        pl.BlockSpec((1, ch), lambda b, o: (0, 0)),
        pl.BlockSpec((9, ch), lambda b, o: (0, 0)),
        pl.BlockSpec((1, ch), lambda b, o: (0, 0)),
        pl.BlockSpec((ch, cout), lambda b, o: (0, 0)),
        pl.BlockSpec((1, cout), lambda b, o: (0, 0)),
    ]
    if use_res:
        operands.append(x)
        in_specs.append(pl.BlockSpec((None, None, w, cin),
                                     lambda b, o: (b, o, 0, 0)))

    kern = functools.partial(_fused_ir_kernel, stride=stride, use_res=use_res,
                             H=h, W=w, Wo=wo)
    return pl.pallas_call(
        kern,
        grid=(n, ho),
        in_specs=in_specs,
        out_specs=pl.BlockSpec((None, None, wo, cout), lambda b, o: (b, o, 0, 0)),
        out_shape=jax.ShapeDtypeStruct((n, ho, wo, cout), jnp.bfloat16),
        compiler_params=pltpu.CompilerParams(
            dimension_semantics=("parallel", "parallel"),
            vmem_limit_bytes=VMEM_LIMIT),
    )(*operands)


# ---------------------------------------------------------------------------
# Conv wrappers (JAX glue around the tiled matmul kernel)
# ---------------------------------------------------------------------------
def conv3x3_bn_relu6_s2(x, layer):
    """Stem: 3x3 conv stride 2 pad 1 + folded-BN + ReLU6 via im2col + tiled matmul."""
    stride = 2
    n, h, w, cin = x.shape
    cout = layer['w'].shape[1]
    kp = layer['w'].shape[0]                 # 9*cin zero-padded to a multiple of 8
    ho = (h + 2 - 3) // stride + 1
    wo = (w + 2 - 3) // stride + 1
    xp = jnp.pad(x, ((0, 0), (1, 1), (1, 1), (0, 0)))
    patches = []
    for kh in range(3):
        for kw in range(3):
            patches.append(xp[:, kh:kh + stride * (ho - 1) + 1:stride,
                               kw:kw + stride * (wo - 1) + 1:stride, :])
    pat = jnp.stack(patches, axis=3).reshape(n * ho * wo, 9 * cin)   # (kh,kw,ci) order
    if kp > 9 * cin:
        pat = jnp.pad(pat, ((0, 0), (0, kp - 9 * cin)))
    y = matmul_bias_act(pat, layer['w'], layer['b'], relu6=True, out_dtype=jnp.bfloat16)
    return y.reshape(n, ho, wo, cout)


def conv1x1_bn_relu6(x, layer, *, out_dtype):
    n, h, w, cin = x.shape
    cout = layer['w'].shape[1]
    y = matmul_bias_act(x.reshape(n * h * w, cin), layer['w'], layer['b'],
                        relu6=True, out_dtype=out_dtype)
    return y.reshape(n, h, w, cout)


# ---------------------------------------------------------------------------
# Parameters: raw (PyTorch layout) init + prep (fold frozen BN, transpose, bf16)
# ---------------------------------------------------------------------------
def _make_divisible(v, divisor, min_value=None):
    if min_value is None:
        min_value = divisor
    new_v = max(min_value, int(v + divisor / 2) // divisor * divisor)
    if new_v < 0.9 * v:
        new_v += divisor
    return new_v


def make_bn(key, c):
    k1, k2, k3, k4 = jax.random.split(key, 4)
    gamma = 1.0 + 0.1 * jax.random.normal(k1, (c,), jnp.float32)
    beta = 0.1 * jax.random.normal(k2, (c,), jnp.float32)
    mean = 0.1 * jax.random.normal(k3, (c,), jnp.float32)
    var = jax.random.uniform(k4, (c,), jnp.float32, minval=0.5, maxval=1.5)
    return gamma, beta, mean, var


def make_conv(key, cout, cin, kh, kw):
    fan_in = cin * kh * kw
    return jax.random.normal(key, (cout, cin, kh, kw), jnp.float32) * (2.0 / fan_in) ** 0.5


def make_ir_raw(keys, inp, oup, t):
    hidden = inp * t
    w1 = make_conv(next(keys), hidden, inp, 1, 1)[:, :, 0, 0]
    bn1 = make_bn(next(keys), hidden)
    wdw = make_conv(next(keys), hidden, 1, 3, 3)
    bn2 = make_bn(next(keys), hidden)
    w2 = make_conv(next(keys), oup, hidden, 1, 1)[:, :, 0, 0]
    bn3 = make_bn(next(keys), oup)
    return (w1, bn1, wdw, bn2, w2, bn3)


def init_raw_params(key):
    keys = iter(jax.random.split(key, 64))
    c_in = _make_divisible(32 * 1.0, 8)          # 32
    last_channel = _make_divisible(1280, 8)      # 1280
    p = {}
    p['l0_w'] = make_conv(next(keys), c_in, 3, 3, 3)
    p['l0_bn'] = make_bn(next(keys), c_in)
    p['l1'] = make_ir_raw(keys, 32, 16, 1)       # [1, 16, 1, 1]
    p['l2'] = make_ir_raw(keys, 16, 24, 6)       # [6, 24, 2, 2] first block, stride 2
    p['l3'] = make_ir_raw(keys, 24, 24, 6)       # [6, 24, 2, 2] second block, stride 1
    p['l4_w'] = make_conv(next(keys), last_channel, 24, 1, 1)[:, :, 0, 0]
    p['l4_bn'] = make_bn(next(keys), last_channel)
    return p


def _fold_bn(bn):
    gamma, beta, mean, var = bn
    scale = gamma / jnp.sqrt(var + EPS)
    bias = beta - mean * scale
    return scale, bias


def prep_conv3x3(w, bn):
    # w: (Cout, Cin, 3, 3).  Fold BN scale, reorder to im2col (kh,kw,ci)->co layout,
    # zero-pad K (27) to a multiple of 8 once, cast to bf16.
    scale, bias = _fold_bn(bn)
    cout, cin = w.shape[0], w.shape[1]
    w2 = jnp.transpose(w * scale[:, None, None, None], (2, 3, 1, 0)).reshape(9 * cin, cout)
    kp = _round_up(9 * cin, 8)
    if kp > 9 * cin:
        w2 = jnp.pad(w2, ((0, kp - 9 * cin), (0, 0)))
    return {'w': w2.astype(jnp.bfloat16),
            'b': bias.reshape(1, cout).astype(jnp.float32)}


def prep_conv1x1(w_oi, bn):
    # w_oi: (Cout, Cin).  Fold BN scale into the weight, transpose to (Cin, Cout).
    scale, bias = _fold_bn(bn)
    cout = w_oi.shape[0]
    return {'w': (w_oi * scale[:, None]).T.astype(jnp.bfloat16),
            'b': bias.reshape(1, cout).astype(jnp.float32)}


def prep_ir(raw):
    w1, bn1, wdw, bn2, w2, bn3 = raw
    s1, b1 = _fold_bn(bn1)
    s2, b2 = _fold_bn(bn2)
    s3, b3 = _fold_bn(bn3)
    ch = w1.shape[0]
    cout = w2.shape[0]
    return {
        'w_exp': (w1 * s1[:, None]).T.astype(jnp.bfloat16),               # (Cin, Ch)
        'b_exp': b1.reshape(1, ch).astype(jnp.float32),
        'w_dw': jnp.transpose(wdw[:, 0] * s2[:, None, None],
                              (1, 2, 0)).reshape(9, ch).astype(jnp.float32),
        'b_dw': b2.reshape(1, ch).astype(jnp.float32),
        'w_proj': (w2 * s3[:, None]).T.astype(jnp.bfloat16),              # (Ch, Cout)
        'b_proj': b3.reshape(1, cout).astype(jnp.float32),
    }


def prepare_params(raw):
    return {
        'l0': prep_conv3x3(raw['l0_w'], raw['l0_bn']),
        'l1': prep_ir(raw['l1']),
        'l2': prep_ir(raw['l2']),
        'l3': prep_ir(raw['l3']),
        'l4': prep_conv1x1(raw['l4_w'], raw['l4_bn']),
    }


# ---------------------------------------------------------------------------
# Forward
# ---------------------------------------------------------------------------
def mobilenet_forward(image_nchw, params):
    """MobileNet(out_strides=[4]).forward({'image': image_nchw}) — inference, frozen BN."""
    x = jnp.transpose(image_nchw, (0, 2, 3, 1)).astype(jnp.bfloat16)   # NCHW -> NHWC
    x = conv3x3_bn_relu6_s2(x, params['l0'])                        # features[0], stride 2
    x = inverted_residual(x, params['l1'], stride=1)                # features[1]
    x = inverted_residual(x, params['l2'], stride=2)                # features[2], stride 4
    x = inverted_residual(x, params['l3'], stride=1)                # features[3] (residual)
    x = conv1x1_bn_relu6(x, params['l4'], out_dtype=jnp.float32)    # features[4]
    feat = jnp.transpose(x, (0, 3, 1, 2))                           # back to NCHW
    return {'features': [feat], 'strides': [4]}


if __name__ == "__main__":
    key = jax.random.PRNGKey(0)
    kp, kx = jax.random.split(key)
    params = prepare_params(init_raw_params(kp))
    image = jax.random.normal(kx, (2, 3, 16, 16), jnp.float32)   # NCHW, small spatial

    fwd = jax.jit(lambda img: mobilenet_forward(img, params))
    out = fwd(image)
    feat = out['features'][0]
    jax.block_until_ready(feat)

    assert feat.shape == (2, 1280, 4, 4), feat.shape             # stride-4 feature map
    assert out['strides'] == [4]
    assert bool(jnp.all(jnp.isfinite(feat)))
    print("KERNEL_OK")
</pallas_src>

<mosaic_0001>
module attributes {stable_mosaic.version = 11 : i64} {
  func.func @_matmul_bias_kernel(%arg0: i32, %arg1: i32, %arg2: memref<128x32xbf16, #tpu.memory_space<vmem>>, %arg3: memref<32x32xbf16, #tpu.memory_space<vmem>>, %arg4: memref<1x32xf32, #tpu.memory_space<vmem>>, %arg5: memref<128x32xbf16, #tpu.memory_space<vmem>>) attributes {dimension_semantics = [#tpu.dimension_semantics<parallel>, #tpu.dimension_semantics<parallel>], iteration_bounds = array<i64: 1, 1>, scalar_prefetch = 0 : i64, scratch_operands = 0 : i64, tpu.core_type = #tpu.core_type<tc>, window_params = [{transform_indices = @transform_0, window_bounds = array<i64: 128, 32>}, {transform_indices = @transform_1, window_bounds = array<i64: 32, 32>}, {transform_indices = @transform_2, window_bounds = array<i64: 1, 32>}, {transform_indices = @transform_3, window_bounds = array<i64: 128, 32>}]} {
    %c0 = arith.constant 0 : index
    %c0_0 = arith.constant 0 : index
    %0 = vector.load %arg2[%c0, %c0_0] : memref<128x32xbf16, #tpu.memory_space<vmem>>, vector<128x32xbf16>
    %c0_1 = arith.constant 0 : index
    %c0_2 = arith.constant 0 : index
    %1 = vector.load %arg3[%c0_1, %c0_2] : memref<32x32xbf16, #tpu.memory_space<vmem>>, vector<32x32xbf16>
    %cst = arith.constant dense<0.000000e+00> : vector<128x32xf32>
    %2 = tpu.matmul %0, %1, %cst {dimension_numbers = #tpu.dot_dimension_numbers<[1], [0], [0], [1], [0, 0, 1, 1], [], []>} : vector<128x32xbf16>, vector<32x32xbf16>, vector<128x32xf32> -> vector<128x32xf32>
    %c0_3 = arith.constant 0 : index
    %c0_4 = arith.constant 0 : index
    %3 = vector.load %arg4[%c0_3, %c0_4] : memref<1x32xf32, #tpu.memory_space<vmem>>, vector<1x32xf32>
    %4 = vector.broadcast %3 : vector<1x32xf32> to vector<128x32xf32>
    %5 = arith.addf %2, %4 : vector<128x32xf32>
    %cst_5 = arith.constant 0.000000e+00 : f32
    %cst_6 = arith.constant 6.000000e+00 : f32
    %6 = vector.broadcast %cst_5 : f32 to vector<128x32xf32>
    %7 = arith.maximumf %6, %5 : vector<128x32xf32>
    %8 = vector.broadcast %cst_6 : f32 to vector<128x32xf32>
    %9 = arith.minimumf %8, %7 : vector<128x32xf32>
    %10 = arith.truncf %9 : vector<128x32xf32> to vector<128x32xbf16>
    %c0_7 = arith.constant 0 : index
    %c0_8 = arith.constant 0 : index
    %11 = vector.load %arg5[%c0_7, %c0_8] : memref<128x32xbf16, #tpu.memory_space<vmem>>, vector<128x32xbf16>
    tpu.vector_store %arg5[%c0_7, %c0_8], %10 {strides = array<i32>} : memref<128x32xbf16, #tpu.memory_space<vmem>>, vector<128x32xbf16>,
    return
  }
  func.func @transform_0(%arg0: i32, %arg1: i32) -> (i32, i32) {
    %c0_i32 = arith.constant 0 : i32
    %c0_i32_0 = arith.constant 0 : i32
    return %arg0, %c0_i32 : i32, i32
  }
  func.func @transform_1(%arg0: i32, %arg1: i32) -> (i32, i32) {
    %c0_i32 = arith.constant 0 : i32
    %c0_i32_0 = arith.constant 0 : i32
    return %c0_i32, %arg1 : i32, i32
  }
  func.func @transform_2(%arg0: i32, %arg1: i32) -> (i32, i32) {
    %c0_i32 = arith.constant 0 : i32
    %c0_i32_0 = arith.constant 0 : i32
    return %c0_i32, %arg1 : i32, i32
  }
  func.func @transform_3(%arg0: i32, %arg1: i32) -> (i32, i32) {
    %c0_i32 = arith.constant 0 : i32
    return %arg0, %arg1 : i32, i32
  }
}

module attributes {stable_mosaic.version = 11 : i64} {
  func.func @_fused_ir_kernel(%arg0: i32, %arg1: i32, %arg2: memref<1x1x10x32xbf16, #tpu.memory_space<vmem>>, %arg3: memref<1x1x10x32xbf16, #tpu.memory_space<vmem>>, %arg4: memref<1x1x10x32xbf16, #tpu.memory_space<vmem>>, %arg5: memref<32x32xbf16, #tpu.memory_space<vmem>>, %arg6: memref<1x32xf32, #tpu.memory_space<vmem>>, %arg7: memref<9x32xf32, #tpu.memory_space<vmem>>, %arg8: memref<1x32xf32, #tpu.memory_space<vmem>>, %arg9: memref<32x16xbf16, #tpu.memory_space<vmem>>, %arg10: memref<1x16xf32, #tpu.memory_space<vmem>>, %arg11: memref<1x1x8x16xbf16, #tpu.memory_space<vmem>>) attributes {dimension_semantics = [#tpu.dimension_semantics<parallel>, #tpu.dimension_semantics<parallel>], iteration_bounds = array<i64: 2, 8>, scalar_prefetch = 0 : i64, scratch_operands = 0 : i64, tpu.core_type = #tpu.core_type<tc>, window_params = [{transform_indices = @transform_0, window_bounds = array<i64: 1, 1, 10, 32>}, {transform_indices = @transform_1, window_bounds = array<i64: 1, 1, 10, 32>}, {transform_indices = @transform_2, window_bounds = array<i64: 1, 1, 10, 32>}, {pipeline_mode = #tpu.pipeline_mode<synchronous>, transform_indices = @transform_3, window_bounds = array<i64: 32, 32>}, {pipeline_mode = #tpu.pipeline_mode<synchronous>, transform_indices = @transform_4, window_bounds = array<i64: 1, 32>}, {pipeline_mode = #tpu.pipeline_mode<synchronous>, transform_indices = @transform_5, window_bounds = array<i64: 9, 32>}, {pipeline_mode = #tpu.pipeline_mode<synchronous>, transform_indices = @transform_6, window_bounds = array<i64: 1, 32>}, {pipeline_mode = #tpu.pipeline_mode<synchronous>, transform_indices = @transform_7, window_bounds = array<i64: 32, 16>}, {pipeline_mode = #tpu.pipeline_mode<synchronous>, transform_indices = @transform_8, window_bounds = array<i64: 1, 16>}, {transform_indices = @transform_9, window_bounds = array<i64: 1, 1, 8, 16>}]} {
    %c0 = arith.constant 0 : index
    %c0_0 = arith.constant 0 : index
    %0 = vector.load %arg5[%c0, %c0_0] : memref<32x32xbf16, #tpu.memory_space<vmem>>, vector<32x32xbf16>
    %c0_1 = arith.constant 0 : index
    %c0_2 = arith.constant 0 : index
    %1 = vector.load %arg6[%c0_1, %c0_2] : memref<1x32xf32, #tpu.memory_space<vmem>>, vector<1x32xf32>
    %c0_3 = arith.constant 0 : index
    %c0_4 = arith.constant 0 : index
    %2 = vector.load %arg7[%c0_3, %c0_4] : memref<9x32xf32, #tpu.memory_space<vmem>>, vector<9x32xf32>
    %c0_5 = arith.constant 0 : index
    %c0_6 = arith.constant 0 : index
    %c0_7 = arith.constant 0 : index
    %c0_8 = arith.constant 0 : index
    %3 = vector.load %arg2[%c0_5, %c0_6, %c0_7, %c0_8] : memref<1x1x10x32xbf16, #tpu.memory_space<vmem>>, vector<1x1x10x32xbf16>
    %4 = vector.shape_cast %3 : vector<1x1x10x32xbf16> to vector<10x32xbf16>
    %cst = arith.constant dense<0.000000e+00> : vector<10x32xf32>
    %5 = tpu.matmul %4, %0, %cst {dimension_numbers = #tpu.dot_dimension_numbers<[1], [0], [0], [1], [0, 0, 1, 1], [], []>} : vector<10x32xbf16>, vector<32x32xbf16>, vector<10x32xf32> -> vector<10x32xf32>
    %6 = vector.broadcast %1 : vector<1x32xf32> to vector<10x32xf32>
    %7 = arith.addf %5, %6 : vector<10x32xf32>
    %cst_9 = arith.constant 0.000000e+00 : f32
    %cst_10 = arith.constant 6.000000e+00 : f32
    %8 = vector.broadcast %cst_9 : f32 to vector<10x32xf32>
    %9 = arith.maximumf %8, %7 : vector<10x32xf32>
    %10 = vector.broadcast %cst_10 : f32 to vector<10x32xf32>
    %11 = arith.minimumf %10, %9 : vector<10x32xf32>
    %c1_i32 = arith.constant 1 : i32
    %12 = arith.muli %arg1, %c1_i32 : i32
    %c0_i32 = arith.constant 0 : i32
    %13 = arith.addi %12, %c0_i32 : i32
    %c1_i32_11 = arith.constant 1 : i32
    %14 = arith.cmpi sge, %13, %c1_i32_11 : i32
    %c8_i32 = arith.constant 8 : i32
    %15 = arith.cmpi sle, %13, %c8_i32 : i32
    %16 = arith.andi %14, %15 : i1
    %17 = tpu.iota {dimensions = array<i32: 0>} : vector<10x1xi32>
    %c1_i32_12 = arith.constant 1 : i32
    %18 = vector.broadcast %c1_i32_12 : i32 to vector<10x1xi32>
    %19 = arith.muli %17, %18 : vector<10x1xi32>
    %c0_i32_13 = arith.constant 0 : i32
    %20 = vector.broadcast %c0_i32_13 : i32 to vector<10x1xi32>
    %21 = arith.addi %19, %20 : vector<10x1xi32>
    %c1_i32_14 = arith.constant 1 : i32
    %22 = vector.broadcast %c1_i32_14 : i32 to vector<10x1xi32>
    %23 = arith.cmpi sge, %21, %22 : vector<10x1xi32>
    %c8_i32_15 = arith.constant 8 : i32
    %24 = vector.broadcast %c8_i32_15 : i32 to vector<10x1xi32>
    %25 = arith.cmpi sle, %21, %24 : vector<10x1xi32>
    %26 = arith.andi %23, %25 : vector<10x1xi1>
    %27 = vector.broadcast %16 : i1 to vector<10x1xi1>
    %28 = arith.andi %27, %26 : vector<10x1xi1>
    %cst_16 = arith.constant 0.000000e+00 : f32
    %29 = vector.shape_cast %28 : vector<10x1xi1> to vector<10x1xi1>
    %30 = vector.broadcast %29 : vector<10x1xi1> to vector<10x32xi1>
    %31 = vector.broadcast %cst_16 : f32 to vector<10x32xf32>
    %32 = arith.select %30, %11, %31 : vector<10x32xi1>, vector<10x32xf32>
    %c0_17 = arith.constant 0 : index
    %c0_18 = arith.constant 0 : index
    %c0_19 = arith.constant 0 : index
    %c0_20 = arith.constant 0 : index
    %33 = vector.load %arg3[%c0_17, %c0_18, %c0_19, %c0_20] : memref<1x1x10x32xbf16, #tpu.memory_space<vmem>>, vector<1x1x10x32xbf16>
    %34 = vector.shape_cast %33 : vector<1x1x10x32xbf16> to vector<10x32xbf16>
    %cst_21 = arith.constant dense<0.000000e+00> : vector<10x32xf32>
    %35 = tpu.matmul %34, %0, %cst_21 {dimension_numbers = #tpu.dot_dimension_numbers<[1], [0], [0], [1], [0, 0, 1, 1], [], []>} : vector<10x32xbf16>, vector<32x32xbf16>, vector<10x32xf32> -> vector<10x32xf32>
    %36 = vector.broadcast %1 : vector<1x32xf32> to vector<10x32xf32>
    %37 = arith.addf %35, %36 : vector<10x32xf32>
    %cst_22 = arith.constant 0.000000e+00 : f32
    %cst_23 = arith.constant 6.000000e+00 : f32
    %38 = vector.broadcast %cst_22 : f32 to vector<10x32xf32>
    %39 = arith.maximumf %38, %37 : vector<10x32xf32>
    %40 = vector.broadcast %cst_23 : f32 to vector<10x32xf32>
    %41 = arith.minimumf %40, %39 : vector<10x32xf32>
    %c1_i32_24 = arith.constant 1 : i32
    %42 = arith.muli %arg1, %c1_i32_24 : i32
    %c1_i32_25 = arith.constant 1 : i32
    %43 = arith.addi %42, %c1_i32_25 : i32
    %c1_i32_26 = arith.constant 1 : i32
    %44 = arith.cmpi sge, %43, %c1_i32_26 : i32
    %c8_i32_27 = arith.constant 8 : i32
    %45 = arith.cmpi sle, %43, %c8_i32_27 : i32
    %46 = arith.andi %44, %45 : i1
    %47 = tpu.iota {dimensions = array<i32: 0>} : vector<10x1xi32>
    %c1_i32_28 = arith.constant 1 : i32
    %48 = vector.broadcast %c1_i32_28 : i32 to vector<10x1xi32>
    %49 = arith.muli %47, %48 : vector<10x1xi32>
    %c0_i32_29 = arith.constant 0 : i32
    %50 = vector.broadcast %c0_i32_29 : i32 to vector<10x1xi32>
    %51 = arith.addi %49, %50 : vector<10x1xi32>
    %c1_i32_30 = arith.constant 1 : i32
    %52 = vector.broadcast %c1_i32_30 : i32 to vector<10x1xi32>
    %53 = arith.cmpi sge, %51, %52 : vector<10x1xi32>
    %c8_i32_31 = arith.constant 8 : i32
    %54 = vector.broadcast %c8_i32_31 : i32 to vector<10x1xi32>
    %55 = arith.cmpi sle, %51, %54 : vector<10x1xi32>
    %56 = arith.andi %53, %55 : vector<10x1xi1>
    %57 = vector.broadcast %46 : i1 to vector<10x1xi1>
    %58 = arith.andi %57, %56 : vector<10x1xi1>
    %cst_32 = arith.constant 0.000000e+00 : f32
    %59 = vector.shape_cast %58 : vector<10x1xi1> to vector<10x1xi1>
    %60 = vector.broadcast %59 : vector<10x1xi1> to vector<10x32xi1>
    %61 = vector.broadcast %cst_32 : f32 to vector<10x32xf32>
    %62 = arith.select %60, %41, %61 : vector<10x32xi1>, vector<10x32xf32>
    %c0_33 = arith.constant 0 : index
    %c0_34 = arith.constant 0 : index
    %c0_35 = arith.constant 0 : index
    %c0_36 = arith.constant 0 : index
    %63 = vector.load %arg4[%c0_33, %c0_34, %c0_35, %c0_36] : memref<1x1x10x32xbf16, #tpu.memory_space<vmem>>, vector<1x1x10x32xbf16>
    %64 = vector.shape_cast %63 : vector<1x1x10x32xbf16> to vector<10x32xbf16>
    %cst_37 = arith.constant dense<0.000000e+00> : vector<10x32xf32>
    %65 = tpu.matmul %64, %0, %cst_37 {dimension_numbers = #tpu.dot_dimension_numbers<[1], [0], [0], [1], [0, 0, 1, 1], [], []>} : vector<10x32xbf16>, vector<32x32xbf16>, vector<10x32xf32> -> vector<10x32xf32>
    %66 = vector.broadcast %1 : vector<1x32xf32> to vector<10x32xf32>
    %67 = arith.addf %65, %66 : vector<10x32xf32>
    %cst_38 = arith.constant 0.000000e+00 : f32
    %cst_39 = arith.constant 6.000000e+00 : f32
    %68 = vector.broadcast %cst_38 : f32 to vector<10x32xf32>
    %69 = arith.maximumf %68, %67 : vector<10x32xf32>
    %70 = vector.broadcast %cst_39 : f32 to vector<10x32xf32>
    %71 = arith.minimumf %70, %69 : vector<10x32xf32>
    %c1_i32_40 = arith.constant 1 : i32
    %72 = arith.muli %arg1, %c1_i32_40 : i32
    %c2_i32 = arith.constant 2 : i32
    %73 = arith.addi %72, %c2_i32 : i32
    %c1_i32_41 = arith.constant 1 : i32
    %74 = arith.cmpi sge, %73, %c1_i32_41 : i32
    %c8_i32_42 = arith.constant 8 : i32
    %75 = arith.cmpi sle, %73, %c8_i32_42 : i32
    %76 = arith.andi %74, %75 : i1
    %77 = tpu.iota {dimensions = array<i32: 0>} : vector<10x1xi32>
    %c1_i32_43 = arith.constant 1 : i32
    %78 = vector.broadcast %c1_i32_43 : i32 to vector<10x1xi32>
    %79 = arith.muli %77, %78 : vector<10x1xi32>
    %c0_i32_44 = arith.constant 0 : i32
    %80 = vector.broadcast %c0_i32_44 : i32 to vector<10x1xi32>
    %81 = arith.addi %79, %80 : vector<10x1xi32>
    %c1_i32_45 = arith.constant 1 : i32
    %82 = vector.broadcast %c1_i32_45 : i32 to vector<10x1xi32>
    %83 = arith.cmpi sge, %81, %82 : vector<10x1xi32>
    %c8_i32_46 = arith.constant 8 : i32
    %84 = vector.broadcast %c8_i32_46 : i32 to vector<10x1xi32>
    %85 = arith.cmpi sle, %81, %84 : vector<10x1xi32>
    %86 = arith.andi %83, %85 : vector<10x1xi1>
    %87 = vector.broadcast %76 : i1 to vector<10x1xi1>
    %88 = arith.andi %87, %86 : vector<10x1xi1>
    %cst_47 = arith.constant 0.000000e+00 : f32
    %89 = vector.shape_cast %88 : vector<10x1xi1> to vector<10x1xi1>
    %90 = vector.broadcast %89 : vector<10x1xi1> to vector<10x32xi1>
    %91 = vector.broadcast %cst_47 : f32 to vector<10x32xf32>
    %92 = arith.select %90, %71, %91 : vector<10x32xi1>, vector<10x32xf32>
    %cst_48 = arith.constant 0.000000e+00 : f32
    %93 = vector.broadcast %cst_48 : f32 to vector<8x32xf32>
    %94 = vector.extract_strided_slice %32 {offsets = [0, 0], sizes = [8, 32], strides = [1, 1]} : vector<10x32xf32> to vector<8x32xf32>
    %95 = vector.extract_strided_slice %2 {offsets = [0, 0], sizes = [1, 32], strides = [1, 1]} : vector<9x32xf32> to vector<1x32xf32>
    %96 = vector.broadcast %95 : vector<1x32xf32> to vector<8x32xf32>
    %97 = arith.mulf %94, %96 : vector<8x32xf32>
    %98 = arith.addf %93, %97 : vector<8x32xf32>
    %99 = vector.extract_strided_slice %32 {offsets = [1, 0], sizes = [8, 32], strides = [1, 1]} : vector<10x32xf32> to vector<8x32xf32>
    %100 = vector.extract_strided_slice %2 {offsets = [1, 0], sizes = [1, 32], strides = [1, 1]} : vector<9x32xf32> to vector<1x32xf32>
    %101 = vector.broadcast %100 : vector<1x32xf32> to vector<8x32xf32>
    %102 = arith.mulf %99, %101 : vector<8x32xf32>
    %103 = arith.addf %98, %102 : vector<8x32xf32>
    %104 = vector.extract_strided_slice %32 {offsets = [2, 0], sizes = [8, 32], strides = [1, 1]} : vector<10x32xf32> to vector<8x32xf32>
    %105 = vector.extract_strided_slice %2 {offsets = [2, 0], sizes = [1, 32], strides = [1, 1]} : vector<9x32xf32> to vector<1x32xf32>
    %106 = vector.broadcast %105 : vector<1x32xf32> to vector<8x32xf32>
    %107 = arith.mulf %104, %106 : vector<8x32xf32>
    %108 = arith.addf %103, %107 : vector<8x32xf32>
    %109 = vector.extract_strided_slice %62 {offsets = [0, 0], sizes = [8, 32], strides = [1, 1]} : vector<10x32xf32> to vector<8x32xf32>
    %110 = vector.extract_strided_slice %2 {offsets = [3, 0], sizes = [1, 32], strides = [1, 1]} : vector<9x32xf32> to vector<1x32xf32>
    %111 = vector.broadcast %110 : vector<1x32xf32> to vector<8x32xf32>
    %112 = arith.mulf %109, %111 : vector<8x32xf32>
    %113 = arith.addf %108, %112 : vector<8x32xf32>
    %114 = vector.extract_strided_slice %62 {offsets = [1, 0], sizes = [8, 32], strides = [1, 1]} : vector<10x32xf32> to vector<8x32xf32>
    %115 = vector.extract_strided_slice %2 {offsets = [4, 0], sizes = [1, 32], strides = [1, 1]} : vector<9x32xf32> to vector<1x32xf32>
    %116 = vector.broadcast %115 : vector<1x32xf32> to vector<8x32xf32>
    %117 = arith.mulf %114, %116 : vector<8x32xf32>
    %118 = arith.addf %113, %117 : vector<8x32xf32>
    %119 = vector.extract_strided_slice %62 {offsets = [2, 0], sizes = [8, 32], strides = [1, 1]} : vector<10x32xf32> to vector<8x32xf32>
    %120 = vector.extract_strided_slice %2 {offsets = [5, 0], sizes = [1, 32], strides = [1, 1]} : vector<9x32xf32> to vector<1x32xf32>
    %121 = vector.broadcast %120 : vector<1x32xf32> to vector<8x32xf32>
    %122 = arith.mulf %119, %121 : vector<8x32xf32>
    %123 = arith.addf %118, %122 : vector<8x32xf32>
    %124 = vector.extract_strided_slice %92 {offsets = [0, 0], sizes = [8, 32], strides = [1, 1]} : vector<10x32xf32> to vector<8x32xf32>
    %125 = vector.extract_strided_slice %2 {offsets = [6, 0], sizes = [1, 32], strides = [1, 1]} : vector<9x32xf32> to vector<1x32xf32>
    %126 = vector.broadcast %125 : vector<1x32xf32> to vector<8x32xf32>
    %127 = arith.mulf %124, %126 : vector<8x32xf32>
    %128 = arith.addf %123, %127 : vector<8x32xf32>
    %129 = vector.extract_strided_slice %92 {offsets = [1, 0], sizes = [8, 32], strides = [1, 1]} : vector<10x32xf32> to vector<8x32xf32>
    %130 = vector.extract_strided_slice %2 {offsets = [7, 0], sizes = [1, 32], strides = [1, 1]} : vector<9x32xf32> to vector<1x32xf32>
    %131 = vector.broadcast %130 : vector<1x32xf32> to vector<8x32xf32>
    %132 = arith.mulf %129, %131 : vector<8x32xf32>
    %133 = arith.addf %128, %132 : vector<8x32xf32>
    %134 = vector.extract_strided_slice %92 {offsets = [2, 0], sizes = [8, 32], strides = [1, 1]} : vector<10x32xf32> to vector<8x32xf32>
    %135 = vector.extract_strided_slice %2 {offsets = [8, 0], sizes = [1, 32], strides = [1, 1]} : vector<9x32xf32> to vector<1x32xf32>
    %136 = vector.broadcast %135 : vector<1x32xf32> to vector<8x32xf32>
    %137 = arith.mulf %134, %136 : vector<8x32xf32>
    %138 = arith.addf %133, %137 : vector<8x32xf32>
    %c0_49 = arith.constant 0 : index
    %c0_50 = arith.constant 0 : index
    %139 = vector.load %arg8[%c0_49, %c0_50] : memref<1x32xf32, #tpu.memory_space<vmem>>, vector<1x32xf32>
    %140 = vector.broadcast %139 : vector<1x32xf32> to vector<8x32xf32>
    %141 = arith.addf %138, %140 : vector<8x32xf32>
    %cst_51 = arith.constant 0.000000e+00 : f32
    %cst_52 = arith.constant 6.000000e+00 : f32
    %142 = vector.broadcast %cst_51 : f32 to vector<8x32xf32>
    %143 = arith.maximumf %142, %141 : vector<8x32xf32>
    %144 = vector.broadcast %cst_52 : f32 to vector<8x32xf32>
    %145 = arith.minimumf %144, %143 : vector<8x32xf32>
    %146 = arith.truncf %145 : vector<8x32xf32> to vector<8x32xbf16>
    %c0_53 = arith.constant 0 : index
    %c0_54 = arith.constant 0 : index
    %147 = vector.load %arg9[%c0_53, %c0_54] : memref<32x16xbf16, #tpu.memory_space<vmem>>, vector<32x16xbf16>
    %cst_55 = arith.constant dense<0.000000e+00> : vector<8x16xf32>
    %148 = tpu.matmul %146, %147, %cst_55 {dimension_numbers = #tpu.dot_dimension_numbers<[1], [0], [0], [1], [0, 0, 1, 1], [], []>} : vector<8x32xbf16>, vector<32x16xbf16>, vector<8x16xf32> -> vector<8x16xf32>
    %c0_56 = arith.constant 0 : index
    %c0_57 = arith.constant 0 : index
    %149 = vector.load %arg10[%c0_56, %c0_57] : memref<1x16xf32, #tpu.memory_space<vmem>>, vector<1x16xf32>
    %150 = vector.broadcast %149 : vector<1x16xf32> to vector<8x16xf32>
    %151 = arith.addf %148, %150 : vector<8x16xf32>
    %152 = arith.truncf %151 : vector<8x16xf32> to vector<8x16xbf16>
    %c0_58 = arith.constant 0 : index
    %c0_59 = arith.constant 0 : index
    %c0_60 = arith.constant 0 : index
    %c0_61 = arith.constant 0 : index
    %153 = vector.load %arg11[%c0_58, %c0_59, %c0_60, %c0_61] : memref<1x1x8x16xbf16, #tpu.memory_space<vmem>>, vector<1x1x8x16xbf16>
    %154 = vector.shape_cast %153 : vector<1x1x8x16xbf16> to vector<8x16xbf16>
    %155 = vector.shape_cast %152 : vector<8x16xbf16> to vector<1x1x8x16xbf16>
    tpu.vector_store %arg11[%c0_58, %c0_59, %c0_60, %c0_61], %155 {strides = array<i32>} : memref<1x1x8x16xbf16, #tpu.memory_space<vmem>>, vector<1x1x8x16xbf16>,
    return
  }
  func.func @transform_0(%arg0: i32, %arg1: i32) -> (i32, i32, i32, i32) {
    %c1_i32 = arith.constant 1 : i32
    %0 = arith.muli %arg1, %c1_i32 : i32
    %c0_i32 = arith.constant 0 : i32
    %1 = arith.addi %0, %c0_i32 : i32
    %c0_i32_0 = arith.constant 0 : i32
    %c0_i32_1 = arith.constant 0 : i32
    %c0_i32_2 = arith.constant 0 : i32
    return %arg0, %1, %c0_i32_0, %c0_i32_1 : i32, i32, i32, i32
  }
  func.func @transform_1(%arg0: i32, %arg1: i32) -> (i32, i32, i32, i32) {
    %c1_i32 = arith.constant 1 : i32
    %0 = arith.muli %arg1, %c1_i32 : i32
    %c1_i32_0 = arith.constant 1 : i32
    %1 = arith.addi %0, %c1_i32_0 : i32
    %c0_i32 = arith.constant 0 : i32
    %c0_i32_1 = arith.constant 0 : i32
    %c0_i32_2 = arith.constant 0 : i32
    return %arg0, %1, %c0_i32, %c0_i32_1 : i32, i32, i32, i32
  }
  func.func @transform_2(%arg0: i32, %arg1: i32) -> (i32, i32, i32, i32) {
    %c1_i32 = arith.constant 1 : i32
    %0 = arith.muli %arg1, %c1_i32 : i32
    %c2_i32 = arith.constant 2 : i32
    %1 = arith.addi %0, %c2_i32 : i32
    %c0_i32 = arith.constant 0 : i32
    %c0_i32_0 = arith.constant 0 : i32
    %c0_i32_1 = arith.constant 0 : i32
    return %arg0, %1, %c0_i32, %c0_i32_0 : i32, i32, i32, i32
  }
  func.func @transform_3(%arg0: i32, %arg1: i32) -> (i32, i32) {
    %c0_i32 = arith.constant 0 : i32
    %c0_i32_0 = arith.constant 0 : i32
    %c0_i32_1 = arith.constant 0 : i32
    return %c0_i32, %c0_i32_0 : i32, i32
  }
  func.func @transform_4(%arg0: i32, %arg1: i32) -> (i32, i32) {
    %c0_i32 = arith.constant 0 : i32
    %c0_i32_0 = arith.constant 0 : i32
    %c0_i32_1 = arith.constant 0 : i32
    return %c0_i32, %c0_i32_0 : i32, i32
  }
  func.func @transform_5(%arg0: i32, %arg1: i32) -> (i32, i32) {
    %c0_i32 = arith.constant 0 : i32
    %c0_i32_0 = arith.constant 0 : i32
    %c0_i32_1 = arith.constant 0 : i32
    return %c0_i32, %c0_i32_0 : i32, i32
  }
  func.func @transform_6(%arg0: i32, %arg1: i32) -> (i32, i32) {
    %c0_i32 = arith.constant 0 : i32
    %c0_i32_0 = arith.constant 0 : i32
    %c0_i32_1 = arith.constant 0 : i32
    return %c0_i32, %c0_i32_0 : i32, i32
  }
  func.func @transform_7(%arg0: i32, %arg1: i32) -> (i32, i32) {
    %c0_i32 = arith.constant 0 : i32
    %c0_i32_0 = arith.constant 0 : i32
    %c0_i32_1 = arith.constant 0 : i32
    return %c0_i32, %c0_i32_0 : i32, i32
  }
  func.func @transform_8(%arg0: i32, %arg1: i32) -> (i32, i32) {
    %c0_i32 = arith.constant 0 : i32
    %c0_i32_0 = arith.constant 0 : i32
    %c0_i32_1 = arith.constant 0 : i32
    return %c0_i32, %c0_i32_0 : i32, i32
  }
  func.func @transform_9(%arg0: i32, %arg1: i32) -> (i32, i32, i32, i32) {
    %c0_i32 = arith.constant 0 : i32
    %c0_i32_0 = arith.constant 0 : i32
    %c0_i32_1 = arith.constant 0 : i32
    return %arg0, %arg1, %c0_i32, %c0_i32_0 : i32, i32, i32, i32
  }
}

module attributes {stable_mosaic.version = 11 : i64} {
  func.func @_fused_ir_kernel(%arg0: i32, %arg1: i32, %arg2: memref<1x1x6x24xbf16, #tpu.memory_space<vmem>>, %arg3: memref<1x1x6x24xbf16, #tpu.memory_space<vmem>>, %arg4: memref<1x1x6x24xbf16, #tpu.memory_space<vmem>>, %arg5: memref<24x144xbf16, #tpu.memory_space<vmem>>, %arg6: memref<1x144xf32, #tpu.memory_space<vmem>>, %arg7: memref<9x144xf32, #tpu.memory_space<vmem>>, %arg8: memref<1x144xf32, #tpu.memory_space<vmem>>, %arg9: memref<144x24xbf16, #tpu.memory_space<vmem>>, %arg10: memref<1x24xf32, #tpu.memory_space<vmem>>, %arg11: memref<1x1x4x24xbf16, #tpu.memory_space<vmem>>, %arg12: memref<1x1x4x24xbf16, #tpu.memory_space<vmem>>) attributes {dimension_semantics = [#tpu.dimension_semantics<parallel>, #tpu.dimension_semantics<parallel>], iteration_bounds = array<i64: 2, 4>, scalar_prefetch = 0 : i64, scratch_operands = 0 : i64, tpu.core_type = #tpu.core_type<tc>, window_params = [{transform_indices = @transform_0, window_bounds = array<i64: 1, 1, 6, 24>}, {transform_indices = @transform_1, window_bounds = array<i64: 1, 1, 6, 24>}, {transform_indices = @transform_2, window_bounds = array<i64: 1, 1, 6, 24>}, {pipeline_mode = #tpu.pipeline_mode<synchronous>, transform_indices = @transform_3, window_bounds = array<i64: 24, 144>}, {pipeline_mode = #tpu.pipeline_mode<synchronous>, transform_indices = @transform_4, window_bounds = array<i64: 1, 144>}, {pipeline_mode = #tpu.pipeline_mode<synchronous>, transform_indices = @transform_5, window_bounds = array<i64: 9, 144>}, {pipeline_mode = #tpu.pipeline_mode<synchronous>, transform_indices = @transform_6, window_bounds = array<i64: 1, 144>}, {pipeline_mode = #tpu.pipeline_mode<synchronous>, transform_indices = @transform_7, window_bounds = array<i64: 144, 24>}, {pipeline_mode = #tpu.pipeline_mode<synchronous>, transform_indices = @transform_8, window_bounds = array<i64: 1, 24>}, {transform_indices = @transform_9, window_bounds = array<i64: 1, 1, 4, 24>}, {transform_indices = @transform_10, window_bounds = array<i64: 1, 1, 4, 24>}]} {
    %c0 = arith.constant 0 : index
    %c0_0 = arith.constant 0 : index
    %0 = vector.load %arg5[%c0, %c0_0] : memref<24x144xbf16, #tpu.memory_space<vmem>>, vector<24x144xbf16>
    %c0_1 = arith.constant 0 : index
    %c0_2 = arith.constant 0 : index
    %1 = vector.load %arg6[%c0_1, %c0_2] : memref<1x144xf32, #tpu.memory_space<vmem>>, vector<1x144xf32>
    %c0_3 = arith.constant 0 : index
    %c0_4 = arith.constant 0 : index
    %2 = vector.load %arg7[%c0_3, %c0_4] : memref<9x144xf32, #tpu.memory_space<vmem>>, vector<9x144xf32>
    %c0_5 = arith.constant 0 : index
    %c0_6 = arith.constant 0 : index
    %c0_7 = arith.constant 0 : index
    %c0_8 = arith.constant 0 : index
    %3 = vector.load %arg2[%c0_5, %c0_6, %c0_7, %c0_8] : memref<1x1x6x24xbf16, #tpu.memory_space<vmem>>, vector<1x1x6x24xbf16>
    %4 = vector.shape_cast %3 : vector<1x1x6x24xbf16> to vector<6x24xbf16>
    %cst = arith.constant dense<0.000000e+00> : vector<6x144xf32>
    %5 = tpu.matmul %4, %0, %cst {dimension_numbers = #tpu.dot_dimension_numbers<[1], [0], [0], [1], [0, 0, 1, 1], [], []>} : vector<6x24xbf16>, vector<24x144xbf16>, vector<6x144xf32> -> vector<6x144xf32>
    %6 = vector.broadcast %1 : vector<1x144xf32> to vector<6x144xf32>
    %7 = arith.addf %5, %6 : vector<6x144xf32>
    %cst_9 = arith.constant 0.000000e+00 : f32
    %cst_10 = arith.constant 6.000000e+00 : f32
    %8 = vector.broadcast %cst_9 : f32 to vector<6x144xf32>
    %9 = arith.maximumf %8, %7 : vector<6x144xf32>
    %10 = vector.broadcast %cst_10 : f32 to vector<6x144xf32>
    %11 = arith.minimumf %10, %9 : vector<6x144xf32>
    %c1_i32 = arith.constant 1 : i32
    %12 = arith.muli %arg1, %c1_i32 : i32
    %c0_i32 = arith.constant 0 : i32
    %13 = arith.addi %12, %c0_i32 : i32
    %c1_i32_11 = arith.constant 1 : i32
    %14 = arith.cmpi sge, %13, %c1_i32_11 : i32
    %c4_i32 = arith.constant 4 : i32
    %15 = arith.cmpi sle, %13, %c4_i32 : i32
    %16 = arith.andi %14, %15 : i1
    %17 = tpu.iota {dimensions = array<i32: 0>} : vector<6x1xi32>
    %c1_i32_12 = arith.constant 1 : i32
    %18 = vector.broadcast %c1_i32_12 : i32 to vector<6x1xi32>
    %19 = arith.muli %17, %18 : vector<6x1xi32>
    %c0_i32_13 = arith.constant 0 : i32
    %20 = vector.broadcast %c0_i32_13 : i32 to vector<6x1xi32>
    %21 = arith.addi %19, %20 : vector<6x1xi32>
    %c1_i32_14 = arith.constant 1 : i32
    %22 = vector.broadcast %c1_i32_14 : i32 to vector<6x1xi32>
    %23 = arith.cmpi sge, %21, %22 : vector<6x1xi32>
    %c4_i32_15 = arith.constant 4 : i32
    %24 = vector.broadcast %c4_i32_15 : i32 to vector<6x1xi32>
    %25 = arith.cmpi sle, %21, %24 : vector<6x1xi32>
    %26 = arith.andi %23, %25 : vector<6x1xi1>
    %27 = vector.broadcast %16 : i1 to vector<6x1xi1>
    %28 = arith.andi %27, %26 : vector<6x1xi1>
    %cst_16 = arith.constant 0.000000e+00 : f32
    %29 = vector.shape_cast %28 : vector<6x1xi1> to vector<6x1xi1>
    %30 = vector.broadcast %29 : vector<6x1xi1> to vector<6x144xi1>
    %31 = vector.broadcast %cst_16 : f32 to vector<6x144xf32>
    %32 = arith.select %30, %11, %31 : vector<6x144xi1>, vector<6x144xf32>
    %c0_17 = arith.constant 0 : index
    %c0_18 = arith.constant 0 : index
    %c0_19 = arith.constant 0 : index
    %c0_20 = arith.constant 0 : index
    %33 = vector.load %arg3[%c0_17, %c0_18, %c0_19, %c0_20] : memref<1x1x6x24xbf16, #tpu.memory_space<vmem>>, vector<1x1x6x24xbf16>
    %34 = vector.shape_cast %33 : vector<1x1x6x24xbf16> to vector<6x24xbf16>
    %cst_21 = arith.constant dense<0.000000e+00> : vector<6x144xf32>
    %35 = tpu.matmul %34, %0, %cst_21 {dimension_numbers = #tpu.dot_dimension_numbers<[1], [0], [0], [1], [0, 0, 1, 1], [], []>} : vector<6x24xbf16>, vector<24x144xbf16>, vector<6x144xf32> -> vector<6x144xf32>
    %36 = vector.broadcast %1 : vector<1x144xf32> to vector<6x144xf32>
    %37 = arith.addf %35, %36 : vector<6x144xf32>
    %cst_22 = arith.constant 0.000000e+00 : f32
    %cst_23 = arith.constant 6.000000e+00 : f32
    %38 = vector.broadcast %cst_22 : f32 to vector<6x144xf32>
    %39 = arith.maximumf %38, %37 : vector<6x144xf32>
    %40 = vector.broadcast %cst_23 : f32 to vector<6x144xf32>
    %41 = arith.minimumf %40, %39 : vector<6x144xf32>
    %c1_i32_24 = arith.constant 1 : i32
    %42 = arith.muli %arg1, %c1_i32_24 : i32
    %c1_i32_25 = arith.constant 1 : i32
    %43 = arith.addi %42, %c1_i32_25 : i32
    %c1_i32_26 = arith.constant 1 : i32
    %44 = arith.cmpi sge, %43, %c1_i32_26 : i32
    %c4_i32_27 = arith.constant 4 : i32
    %45 = arith.cmpi sle, %43, %c4_i32_27 : i32
    %46 = arith.andi %44, %45 : i1
    %47 = tpu.iota {dimensions = array<i32: 0>} : vector<6x1xi32>
    %c1_i32_28 = arith.constant 1 : i32
    %48 = vector.broadcast %c1_i32_28 : i32 to vector<6x1xi32>
    %49 = arith.muli %47, %48 : vector<6x1xi32>
    %c0_i32_29 = arith.constant 0 : i32
    %50 = vector.broadcast %c0_i32_29 : i32 to vector<6x1xi32>
    %51 = arith.addi %49, %50 : vector<6x1xi32>
    %c1_i32_30 = arith.constant 1 : i32
    %52 = vector.broadcast %c1_i32_30 : i32 to vector<6x1xi32>
    %53 = arith.cmpi sge, %51, %52 : vector<6x1xi32>
    %c4_i32_31 = arith.constant 4 : i32
    %54 = vector.broadcast %c4_i32_31 : i32 to vector<6x1xi32>
    %55 = arith.cmpi sle, %51, %54 : vector<6x1xi32>
    %56 = arith.andi %53, %55 : vector<6x1xi1>
    %57 = vector.broadcast %46 : i1 to vector<6x1xi1>
    %58 = arith.andi %57, %56 : vector<6x1xi1>
    %cst_32 = arith.constant 0.000000e+00 : f32
    %59 = vector.shape_cast %58 : vector<6x1xi1> to vector<6x1xi1>
    %60 = vector.broadcast %59 : vector<6x1xi1> to vector<6x144xi1>
    %61 = vector.broadcast %cst_32 : f32 to vector<6x144xf32>
    %62 = arith.select %60, %41, %61 : vector<6x144xi1>, vector<6x144xf32>
    %c0_33 = arith.constant 0 : index
    %c0_34 = arith.constant 0 : index
    %c0_35 = arith.constant 0 : index
    %c0_36 = arith.constant 0 : index
    %63 = vector.load %arg4[%c0_33, %c0_34, %c0_35, %c0_36] : memref<1x1x6x24xbf16, #tpu.memory_space<vmem>>, vector<1x1x6x24xbf16>
    %64 = vector.shape_cast %63 : vector<1x1x6x24xbf16> to vector<6x24xbf16>
    %cst_37 = arith.constant dense<0.000000e+00> : vector<6x144xf32>
    %65 = tpu.matmul %64, %0, %cst_37 {dimension_numbers = #tpu.dot_dimension_numbers<[1], [0], [0], [1], [0, 0, 1, 1], [], []>} : vector<6x24xbf16>, vector<24x144xbf16>, vector<6x144xf32> -> vector<6x144xf32>
    %66 = vector.broadcast %1 : vector<1x144xf32> to vector<6x144xf32>
    %67 = arith.addf %65, %66 : vector<6x144xf32>
    %cst_38 = arith.constant 0.000000e+00 : f32
    %cst_39 = arith.constant 6.000000e+00 : f32
    %68 = vector.broadcast %cst_38 : f32 to vector<6x144xf32>
    %69 = arith.maximumf %68, %67 : vector<6x144xf32>
    %70 = vector.broadcast %cst_39 : f32 to vector<6x144xf32>
    %71 = arith.minimumf %70, %69 : vector<6x144xf32>
    %c1_i32_40 = arith.constant 1 : i32
    %72 = arith.muli %arg1, %c1_i32_40 : i32
    %c2_i32 = arith.constant 2 : i32
    %73 = arith.addi %72, %c2_i32 : i32
    %c1_i32_41 = arith.constant 1 : i32
    %74 = arith.cmpi sge, %73, %c1_i32_41 : i32
    %c4_i32_42 = arith.constant 4 : i32
    %75 = arith.cmpi sle, %73, %c4_i32_42 : i32
    %76 = arith.andi %74, %75 : i1
    %77 = tpu.iota {dimensions = array<i32: 0>} : vector<6x1xi32>
    %c1_i32_43 = arith.constant 1 : i32
    %78 = vector.broadcast %c1_i32_43 : i32 to vector<6x1xi32>
    %79 = arith.muli %77, %78 : vector<6x1xi32>
    %c0_i32_44 = arith.constant 0 : i32
    %80 = vector.broadcast %c0_i32_44 : i32 to vector<6x1xi32>
    %81 = arith.addi %79, %80 : vector<6x1xi32>
    %c1_i32_45 = arith.constant 1 : i32
    %82 = vector.broadcast %c1_i32_45 : i32 to vector<6x1xi32>
    %83 = arith.cmpi sge, %81, %82 : vector<6x1xi32>
    %c4_i32_46 = arith.constant 4 : i32
    %84 = vector.broadcast %c4_i32_46 : i32 to vector<6x1xi32>
    %85 = arith.cmpi sle, %81, %84 : vector<6x1xi32>
    %86 = arith.andi %83, %85 : vector<6x1xi1>
    %87 = vector.broadcast %76 : i1 to vector<6x1xi1>
    %88 = arith.andi %87, %86 : vector<6x1xi1>
    %cst_47 = arith.constant 0.000000e+00 : f32
    %89 = vector.shape_cast %88 : vector<6x1xi1> to vector<6x1xi1>
    %90 = vector.broadcast %89 : vector<6x1xi1> to vector<6x144xi1>
    %91 = vector.broadcast %cst_47 : f32 to vector<6x144xf32>
    %92 = arith.select %90, %71, %91 : vector<6x144xi1>, vector<6x144xf32>
    %cst_48 = arith.constant 0.000000e+00 : f32
    %93 = vector.broadcast %cst_48 : f32 to vector<4x144xf32>
    %94 = vector.extract_strided_slice %32 {offsets = [0, 0], sizes = [4, 144], strides = [1, 1]} : vector<6x144xf32> to vector<4x144xf32>
    %95 = vector.extract_strided_slice %2 {offsets = [0, 0], sizes = [1, 144], strides = [1, 1]} : vector<9x144xf32> to vector<1x144xf32>
    %96 = vector.broadcast %95 : vector<1x144xf32> to vector<4x144xf32>
    %97 = arith.mulf %94, %96 : vector<4x144xf32>
    %98 = arith.addf %93, %97 : vector<4x144xf32>
    %99 = vector.extract_strided_slice %32 {offsets = [1, 0], sizes = [4, 144], strides = [1, 1]} : vector<6x144xf32> to vector<4x144xf32>
    %100 = vector.extract_strided_slice %2 {offsets = [1, 0], sizes = [1, 144], strides = [1, 1]} : vector<9x144xf32> to vector<1x144xf32>
    %101 = vector.broadcast %100 : vector<1x144xf32> to vector<4x144xf32>
    %102 = arith.mulf %99, %101 : vector<4x144xf32>
    %103 = arith.addf %98, %102 : vector<4x144xf32>
    %104 = vector.extract_strided_slice %32 {offsets = [2, 0], sizes = [4, 144], strides = [1, 1]} : vector<6x144xf32> to vector<4x144xf32>
    %105 = vector.extract_strided_slice %2 {offsets = [2, 0], sizes = [1, 144], strides = [1, 1]} : vector<9x144xf32> to vector<1x144xf32>
    %106 = vector.broadcast %105 : vector<1x144xf32> to vector<4x144xf32>
    %107 = arith.mulf %104, %106 : vector<4x144xf32>
    %108 = arith.addf %103, %107 : vector<4x144xf32>
    %109 = vector.extract_strided_slice %62 {offsets = [0, 0], sizes = [4, 144], strides = [1, 1]} : vector<6x144xf32> to vector<4x144xf32>
    %110 = vector.extract_strided_slice %2 {offsets = [3, 0], sizes = [1, 144], strides = [1, 1]} : vector<9x144xf32> to vector<1x144xf32>
    %111 = vector.broadcast %110 : vector<1x144xf32> to vector<4x144xf32>
    %112 = arith.mulf %109, %111 : vector<4x144xf32>
    %113 = arith.addf %108, %112 : vector<4x144xf32>
    %114 = vector.extract_strided_slice %62 {offsets = [1, 0], sizes = [4, 144], strides = [1, 1]} : vector<6x144xf32> to vector<4x144xf32>
    %115 = vector.extract_strided_slice %2 {offsets = [4, 0], sizes = [1, 144], strides = [1, 1]} : vector<9x144xf32> to vector<1x144xf32>
    %116 = vector.broadcast %115 : vector<1x144xf32> to vector<4x144xf32>
    %117 = arith.mulf %114, %116 : vector<4x144xf32>
    %118 = arith.addf %113, %117 : vector<4x144xf32>
    %119 = vector.extract_strided_slice %62 {offsets = [2, 0], sizes = [4, 144], strides = [1, 1]} : vector<6x144xf32> to vector<4x144xf32>
    %120 = vector.extract_strided_slice %2 {offsets = [5, 0], sizes = [1, 144], strides = [1, 1]} : vector<9x144xf32> to vector<1x144xf32>
    %121 = vector.broadcast %120 : vector<1x144xf32> to vector<4x144xf32>
    %122 = arith.mulf %119, %121 : vector<4x144xf32>
    %123 = arith.addf %118, %122 : vector<4x144xf32>
    %124 = vector.extract_strided_slice %92 {offsets = [0, 0], sizes = [4, 144], strides = [1, 1]} : vector<6x144xf32> to vector<4x144xf32>
    %125 = vector.extract_strided_slice %2 {offsets = [6, 0], sizes = [1, 144], strides = [1, 1]} : vector<9x144xf32> to vector<1x144xf32>
    %126 = vector.broadcast %125 : vector<1x144xf32> to vector<4x144xf32>
    %127 = arith.mulf %124, %126 : vector<4x144xf32>
    %128 = arith.addf %123, %127 : vector<4x144xf32>
    %129 = vector.extract_strided_slice %92 {offsets = [1, 0], sizes = [4, 144], strides = [1, 1]} : vector<6x144xf32> to vector<4x144xf32>
    %130 = vector.extract_strided_slice %2 {offsets = [7, 0], sizes = [1, 144], strides = [1, 1]} : vector<9x144xf32> to vector<1x144xf32>
    %131 = vector.broadcast %130 : vector<1x144xf32> to vector<4x144xf32>
    %132 = arith.mulf %129, %131 : vector<4x144xf32>
    %133 = arith.addf %128, %132 : vector<4x144xf32>
    %134 = vector.extract_strided_slice %92 {offsets = [2, 0], sizes = [4, 144], strides = [1, 1]} : vector<6x144xf32> to vector<4x144xf32>
    %135 = vector.extract_strided_slice %2 {offsets = [8, 0], sizes = [1, 144], strides = [1, 1]} : vector<9x144xf32> to vector<1x144xf32>
    %136 = vector.broadcast %135 : vector<1x144xf32> to vector<4x144xf32>
    %137 = arith.mulf %134, %136 : vector<4x144xf32>
    %138 = arith.addf %133, %137 : vector<4x144xf32>
    %c0_49 = arith.constant 0 : index
    %c0_50 = arith.constant 0 : index
    %139 = vector.load %arg8[%c0_49, %c0_50] : memref<1x144xf32, #tpu.memory_space<vmem>>, vector<1x144xf32>
    %140 = vector.broadcast %139 : vector<1x144xf32> to vector<4x144xf32>
    %141 = arith.addf %138, %140 : vector<4x144xf32>
    %cst_51 = arith.constant 0.000000e+00 : f32
    %cst_52 = arith.constant 6.000000e+00 : f32
    %142 = vector.broadcast %cst_51 : f32 to vector<4x144xf32>
    %143 = arith.maximumf %142, %141 : vector<4x144xf32>
    %144 = vector.broadcast %cst_52 : f32 to vector<4x144xf32>
    %145 = arith.minimumf %144, %143 : vector<4x144xf32>
    %146 = arith.truncf %145 : vector<4x144xf32> to vector<4x144xbf16>
    %c0_53 = arith.constant 0 : index
    %c0_54 = arith.constant 0 : index
    %147 = vector.load %arg9[%c0_53, %c0_54] : memref<144x24xbf16, #tpu.memory_space<vmem>>, vector<144x24xbf16>
    %cst_55 = arith.constant dense<0.000000e+00> : vector<4x24xf32>
    %148 = tpu.matmul %146, %147, %cst_55 {dimension_numbers = #tpu.dot_dimension_numbers<[1], [0], [0], [1], [0, 0, 1, 1], [], []>} : vector<4x144xbf16>, vector<144x24xbf16>, vector<4x24xf32> -> vector<4x24xf32>
    %c0_56 = arith.constant 0 : index
    %c0_57 = arith.constant 0 : index
    %149 = vector.load %arg10[%c0_56, %c0_57] : memref<1x24xf32, #tpu.memory_space<vmem>>, vector<1x24xf32>
    %150 = vector.broadcast %149 : vector<1x24xf32> to vector<4x24xf32>
    %151 = arith.addf %148, %150 : vector<4x24xf32>
    %c0_58 = arith.constant 0 : index
    %c0_59 = arith.constant 0 : index
    %c0_60 = arith.constant 0 : index
    %c0_61 = arith.constant 0 : index
    %152 = vector.load %arg11[%c0_58, %c0_59, %c0_60, %c0_61] : memref<1x1x4x24xbf16, #tpu.memory_space<vmem>>, vector<1x1x4x24xbf16>
    %153 = vector.shape_cast %152 : vector<1x1x4x24xbf16> to vector<4x24xbf16>
    %154 = arith.extf %153 : vector<4x24xbf16> to vector<4x24xf32>
    %155 = arith.addf %151, %154 : vector<4x24xf32>
    %156 = arith.truncf %155 : vector<4x24xf32> to vector<4x24xbf16>
    %c0_62 = arith.constant 0 : index
    %c0_63 = arith.constant 0 : index
    %c0_64 = arith.constant 0 : index
    %c0_65 = arith.constant 0 : index
    %157 = vector.load %arg12[%c0_62, %c0_63, %c0_64, %c0_65] : memref<1x1x4x24xbf16, #tpu.memory_space<vmem>>, vector<1x1x4x24xbf16>
    %158 = vector.shape_cast %157 : vector<1x1x4x24xbf16> to vector<4x24xbf16>
    %159 = vector.shape_cast %156 : vector<4x24xbf16> to vector<1x1x4x24xbf16>
    tpu.vector_store %arg12[%c0_62, %c0_63, %c0_64, %c0_65], %159 {strides = array<i32>} : memref<1x1x4x24xbf16, #tpu.memory_space<vmem>>, vector<1x1x4x24xbf16>,
    return
  }
  func.func @transform_0(%arg0: i32, %arg1: i32) -> (i32, i32, i32, i32) {
    %c1_i32 = arith.constant 1 : i32
    %0 = arith.muli %arg1, %c1_i32 : i32
    %c0_i32 = arith.constant 0 : i32
    %1 = arith.addi %0, %c0_i32 : i32
    %c0_i32_0 = arith.constant 0 : i32
    %c0_i32_1 = arith.constant 0 : i32
    %c0_i32_2 = arith.constant 0 : i32
    return %arg0, %1, %c0_i32_0, %c0_i32_1 : i32, i32, i32, i32
  }
  func.func @transform_1(%arg0: i32, %arg1: i32) -> (i32, i32, i32, i32) {
    %c1_i32 = arith.constant 1 : i32
    %0 = arith.muli %arg1, %c1_i32 : i32
    %c1_i32_0 = arith.constant 1 : i32
    %1 = arith.addi %0, %c1_i32_0 : i32
    %c0_i32 = arith.constant 0 : i32
    %c0_i32_1 = arith.constant 0 : i32
    %c0_i32_2 = arith.constant 0 : i32
    return %arg0, %1, %c0_i32, %c0_i32_1 : i32, i32, i32, i32
  }
  func.func @transform_2(%arg0: i32, %arg1: i32) -> (i32, i32, i32, i32) {
    %c1_i32 = arith.constant 1 : i32
    %0 = arith.muli %arg1, %c1_i32 : i32
    %c2_i32 = arith.constant 2 : i32
    %1 = arith.addi %0, %c2_i32 : i32
    %c0_i32 = arith.constant 0 : i32
    %c0_i32_0 = arith.constant 0 : i32
    %c0_i32_1 = arith.constant 0 : i32
    return %arg0, %1, %c0_i32, %c0_i32_0 : i32, i32, i32, i32
  }
  func.func @transform_3(%arg0: i32, %arg1: i32) -> (i32, i32) {
    %c0_i32 = arith.constant 0 : i32
    %c0_i32_0 = arith.constant 0 : i32
    %c0_i32_1 = arith.constant 0 : i32
    return %c0_i32, %c0_i32_0 : i32, i32
  }
  func.func @transform_4(%arg0: i32, %arg1: i32) -> (i32, i32) {
    %c0_i32 = arith.constant 0 : i32
    %c0_i32_0 = arith.constant 0 : i32
    %c0_i32_1 = arith.constant 0 : i32
    return %c0_i32, %c0_i32_0 : i32, i32
  }
  func.func @transform_5(%arg0: i32, %arg1: i32) -> (i32, i32) {
    %c0_i32 = arith.constant 0 : i32
    %c0_i32_0 = arith.constant 0 : i32
    %c0_i32_1 = arith.constant 0 : i32
    return %c0_i32, %c0_i32_0 : i32, i32
  }
  func.func @transform_6(%arg0: i32, %arg1: i32) -> (i32, i32) {
    %c0_i32 = arith.constant 0 : i32
    %c0_i32_0 = arith.constant 0 : i32
    %c0_i32_1 = arith.constant 0 : i32
    return %c0_i32, %c0_i32_0 : i32, i32
  }
  func.func @transform_7(%arg0: i32, %arg1: i32) -> (i32, i32) {
    %c0_i32 = arith.constant 0 : i32
    %c0_i32_0 = arith.constant 0 : i32
    %c0_i32_1 = arith.constant 0 : i32
    return %c0_i32, %c0_i32_0 : i32, i32
  }
  func.func @transform_8(%arg0: i32, %arg1: i32) -> (i32, i32) {
    %c0_i32 = arith.constant 0 : i32
    %c0_i32_0 = arith.constant 0 : i32
    %c0_i32_1 = arith.constant 0 : i32
    return %c0_i32, %c0_i32_0 : i32, i32
  }
  func.func @transform_9(%arg0: i32, %arg1: i32) -> (i32, i32, i32, i32) {
    %c0_i32 = arith.constant 0 : i32
    %c0_i32_0 = arith.constant 0 : i32
    %c0_i32_1 = arith.constant 0 : i32
    return %arg0, %arg1, %c0_i32, %c0_i32_0 : i32, i32, i32, i32
  }
  func.func @transform_10(%arg0: i32, %arg1: i32) -> (i32, i32, i32, i32) {
    %c0_i32 = arith.constant 0 : i32
    %c0_i32_0 = arith.constant 0 : i32
    %c0_i32_1 = arith.constant 0 : i32
    return %arg0, %arg1, %c0_i32, %c0_i32_0 : i32, i32, i32, i32
  }
}

module attributes {stable_mosaic.version = 11 : i64} {
  func.func @_fused_ir_kernel(%arg0: i32, %arg1: i32, %arg2: memref<1x1x5x16xbf16, #tpu.memory_space<vmem>>, %arg3: memref<1x1x5x16xbf16, #tpu.memory_space<vmem>>, %arg4: memref<1x1x5x16xbf16, #tpu.memory_space<vmem>>, %arg5: memref<1x1x5x16xbf16, #tpu.memory_space<vmem>>, %arg6: memref<1x1x5x16xbf16, #tpu.memory_space<vmem>>, %arg7: memref<1x1x5x16xbf16, #tpu.memory_space<vmem>>, %arg8: memref<16x96xbf16, #tpu.memory_space<vmem>>, %arg9: memref<1x96xf32, #tpu.memory_space<vmem>>, %arg10: memref<9x96xf32, #tpu.memory_space<vmem>>, %arg11: memref<1x96xf32, #tpu.memory_space<vmem>>, %arg12: memref<96x24xbf16, #tpu.memory_space<vmem>>, %arg13: memref<1x24xf32, #tpu.memory_space<vmem>>, %arg14: memref<1x1x4x24xbf16, #tpu.memory_space<vmem>>) attributes {dimension_semantics = [#tpu.dimension_semantics<parallel>, #tpu.dimension_semantics<parallel>], iteration_bounds = array<i64: 2, 4>, scalar_prefetch = 0 : i64, scratch_operands = 0 : i64, tpu.core_type = #tpu.core_type<tc>, window_params = [{transform_indices = @transform_0, window_bounds = array<i64: 1, 1, 5, 16>}, {transform_indices = @transform_1, window_bounds = array<i64: 1, 1, 5, 16>}, {transform_indices = @transform_2, window_bounds = array<i64: 1, 1, 5, 16>}, {transform_indices = @transform_3, window_bounds = array<i64: 1, 1, 5, 16>}, {transform_indices = @transform_4, window_bounds = array<i64: 1, 1, 5, 16>}, {transform_indices = @transform_5, window_bounds = array<i64: 1, 1, 5, 16>}, {pipeline_mode = #tpu.pipeline_mode<synchronous>, transform_indices = @transform_6, window_bounds = array<i64: 16, 96>}, {pipeline_mode = #tpu.pipeline_mode<synchronous>, transform_indices = @transform_7, window_bounds = array<i64: 1, 96>}, {pipeline_mode = #tpu.pipeline_mode<synchronous>, transform_indices = @transform_8, window_bounds = array<i64: 9, 96>}, {pipeline_mode = #tpu.pipeline_mode<synchronous>, transform_indices = @transform_9, window_bounds = array<i64: 1, 96>}, {pipeline_mode = #tpu.pipeline_mode<synchronous>, transform_indices = @transform_10, window_bounds = array<i64: 96, 24>}, {pipeline_mode = #tpu.pipeline_mode<synchronous>, transform_indices = @transform_11, window_bounds = array<i64: 1, 24>}, {transform_indices = @transform_12, window_bounds = array<i64: 1, 1, 4, 24>}]} {
    %c0 = arith.constant 0 : index
    %c0_0 = arith.constant 0 : index
    %0 = vector.load %arg8[%c0, %c0_0] : memref<16x96xbf16, #tpu.memory_space<vmem>>, vector<16x96xbf16>
    %c0_1 = arith.constant 0 : index
    %c0_2 = arith.constant 0 : index
    %1 = vector.load %arg9[%c0_1, %c0_2] : memref<1x96xf32, #tpu.memory_space<vmem>>, vector<1x96xf32>
    %c0_3 = arith.constant 0 : index
    %c0_4 = arith.constant 0 : index
    %2 = vector.load %arg10[%c0_3, %c0_4] : memref<9x96xf32, #tpu.memory_space<vmem>>, vector<9x96xf32>
    %c0_5 = arith.constant 0 : index
    %c0_6 = arith.constant 0 : index
    %c0_7 = arith.constant 0 : index
    %c0_8 = arith.constant 0 : index
    %3 = vector.load %arg2[%c0_5, %c0_6, %c0_7, %c0_8] : memref<1x1x5x16xbf16, #tpu.memory_space<vmem>>, vector<1x1x5x16xbf16>
    %4 = vector.shape_cast %3 : vector<1x1x5x16xbf16> to vector<5x16xbf16>
    %cst = arith.constant dense<0.000000e+00> : vector<5x96xf32>
    %5 = tpu.matmul %4, %0, %cst {dimension_numbers = #tpu.dot_dimension_numbers<[1], [0], [0], [1], [0, 0, 1, 1], [], []>} : vector<5x16xbf16>, vector<16x96xbf16>, vector<5x96xf32> -> vector<5x96xf32>
    %6 = vector.broadcast %1 : vector<1x96xf32> to vector<5x96xf32>
    %7 = arith.addf %5, %6 : vector<5x96xf32>
    %cst_9 = arith.constant 0.000000e+00 : f32
    %cst_10 = arith.constant 6.000000e+00 : f32
    %8 = vector.broadcast %cst_9 : f32 to vector<5x96xf32>
    %9 = arith.maximumf %8, %7 : vector<5x96xf32>
    %10 = vector.broadcast %cst_10 : f32 to vector<5x96xf32>
    %11 = arith.minimumf %10, %9 : vector<5x96xf32>
    %c2_i32 = arith.constant 2 : i32
    %12 = arith.muli %arg1, %c2_i32 : i32
    %c0_i32 = arith.constant 0 : i32
    %13 = arith.addi %12, %c0_i32 : i32
    %c1_i32 = arith.constant 1 : i32
    %14 = arith.cmpi sge, %13, %c1_i32 : i32
    %c8_i32 = arith.constant 8 : i32
    %15 = arith.cmpi sle, %13, %c8_i32 : i32
    %16 = arith.andi %14, %15 : i1
    %17 = tpu.iota {dimensions = array<i32: 0>} : vector<5x1xi32>
    %c2_i32_11 = arith.constant 2 : i32
    %18 = vector.broadcast %c2_i32_11 : i32 to vector<5x1xi32>
    %19 = arith.muli %17, %18 : vector<5x1xi32>
    %c0_i32_12 = arith.constant 0 : i32
    %20 = vector.broadcast %c0_i32_12 : i32 to vector<5x1xi32>
    %21 = arith.addi %19, %20 : vector<5x1xi32>
    %c1_i32_13 = arith.constant 1 : i32
    %22 = vector.broadcast %c1_i32_13 : i32 to vector<5x1xi32>
    %23 = arith.cmpi sge, %21, %22 : vector<5x1xi32>
    %c8_i32_14 = arith.constant 8 : i32
    %24 = vector.broadcast %c8_i32_14 : i32 to vector<5x1xi32>
    %25 = arith.cmpi sle, %21, %24 : vector<5x1xi32>
    %26 = arith.andi %23, %25 : vector<5x1xi1>
    %27 = vector.broadcast %16 : i1 to vector<5x1xi1>
    %28 = arith.andi %27, %26 : vector<5x1xi1>
    %cst_15 = arith.constant 0.000000e+00 : f32
    %29 = vector.shape_cast %28 : vector<5x1xi1> to vector<5x1xi1>
    %30 = vector.broadcast %29 : vector<5x1xi1> to vector<5x96xi1>
    %31 = vector.broadcast %cst_15 : f32 to vector<5x96xf32>
    %32 = arith.select %30, %11, %31 : vector<5x96xi1>, vector<5x96xf32>
    %c0_16 = arith.constant 0 : index
    %c0_17 = arith.constant 0 : index
    %c0_18 = arith.constant 0 : index
    %c0_19 = arith.constant 0 : index
    %33 = vector.load %arg3[%c0_16, %c0_17, %c0_18, %c0_19] : memref<1x1x5x16xbf16, #tpu.memory_space<vmem>>, vector<1x1x5x16xbf16>
    %34 = vector.shape_cast %33 : vector<1x1x5x16xbf16> to vector<5x16xbf16>
    %cst_20 = arith.constant dense<0.000000e+00> : vector<5x96xf32>
    %35 = tpu.matmul %34, %0, %cst_20 {dimension_numbers = #tpu.dot_dimension_numbers<[1], [0], [0], [1], [0, 0, 1, 1], [], []>} : vector<5x16xbf16>, vector<16x96xbf16>, vector<5x96xf32> -> vector<5x96xf32>
    %36 = vector.broadcast %1 : vector<1x96xf32> to vector<5x96xf32>
    %37 = arith.addf %35, %36 : vector<5x96xf32>
    %cst_21 = arith.constant 0.000000e+00 : f32
    %cst_22 = arith.constant 6.000000e+00 : f32
    %38 = vector.broadcast %cst_21 : f32 to vector<5x96xf32>
    %39 = arith.maximumf %38, %37 : vector<5x96xf32>
    %40 = vector.broadcast %cst_22 : f32 to vector<5x96xf32>
    %41 = arith.minimumf %40, %39 : vector<5x96xf32>
    %c2_i32_23 = arith.constant 2 : i32
    %42 = arith.muli %arg1, %c2_i32_23 : i32
    %c0_i32_24 = arith.constant 0 : i32
    %43 = arith.addi %42, %c0_i32_24 : i32
    %c1_i32_25 = arith.constant 1 : i32
    %44 = arith.cmpi sge, %43, %c1_i32_25 : i32
    %c8_i32_26 = arith.constant 8 : i32
    %45 = arith.cmpi sle, %43, %c8_i32_26 : i32
    %46 = arith.andi %44, %45 : i1
    %47 = tpu.iota {dimensions = array<i32: 0>} : vector<5x1xi32>
    %c2_i32_27 = arith.constant 2 : i32
    %48 = vector.broadcast %c2_i32_27 : i32 to vector<5x1xi32>
    %49 = arith.muli %47, %48 : vector<5x1xi32>
    %c1_i32_28 = arith.constant 1 : i32
    %50 = vector.broadcast %c1_i32_28 : i32 to vector<5x1xi32>
    %51 = arith.addi %49, %50 : vector<5x1xi32>
    %c1_i32_29 = arith.constant 1 : i32
    %52 = vector.broadcast %c1_i32_29 : i32 to vector<5x1xi32>
    %53 = arith.cmpi sge, %51, %52 : vector<5x1xi32>
    %c8_i32_30 = arith.constant 8 : i32
    %54 = vector.broadcast %c8_i32_30 : i32 to vector<5x1xi32>
    %55 = arith.cmpi sle, %51, %54 : vector<5x1xi32>
    %56 = arith.andi %53, %55 : vector<5x1xi1>
    %57 = vector.broadcast %46 : i1 to vector<5x1xi1>
    %58 = arith.andi %57, %56 : vector<5x1xi1>
    %cst_31 = arith.constant 0.000000e+00 : f32
    %59 = vector.shape_cast %58 : vector<5x1xi1> to vector<5x1xi1>
    %60 = vector.broadcast %59 : vector<5x1xi1> to vector<5x96xi1>
    %61 = vector.broadcast %cst_31 : f32 to vector<5x96xf32>
    %62 = arith.select %60, %41, %61 : vector<5x96xi1>, vector<5x96xf32>
    %c0_32 = arith.constant 0 : index
    %c0_33 = arith.constant 0 : index
    %c0_34 = arith.constant 0 : index
    %c0_35 = arith.constant 0 : index
    %63 = vector.load %arg4[%c0_32, %c0_33, %c0_34, %c0_35] : memref<1x1x5x16xbf16, #tpu.memory_space<vmem>>, vector<1x1x5x16xbf16>
    %64 = vector.shape_cast %63 : vector<1x1x5x16xbf16> to vector<5x16xbf16>
    %cst_36 = arith.constant dense<0.000000e+00> : vector<5x96xf32>
    %65 = tpu.matmul %64, %0, %cst_36 {dimension_numbers = #tpu.dot_dimension_numbers<[1], [0], [0], [1], [0, 0, 1, 1], [], []>} : vector<5x16xbf16>, vector<16x96xbf16>, vector<5x96xf32> -> vector<5x96xf32>
    %66 = vector.broadcast %1 : vector<1x96xf32> to vector<5x96xf32>
    %67 = arith.addf %65, %66 : vector<5x96xf32>
    %cst_37 = arith.constant 0.000000e+00 : f32
    %cst_38 = arith.constant 6.000000e+00 : f32
    %68 = vector.broadcast %cst_37 : f32 to vector<5x96xf32>
    %69 = arith.maximumf %68, %67 : vector<5x96xf32>
    %70 = vector.broadcast %cst_38 : f32 to vector<5x96xf32>
    %71 = arith.minimumf %70, %69 : vector<5x96xf32>
    %c2_i32_39 = arith.constant 2 : i32
    %72 = arith.muli %arg1, %c2_i32_39 : i32
    %c1_i32_40 = arith.constant 1 : i32
    %73 = arith.addi %72, %c1_i32_40 : i32
    %c1_i32_41 = arith.constant 1 : i32
    %74 = arith.cmpi sge, %73, %c1_i32_41 : i32
    %c8_i32_42 = arith.constant 8 : i32
    %75 = arith.cmpi sle, %73, %c8_i32_42 : i32
    %76 = arith.andi %74, %75 : i1
    %77 = tpu.iota {dimensions = array<i32: 0>} : vector<5x1xi32>
    %c2_i32_43 = arith.constant 2 : i32
    %78 = vector.broadcast %c2_i32_43 : i32 to vector<5x1xi32>
    %79 = arith.muli %77, %78 : vector<5x1xi32>
    %c0_i32_44 = arith.constant 0 : i32
    %80 = vector.broadcast %c0_i32_44 : i32 to vector<5x1xi32>
    %81 = arith.addi %79, %80 : vector<5x1xi32>
    %c1_i32_45 = arith.constant 1 : i32
    %82 = vector.broadcast %c1_i32_45 : i32 to vector<5x1xi32>
    %83 = arith.cmpi sge, %81, %82 : vector<5x1xi32>
    %c8_i32_46 = arith.constant 8 : i32
    %84 = vector.broadcast %c8_i32_46 : i32 to vector<5x1xi32>
    %85 = arith.cmpi sle, %81, %84 : vector<5x1xi32>
    %86 = arith.andi %83, %85 : vector<5x1xi1>
    %87 = vector.broadcast %76 : i1 to vector<5x1xi1>
    %88 = arith.andi %87, %86 : vector<5x1xi1>
    %cst_47 = arith.constant 0.000000e+00 : f32
    %89 = vector.shape_cast %88 : vector<5x1xi1> to vector<5x1xi1>
    %90 = vector.broadcast %89 : vector<5x1xi1> to vector<5x96xi1>
    %91 = vector.broadcast %cst_47 : f32 to vector<5x96xf32>
    %92 = arith.select %90, %71, %91 : vector<5x96xi1>, vector<5x96xf32>
    %c0_48 = arith.constant 0 : index
    %c0_49 = arith.constant 0 : index
    %c0_50 = arith.constant 0 : index
    %c0_51 = arith.constant 0 : index
    %93 = vector.load %arg5[%c0_48, %c0_49, %c0_50, %c0_51] : memref<1x1x5x16xbf16, #tpu.memory_space<vmem>>, vector<1x1x5x16xbf16>
    %94 = vector.shape_cast %93 : vector<1x1x5x16xbf16> to vector<5x16xbf16>
    %cst_52 = arith.constant dense<0.000000e+00> : vector<5x96xf32>
    %95 = tpu.matmul %94, %0, %cst_52 {dimension_numbers = #tpu.dot_dimension_numbers<[1], [0], [0], [1], [0, 0, 1, 1], [], []>} : vector<5x16xbf16>, vector<16x96xbf16>, vector<5x96xf32> -> vector<5x96xf32>
    %96 = vector.broadcast %1 : vector<1x96xf32> to vector<5x96xf32>
    %97 = arith.addf %95, %96 : vector<5x96xf32>
    %cst_53 = arith.constant 0.000000e+00 : f32
    %cst_54 = arith.constant 6.000000e+00 : f32
    %98 = vector.broadcast %cst_53 : f32 to vector<5x96xf32>
    %99 = arith.maximumf %98, %97 : vector<5x96xf32>
    %100 = vector.broadcast %cst_54 : f32 to vector<5x96xf32>
    %101 = arith.minimumf %100, %99 : vector<5x96xf32>
    %c2_i32_55 = arith.constant 2 : i32
    %102 = arith.muli %arg1, %c2_i32_55 : i32
    %c1_i32_56 = arith.constant 1 : i32
    %103 = arith.addi %102, %c1_i32_56 : i32
    %c1_i32_57 = arith.constant 1 : i32
    %104 = arith.cmpi sge, %103, %c1_i32_57 : i32
    %c8_i32_58 = arith.constant 8 : i32
    %105 = arith.cmpi sle, %103, %c8_i32_58 : i32
    %106 = arith.andi %104, %105 : i1
    %107 = tpu.iota {dimensions = array<i32: 0>} : vector<5x1xi32>
    %c2_i32_59 = arith.constant 2 : i32
    %108 = vector.broadcast %c2_i32_59 : i32 to vector<5x1xi32>
    %109 = arith.muli %107, %108 : vector<5x1xi32>
    %c1_i32_60 = arith.constant 1 : i32
    %110 = vector.broadcast %c1_i32_60 : i32 to vector<5x1xi32>
    %111 = arith.addi %109, %110 : vector<5x1xi32>
    %c1_i32_61 = arith.constant 1 : i32
    %112 = vector.broadcast %c1_i32_61 : i32 to vector<5x1xi32>
    %113 = arith.cmpi sge, %111, %112 : vector<5x1xi32>
    %c8_i32_62 = arith.constant 8 : i32
    %114 = vector.broadcast %c8_i32_62 : i32 to vector<5x1xi32>
    %115 = arith.cmpi sle, %111, %114 : vector<5x1xi32>
    %116 = arith.andi %113, %115 : vector<5x1xi1>
    %117 = vector.broadcast %106 : i1 to vector<5x1xi1>
    %118 = arith.andi %117, %116 : vector<5x1xi1>
    %cst_63 = arith.constant 0.000000e+00 : f32
    %119 = vector.shape_cast %118 : vector<5x1xi1> to vector<5x1xi1>
    %120 = vector.broadcast %119 : vector<5x1xi1> to vector<5x96xi1>
    %121 = vector.broadcast %cst_63 : f32 to vector<5x96xf32>
    %122 = arith.select %120, %101, %121 : vector<5x96xi1>, vector<5x96xf32>
    %c0_64 = arith.constant 0 : index
    %c0_65 = arith.constant 0 : index
    %c0_66 = arith.constant 0 : index
    %c0_67 = arith.constant 0 : index
    %123 = vector.load %arg6[%c0_64, %c0_65, %c0_66, %c0_67] : memref<1x1x5x16xbf16, #tpu.memory_space<vmem>>, vector<1x1x5x16xbf16>
    %124 = vector.shape_cast %123 : vector<1x1x5x16xbf16> to vector<5x16xbf16>
    %cst_68 = arith.constant dense<0.000000e+00> : vector<5x96xf32>
    %125 = tpu.matmul %124, %0, %cst_68 {dimension_numbers = #tpu.dot_dimension_numbers<[1], [0], [0], [1], [0, 0, 1, 1], [], []>} : vector<5x16xbf16>, vector<16x96xbf16>, vector<5x96xf32> -> vector<5x96xf32>
    %126 = vector.broadcast %1 : vector<1x96xf32> to vector<5x96xf32>
    %127 = arith.addf %125, %126 : vector<5x96xf32>
    %cst_69 = arith.constant 0.000000e+00 : f32
    %cst_70 = arith.constant 6.000000e+00 : f32
    %128 = vector.broadcast %cst_69 : f32 to vector<5x96xf32>
    %129 = arith.maximumf %128, %127 : vector<5x96xf32>
    %130 = vector.broadcast %cst_70 : f32 to vector<5x96xf32>
    %131 = arith.minimumf %130, %129 : vector<5x96xf32>
    %c2_i32_71 = arith.constant 2 : i32
    %132 = arith.muli %arg1, %c2_i32_71 : i32
    %c2_i32_72 = arith.constant 2 : i32
    %133 = arith.addi %132, %c2_i32_72 : i32
    %c1_i32_73 = arith.constant 1 : i32
    %134 = arith.cmpi sge, %133, %c1_i32_73 : i32
    %c8_i32_74 = arith.constant 8 : i32
    %135 = arith.cmpi sle, %133, %c8_i32_74 : i32
    %136 = arith.andi %134, %135 : i1
    %137 = tpu.iota {dimensions = array<i32: 0>} : vector<5x1xi32>
    %c2_i32_75 = arith.constant 2 : i32
    %138 = vector.broadcast %c2_i32_75 : i32 to vector<5x1xi32>
    %139 = arith.muli %137, %138 : vector<5x1xi32>
    %c0_i32_76 = arith.constant 0 : i32
    %140 = vector.broadcast %c0_i32_76 : i32 to vector<5x1xi32>
    %141 = arith.addi %139, %140 : vector<5x1xi32>
    %c1_i32_77 = arith.constant 1 : i32
    %142 = vector.broadcast %c1_i32_77 : i32 to vector<5x1xi32>
    %143 = arith.cmpi sge, %141, %142 : vector<5x1xi32>
    %c8_i32_78 = arith.constant 8 : i32
    %144 = vector.broadcast %c8_i32_78 : i32 to vector<5x1xi32>
    %145 = arith.cmpi sle, %141, %144 : vector<5x1xi32>
    %146 = arith.andi %143, %145 : vector<5x1xi1>
    %147 = vector.broadcast %136 : i1 to vector<5x1xi1>
    %148 = arith.andi %147, %146 : vector<5x1xi1>
    %cst_79 = arith.constant 0.000000e+00 : f32
    %149 = vector.shape_cast %148 : vector<5x1xi1> to vector<5x1xi1>
    %150 = vector.broadcast %149 : vector<5x1xi1> to vector<5x96xi1>
    %151 = vector.broadcast %cst_79 : f32 to vector<5x96xf32>
    %152 = arith.select %150, %131, %151 : vector<5x96xi1>, vector<5x96xf32>
    %c0_80 = arith.constant 0 : index
    %c0_81 = arith.constant 0 : index
    %c0_82 = arith.constant 0 : index
    %c0_83 = arith.constant 0 : index
    %153 = vector.load %arg7[%c0_80, %c0_81, %c0_82, %c0_83] : memref<1x1x5x16xbf16, #tpu.memory_space<vmem>>, vector<1x1x5x16xbf16>
    %154 = vector.shape_cast %153 : vector<1x1x5x16xbf16> to vector<5x16xbf16>
    %cst_84 = arith.constant dense<0.000000e+00> : vector<5x96xf32>
    %155 = tpu.matmul %154, %0, %cst_84 {dimension_numbers = #tpu.dot_dimension_numbers<[1], [0], [0], [1], [0, 0, 1, 1], [], []>} : vector<5x16xbf16>, vector<16x96xbf16>, vector<5x96xf32> -> vector<5x96xf32>
    %156 = vector.broadcast %1 : vector<1x96xf32> to vector<5x96xf32>
    %157 = arith.addf %155, %156 : vector<5x96xf32>
    %cst_85 = arith.constant 0.000000e+00 : f32
    %cst_86 = arith.constant 6.000000e+00 : f32
    %158 = vector.broadcast %cst_85 : f32 to vector<5x96xf32>
    %159 = arith.maximumf %158, %157 : vector<5x96xf32>
    %160 = vector.broadcast %cst_86 : f32 to vector<5x96xf32>
    %161 = arith.minimumf %160, %159 : vector<5x96xf32>
    %c2_i32_87 = arith.constant 2 : i32
    %162 = arith.muli %arg1, %c2_i32_87 : i32
    %c2_i32_88 = arith.constant 2 : i32
    %163 = arith.addi %162, %c2_i32_88 : i32
    %c1_i32_89 = arith.constant 1 : i32
    %164 = arith.cmpi sge, %163, %c1_i32_89 : i32
    %c8_i32_90 = arith.constant 8 : i32
    %165 = arith.cmpi sle, %163, %c8_i32_90 : i32
    %166 = arith.andi %164, %165 : i1
    %167 = tpu.iota {dimensions = array<i32: 0>} : vector<5x1xi32>
    %c2_i32_91 = arith.constant 2 : i32
    %168 = vector.broadcast %c2_i32_91 : i32 to vector<5x1xi32>
    %169 = arith.muli %167, %168 : vector<5x1xi32>
    %c1_i32_92 = arith.constant 1 : i32
    %170 = vector.broadcast %c1_i32_92 : i32 to vector<5x1xi32>
    %171 = arith.addi %169, %170 : vector<5x1xi32>
    %c1_i32_93 = arith.constant 1 : i32
    %172 = vector.broadcast %c1_i32_93 : i32 to vector<5x1xi32>
    %173 = arith.cmpi sge, %171, %172 : vector<5x1xi32>
    %c8_i32_94 = arith.constant 8 : i32
    %174 = vector.broadcast %c8_i32_94 : i32 to vector<5x1xi32>
    %175 = arith.cmpi sle, %171, %174 : vector<5x1xi32>
    %176 = arith.andi %173, %175 : vector<5x1xi1>
    %177 = vector.broadcast %166 : i1 to vector<5x1xi1>
    %178 = arith.andi %177, %176 : vector<5x1xi1>
    %cst_95 = arith.constant 0.000000e+00 : f32
    %179 = vector.shape_cast %178 : vector<5x1xi1> to vector<5x1xi1>
    %180 = vector.broadcast %179 : vector<5x1xi1> to vector<5x96xi1>
    %181 = vector.broadcast %cst_95 : f32 to vector<5x96xf32>
    %182 = arith.select %180, %161, %181 : vector<5x96xi1>, vector<5x96xf32>
    %cst_96 = arith.constant 0.000000e+00 : f32
    %183 = vector.broadcast %cst_96 : f32 to vector<4x96xf32>
    %184 = vector.extract_strided_slice %32 {offsets = [0, 0], sizes = [4, 96], strides = [1, 1]} : vector<5x96xf32> to vector<4x96xf32>
    %185 = vector.extract_strided_slice %2 {offsets = [0, 0], sizes = [1, 96], strides = [1, 1]} : vector<9x96xf32> to vector<1x96xf32>
    %186 = vector.broadcast %185 : vector<1x96xf32> to vector<4x96xf32>
    %187 = arith.mulf %184, %186 : vector<4x96xf32>
    %188 = arith.addf %183, %187 : vector<4x96xf32>
    %189 = vector.extract_strided_slice %62 {offsets = [0, 0], sizes = [4, 96], strides = [1, 1]} : vector<5x96xf32> to vector<4x96xf32>
    %190 = vector.extract_strided_slice %2 {offsets = [1, 0], sizes = [1, 96], strides = [1, 1]} : vector<9x96xf32> to vector<1x96xf32>
    %191 = vector.broadcast %190 : vector<1x96xf32> to vector<4x96xf32>
    %192 = arith.mulf %189, %191 : vector<4x96xf32>
    %193 = arith.addf %188, %192 : vector<4x96xf32>
    %194 = vector.extract_strided_slice %32 {offsets = [1, 0], sizes = [4, 96], strides = [1, 1]} : vector<5x96xf32> to vector<4x96xf32>
    %195 = vector.extract_strided_slice %2 {offsets = [2, 0], sizes = [1, 96], strides = [1, 1]} : vector<9x96xf32> to vector<1x96xf32>
    %196 = vector.broadcast %195 : vector<1x96xf32> to vector<4x96xf32>
    %197 = arith.mulf %194, %196 : vector<4x96xf32>
    %198 = arith.addf %193, %197 : vector<4x96xf32>
    %199 = vector.extract_strided_slice %92 {offsets = [0, 0], sizes = [4, 96], strides = [1, 1]} : vector<5x96xf32> to vector<4x96xf32>
    %200 = vector.extract_strided_slice %2 {offsets = [3, 0], sizes = [1, 96], strides = [1, 1]} : vector<9x96xf32> to vector<1x96xf32>
    %201 = vector.broadcast %200 : vector<1x96xf32> to vector<4x96xf32>
    %202 = arith.mulf %199, %201 : vector<4x96xf32>
    %203 = arith.addf %198, %202 : vector<4x96xf32>
    %204 = vector.extract_strided_slice %122 {offsets = [0, 0], sizes = [4, 96], strides = [1, 1]} : vector<5x96xf32> to vector<4x96xf32>
    %205 = vector.extract_strided_slice %2 {offsets = [4, 0], sizes = [1, 96], strides = [1, 1]} : vector<9x96xf32> to vector<1x96xf32>
    %206 = vector.broadcast %205 : vector<1x96xf32> to vector<4x96xf32>
    %207 = arith.mulf %204, %206 : vector<4x96xf32>
    %208 = arith.addf %203, %207 : vector<4x96xf32>
    %209 = vector.extract_strided_slice %92 {offsets = [1, 0], sizes = [4, 96], strides = [1, 1]} : vector<5x96xf32> to vector<4x96xf32>
    %210 = vector.extract_strided_slice %2 {offsets = [5, 0], sizes = [1, 96], strides = [1, 1]} : vector<9x96xf32> to vector<1x96xf32>
    %211 = vector.broadcast %210 : vector<1x96xf32> to vector<4x96xf32>
    %212 = arith.mulf %209, %211 : vector<4x96xf32>
    %213 = arith.addf %208, %212 : vector<4x96xf32>
    %214 = vector.extract_strided_slice %152 {offsets = [0, 0], sizes = [4, 96], strides = [1, 1]} : vector<5x96xf32> to vector<4x96xf32>
    %215 = vector.extract_strided_slice %2 {offsets = [6, 0], sizes = [1, 96], strides = [1, 1]} : vector<9x96xf32> to vector<1x96xf32>
    %216 = vector.broadcast %215 : vector<1x96xf32> to vector<4x96xf32>
    %217 = arith.mulf %214, %216 : vector<4x96xf32>
    %218 = arith.addf %213, %217 : vector<4x96xf32>
    %219 = vector.extract_strided_slice %182 {offsets = [0, 0], sizes = [4, 96], strides = [1, 1]} : vector<5x96xf32> to vector<4x96xf32>
    %220 = vector.extract_strided_slice %2 {offsets = [7, 0], sizes = [1, 96], strides = [1, 1]} : vector<9x96xf32> to vector<1x96xf32>
    %221 = vector.broadcast %220 : vector<1x96xf32> to vector<4x96xf32>
    %222 = arith.mulf %219, %221 : vector<4x96xf32>
    %223 = arith.addf %218, %222 : vector<4x96xf32>
    %224 = vector.extract_strided_slice %152 {offsets = [1, 0], sizes = [4, 96], strides = [1, 1]} : vector<5x96xf32> to vector<4x96xf32>
    %225 = vector.extract_strided_slice %2 {offsets = [8, 0], sizes = [1, 96], strides = [1, 1]} : vector<9x96xf32> to vector<1x96xf32>
    %226 = vector.broadcast %225 : vector<1x96xf32> to vector<4x96xf32>
    %227 = arith.mulf %224, %226 : vector<4x96xf32>
    %228 = arith.addf %223, %227 : vector<4x96xf32>
    %c0_97 = arith.constant 0 : index
    %c0_98 = arith.constant 0 : index
    %229 = vector.load %arg11[%c0_97, %c0_98] : memref<1x96xf32, #tpu.memory_space<vmem>>, vector<1x96xf32>
    %230 = vector.broadcast %229 : vector<1x96xf32> to vector<4x96xf32>
    %231 = arith.addf %228, %230 : vector<4x96xf32>
    %cst_99 = arith.constant 0.000000e+00 : f32
    %cst_100 = arith.constant 6.000000e+00 : f32
    %232 = vector.broadcast %cst_99 : f32 to vector<4x96xf32>
    %233 = arith.maximumf %232, %231 : vector<4x96xf32>
    %234 = vector.broadcast %cst_100 : f32 to vector<4x96xf32>
    %235 = arith.minimumf %234, %233 : vector<4x96xf32>
    %236 = arith.truncf %235 : vector<4x96xf32> to vector<4x96xbf16>
    %c0_101 = arith.constant 0 : index
    %c0_102 = arith.constant 0 : index
    %237 = vector.load %arg12[%c0_101, %c0_102] : memref<96x24xbf16, #tpu.memory_space<vmem>>, vector<96x24xbf16>
    %cst_103 = arith.constant dense<0.000000e+00> : vector<4x24xf32>
    %238 = tpu.matmul %236, %237, %cst_103 {dimension_numbers = #tpu.dot_dimension_numbers<[1], [0], [0], [1], [0, 0, 1, 1], [], []>} : vector<4x96xbf16>, vector<96x24xbf16>, vector<4x24xf32> -> vector<4x24xf32>
    %c0_104 = arith.constant 0 : index
    %c0_105 = arith.constant 0 : index
    %239 = vector.load %arg13[%c0_104, %c0_105] : memref<1x24xf32, #tpu.memory_space<vmem>>, vector<1x24xf32>
    %240 = vector.broadcast %239 : vector<1x24xf32> to vector<4x24xf32>
    %241 = arith.addf %238, %240 : vector<4x24xf32>
    %242 = arith.truncf %241 : vector<4x24xf32> to vector<4x24xbf16>
    %c0_106 = arith.constant 0 : index
    %c0_107 = arith.constant 0 : index
    %c0_108 = arith.constant 0 : index
    %c0_109 = arith.constant 0 : index
    %243 = vector.load %arg14[%c0_106, %c0_107, %c0_108, %c0_109] : memref<1x1x4x24xbf16, #tpu.memory_space<vmem>>, vector<1x1x4x24xbf16>
    %244 = vector.shape_cast %243 : vector<1x1x4x24xbf16> to vector<4x24xbf16>
    %245 = vector.shape_cast %242 : vector<4x24xbf16> to vector<1x1x4x24xbf16>
    tpu.vector_store %arg14[%c0_106, %c0_107, %c0_108, %c0_109], %245 {strides = array<i32>} : memref<1x1x4x24xbf16, #tpu.memory_space<vmem>>, vector<1x1x4x24xbf16>,
    return
  }
  func.func @transform_0(%arg0: i32, %arg1: i32) -> (i32, i32, i32, i32) {
    %c2_i32 = arith.constant 2 : i32
    %0 = arith.muli %arg1, %c2_i32 : i32
    %c0_i32 = arith.constant 0 : i32
    %1 = arith.addi %0, %c0_i32 : i32
    %c0_i32_0 = arith.constant 0 : i32
    %c0_i32_1 = arith.constant 0 : i32
    %c0_i32_2 = arith.constant 0 : i32
    return %arg0, %1, %c0_i32_0, %c0_i32_1 : i32, i32, i32, i32
  }
  func.func @transform_1(%arg0: i32, %arg1: i32) -> (i32, i32, i32, i32) {
    %c2_i32 = arith.constant 2 : i32
    %0 = arith.muli %arg1, %c2_i32 : i32
    %c0_i32 = arith.constant 0 : i32
    %1 = arith.addi %0, %c0_i32 : i32
    %c0_i32_0 = arith.constant 0 : i32
    %c0_i32_1 = arith.constant 0 : i32
    %c0_i32_2 = arith.constant 0 : i32
    return %arg0, %1, %c0_i32_0, %c0_i32_1 : i32, i32, i32, i32
  }
  func.func @transform_2(%arg0: i32, %arg1: i32) -> (i32, i32, i32, i32) {
    %c2_i32 = arith.constant 2 : i32
    %0 = arith.muli %arg1, %c2_i32 : i32
    %c1_i32 = arith.constant 1 : i32
    %1 = arith.addi %0, %c1_i32 : i32
    %c0_i32 = arith.constant 0 : i32
    %c0_i32_0 = arith.constant 0 : i32
    %c0_i32_1 = arith.constant 0 : i32
    return %arg0, %1, %c0_i32, %c0_i32_0 : i32, i32, i32, i32
  }
  func.func @transform_3(%arg0: i32, %arg1: i32) -> (i32, i32, i32, i32) {
    %c2_i32 = arith.constant 2 : i32
    %0 = arith.muli %arg1, %c2_i32 : i32
    %c1_i32 = arith.constant 1 : i32
    %1 = arith.addi %0, %c1_i32 : i32
    %c0_i32 = arith.constant 0 : i32
    %c0_i32_0 = arith.constant 0 : i32
    %c0_i32_1 = arith.constant 0 : i32
    return %arg0, %1, %c0_i32, %c0_i32_0 : i32, i32, i32, i32
  }
  func.func @transform_4(%arg0: i32, %arg1: i32) -> (i32, i32, i32, i32) {
    %c2_i32 = arith.constant 2 : i32
    %0 = arith.muli %arg1, %c2_i32 : i32
    %c2_i32_0 = arith.constant 2 : i32
    %1 = arith.addi %0, %c2_i32_0 : i32
    %c0_i32 = arith.constant 0 : i32
    %c0_i32_1 = arith.constant 0 : i32
    %c0_i32_2 = arith.constant 0 : i32
    return %arg0, %1, %c0_i32, %c0_i32_1 : i32, i32, i32, i32
  }
  func.func @transform_5(%arg0: i32, %arg1: i32) -> (i32, i32, i32, i32) {
    %c2_i32 = arith.constant 2 : i32
    %0 = arith.muli %arg1, %c2_i32 : i32
    %c2_i32_0 = arith.constant 2 : i32
    %1 = arith.addi %0, %c2_i32_0 : i32
    %c0_i32 = arith.constant 0 : i32
    %c0_i32_1 = arith.constant 0 : i32
    %c0_i32_2 = arith.constant 0 : i32
    return %arg0, %1, %c0_i32, %c0_i32_1 : i32, i32, i32, i32
  }
  func.func @transform_6(%arg0: i32, %arg1: i32) -> (i32, i32) {
    %c0_i32 = arith.constant 0 : i32
    %c0_i32_0 = arith.constant 0 : i32
    %c0_i32_1 = arith.constant 0 : i32
    return %c0_i32, %c0_i32_0 : i32, i32
  }
  func.func @transform_7(%arg0: i32, %arg1: i32) -> (i32, i32) {
    %c0_i32 = arith.constant 0 : i32
    %c0_i32_0 = arith.constant 0 : i32
    %c0_i32_1 = arith.constant 0 : i32
    return %c0_i32, %c0_i32_0 : i32, i32
  }
  func.func @transform_8(%arg0: i32, %arg1: i32) -> (i32, i32) {
    %c0_i32 = arith.constant 0 : i32
    %c0_i32_0 = arith.constant 0 : i32
    %c0_i32_1 = arith.constant 0 : i32
    return %c0_i32, %c0_i32_0 : i32, i32
  }
  func.func @transform_9(%arg0: i32, %arg1: i32) -> (i32, i32) {
    %c0_i32 = arith.constant 0 : i32
    %c0_i32_0 = arith.constant 0 : i32
    %c0_i32_1 = arith.constant 0 : i32
    return %c0_i32, %c0_i32_0 : i32, i32
  }
  func.func @transform_10(%arg0: i32, %arg1: i32) -> (i32, i32) {
    %c0_i32 = arith.constant 0 : i32
    %c0_i32_0 = arith.constant 0 : i32
    %c0_i32_1 = arith.constant 0 : i32
    return %c0_i32, %c0_i32_0 : i32, i32
  }
  func.func @transform_11(%arg0: i32, %arg1: i32) -> (i32, i32) {
    %c0_i32 = arith.constant 0 : i32
    %c0_i32_0 = arith.constant 0 : i32
    %c0_i32_1 = arith.constant 0 : i32
    return %c0_i32, %c0_i32_0 : i32, i32
  }
  func.func @transform_12(%arg0: i32, %arg1: i32) -> (i32, i32, i32, i32) {
    %c0_i32 = arith.constant 0 : i32
    %c0_i32_0 = arith.constant 0 : i32
    %c0_i32_1 = arith.constant 0 : i32
    return %arg0, %arg1, %c0_i32, %c0_i32_0 : i32, i32, i32, i32
  }
}

module attributes {stable_mosaic.version = 11 : i64} {
  func.func @_matmul_bias_kernel(%arg0: i32, %arg1: i32, %arg2: memref<32x24xbf16, #tpu.memory_space<vmem>>, %arg3: memref<24x256xbf16, #tpu.memory_space<vmem>>, %arg4: memref<1x256xf32, #tpu.memory_space<vmem>>, %arg5: memref<32x256xf32, #tpu.memory_space<vmem>>) attributes {dimension_semantics = [#tpu.dimension_semantics<parallel>, #tpu.dimension_semantics<parallel>], iteration_bounds = array<i64: 1, 5>, scalar_prefetch = 0 : i64, scratch_operands = 0 : i64, tpu.core_type = #tpu.core_type<tc>, window_params = [{transform_indices = @transform_0, window_bounds = array<i64: 32, 24>}, {transform_indices = @transform_1, window_bounds = array<i64: 24, 256>}, {transform_indices = @transform_2, window_bounds = array<i64: 1, 256>}, {transform_indices = @transform_3, window_bounds = array<i64: 32, 256>}]} {
    %c0 = arith.constant 0 : index
    %c0_0 = arith.constant 0 : index
    %0 = vector.load %arg2[%c0, %c0_0] : memref<32x24xbf16, #tpu.memory_space<vmem>>, vector<32x24xbf16>
    %c0_1 = arith.constant 0 : index
    %c0_2 = arith.constant 0 : index
    %1 = vector.load %arg3[%c0_1, %c0_2] : memref<24x256xbf16, #tpu.memory_space<vmem>>, vector<24x256xbf16>
    %cst = arith.constant dense<0.000000e+00> : vector<32x256xf32>
    %2 = tpu.matmul %0, %1, %cst {dimension_numbers = #tpu.dot_dimension_numbers<[1], [0], [0], [1], [0, 0, 1, 1], [], []>} : vector<32x24xbf16>, vector<24x256xbf16>, vector<32x256xf32> -> vector<32x256xf32>
    %c0_3 = arith.constant 0 : index
    %c0_4 = arith.constant 0 : index
    %3 = vector.load %arg4[%c0_3, %c0_4] : memref<1x256xf32, #tpu.memory_space<vmem>>, vector<1x256xf32>
    %4 = vector.broadcast %3 : vector<1x256xf32> to vector<32x256xf32>
    %5 = arith.addf %2, %4 : vector<32x256xf32>
    %cst_5 = arith.constant 0.000000e+00 : f32
    %cst_6 = arith.constant 6.000000e+00 : f32
    %6 = vector.broadcast %cst_5 : f32 to vector<32x256xf32>
    %7 = arith.maximumf %6, %5 : vector<32x256xf32>
    %8 = vector.broadcast %cst_6 : f32 to vector<32x256xf32>
    %9 = arith.minimumf %8, %7 : vector<32x256xf32>
    %c0_7 = arith.constant 0 : index
    %c0_8 = arith.constant 0 : index
    %10 = vector.load %arg5[%c0_7, %c0_8] : memref<32x256xf32, #tpu.memory_space<vmem>>, vector<32x256xf32>
    tpu.vector_store %arg5[%c0_7, %c0_8], %9 {strides = array<i32>} : memref<32x256xf32, #tpu.memory_space<vmem>>, vector<32x256xf32>,
    return
  }
  func.func @transform_0(%arg0: i32, %arg1: i32) -> (i32, i32) {
    %c0_i32 = arith.constant 0 : i32
    %c0_i32_0 = arith.constant 0 : i32
    return %arg0, %c0_i32 : i32, i32
  }
  func.func @transform_1(%arg0: i32, %arg1: i32) -> (i32, i32) {
    %c0_i32 = arith.constant 0 : i32
    %c0_i32_0 = arith.constant 0 : i32
    return %c0_i32, %arg1 : i32, i32
  }
  func.func @transform_2(%arg0: i32, %arg1: i32) -> (i32, i32) {
    %c0_i32 = arith.constant 0 : i32
    %c0_i32_0 = arith.constant 0 : i32
    return %c0_i32, %arg1 : i32, i32
  }
  func.func @transform_3(%arg0: i32, %arg1: i32) -> (i32, i32) {
    %c0_i32 = arith.constant 0 : i32
    return %arg0, %arg1 : i32, i32
  }
}

</mosaic_0001>

<llo_original>
// kernel: _lambda_.5
$region0: #{_lambda_.5}
  #allocation0 [shape = 'u32[]', space=smem, size = 0x4, offset = 0x4, fixed_abs, tag = 'smem constant byte address 0x4 - core index']
  #allocation1 [shape = 'u32[144,128]{1,0:T(1,128)}', space=vmem, size = 0x12000, scoped, tag = 'internal scratch']
  %s0 = inlined_call_operand.vmem [shape: bf16[128,32], index: 0, kind: input, shape index: {}]
  %s1 = inlined_call_operand.vmem [shape: bf16[32,32], index: 1, kind: input, shape index: {}]
  %s2 = inlined_call_operand.vmem [shape: f32[1,32], index: 2, kind: input, shape index: {}]
  %s3 = inlined_call_operand.vmem [shape: bf16[128,32], index: 3, kind: output, shape index: {}]
  %s4 = sld [smem:[#allocation0]]
  $region22: #{_lambda_.5} parent=0
    _
  %s6 = ssub.s32 1, %s4
  %s7 = scalar_select 0, %s6, %s4
  // Predicated region
  $region2: #{_lambda_.5} parent=0 // pred_check
    _
  $region3: #{_lambda_.5} parent=0 // pred_check_branch
    %9 = sbr.rel (0) target = $region5
  $region4: #{_lambda_.5} parent=0 // pred_region
    _
  $region5: #{_lambda_.5} parent=0 // pred_fallthru
    _
  // Predicated region
  $region6: #{_lambda_.5} parent=0 // pred_check
    _
  $region7: #{_lambda_.5} parent=0 // pred_check_branch
    %11 = sbr.rel (0) target = $region9
  $region8: #{_lambda_.5} parent=0 // pred_region
    _
  $region9: #{_lambda_.5} parent=0 // pred_fallthru
    _
  // Predicated region
  $region10: #{_lambda_.5} parent=0 // pred_check
    _
  $region11: #{_lambda_.5} parent=0 // pred_check_branch
    %13 = sbr.rel (0) target = $region13
  $region12: #{_lambda_.5} parent=0 // pred_region
    _
  $region13: #{_lambda_.5} parent=0 // pred_fallthru
    _
  %v15 = vld [vmem:[%s0] sm:$0xf]
  %v16 = vld [vmem:[%s0 + $0x4] sm:$0xf]
  %v17 = vld [vmem:[%s0 + $0x8] sm:$0xf]
  %v18 = vld [vmem:[%s0 + $0xc] sm:$0xf]
  %v19 = vld [vmem:[%s0 + $0x10] sm:$0xf]
  %v20 = vld [vmem:[%s0 + $0x14] sm:$0xf]
  %v21 = vld [vmem:[%s0 + $0x18] sm:$0xf]
  %v22 = vld [vmem:[%s0 + $0x1c] sm:$0xf]
  %v23 = vld [vmem:[%s0 + $0x20] sm:$0xf]
  %v24 = vld [vmem:[%s0 + $0x24] sm:$0xf]
  %v25 = vld [vmem:[%s0 + $0x28] sm:$0xf]
  %v26 = vld [vmem:[%s0 + $0x2c] sm:$0xf]
  %v27 = vld [vmem:[%s0 + $0x30] sm:$0xf]
  %v28 = vld [vmem:[%s0 + $0x34] sm:$0xf]
  %v29 = vld [vmem:[%s0 + $0x38] sm:$0xf]
  %v30 = vld [vmem:[%s0 + $0x3c] sm:$0xf]
  %v31 = vld [vmem:[%s1] sm:$0xf]
  %v32 = vld [vmem:[%s1 + $0x4] sm:$0xf]
  %v33 = vld [vmem:[%s1 + $0x8] sm:$0xf]
  %v34 = vld [vmem:[%s1 + $0xc] sm:$0xf]
  %v35 = vld [vmem:[%s2] sm:$0x1]
  %v37 = vlaneseq
  %v38 = vshrl.u32 %v37, 7
  %v39 = vsub.s32 0, %v38
  %v40 = vrot.slane %v35, %v39
  %v58 = vunpack.c.l.b16 %v15
  %v59 = vunpack.c.l.b16 %v16
  %v60 = vunpack.c.l.b16 %v17
  %v61 = vunpack.c.l.b16 %v18
  %v62 = vunpack.c.l.b16 %v19
  %v63 = vunpack.c.l.b16 %v20
  %v64 = vunpack.c.l.b16 %v21
  %v65 = vunpack.c.l.b16 %v22
  %v66 = vunpack.c.l.b16 %v23
  %v67 = vunpack.c.l.b16 %v24
  %v68 = vunpack.c.l.b16 %v25
  %v69 = vunpack.c.l.b16 %v26
  %v70 = vunpack.c.l.b16 %v27
  %v71 = vunpack.c.l.b16 %v28
  %v72 = vunpack.c.l.b16 %v29
  %v73 = vunpack.c.l.b16 %v30
  %v74 = vpack.c.b16 %v59, %v58
  %v75 = vpack.c.b16 %v61, %v60
  %v76 = vpack.c.b16 %v63, %v62
  %v77 = vpack.c.b16 %v65, %v64
  %v78 = vpack.c.b16 %v67, %v66
  %v79 = vpack.c.b16 %v69, %v68
  %v80 = vpack.c.b16 %v71, %v70
  %v81 = vpack.c.b16 %v73, %v72
  %v86 = vunpack.c.l.b16 %v31
  %v87 = vunpack.c.l.b16 %v32
  %v88 = vunpack.c.l.b16 %v33
  %v89 = vunpack.c.l.b16 %v34
  %v90 = vpack.c.b16 %v87, %v86
  %v91 = vpack.c.b16 %v89, %v88
  %vm94 = vcmask 261120
  %v96 = vsel %vm94, %v74, 0
  %v99 = vsel %vm94, %v75, 0
  %v102 = vsel %vm94, %v76, 0
  %v105 = vsel %vm94, %v77, 0
  %v108 = vsel %vm94, %v78, 0
  %v111 = vsel %vm94, %v79, 0
  %v114 = vsel %vm94, %v80, 0
  %v117 = vsel %vm94, %v81, 0
  %119 = vmatprep.subr.bf16.mxu0 0
  %120 = vmatpush1.bf16.msra.mxu0 %v90
  %121 = vmatprep.subr.bf16.mxu0 0
  %122 = vmatpush1.bf16.msra.mxu0 %v91
  %123 = vmatprep.subr.bf16.mxu0 0
  %124 = vmatpush1.bf16.msra.mxu0 0
  %125 = vmatprep.subr.bf16.mxu0 0
  %126 = vmatpush1.bf16.msra.mxu0 0
  %127 = vmatprep.subr.bf16.mxu0 0
  %128 = vmatpush1.bf16.msra.mxu0 0
  %129 = vmatprep.subr.bf16.mxu0 0
  %130 = vmatpush1.bf16.msra.mxu0 0
  %131 = vmatprep.subr.bf16.mxu0 0
  %132 = vmatpush1.bf16.msra.mxu0 0
  %133 = vmatprep.subr.bf16.mxu0 0
  %134 = vmatpush1.bf16.msra.mxu0 0
  %135 = vmatprep.subr.bf16.mxu0 0
  %136 = vmatpush1.bf16.msra.mxu0 0
  %137 = vmatprep.subr.bf16.mxu0 0
  %138 = vmatpush1.bf16.msra.mxu0 0
  %139 = vmatprep.subr.bf16.mxu0 0
  %140 = vmatpush1.bf16.msra.mxu0 0
  %141 = vmatprep.subr.bf16.mxu0 0
  %142 = vmatpush1.bf16.msra.mxu0 0
  %143 = vmatprep.subr.bf16.mxu0 0
  %144 = vmatpush1.bf16.msra.mxu0 0
  %145 = vmatprep.subr.bf16.mxu0 0
  %146 = vmatpush1.bf16.msra.mxu0 0
  %147 = vmatprep.subr.bf16.mxu0 0
  %148 = vmatpush1.bf16.msra.mxu0 0
  %149 = vmatprep.subr.bf16.mxu0 0
  %150 = vmatpush1.bf16.msra.mxu0 0
  %151 = vmatprep.mubr.bf16.mxu0 0
  %152 = vmatmul.mubr.bf16.gmra.mrb[0].mxu0 %v96
  %v153 = vpop.f32.mrb[0].mxu0
  %v154 = vadd.f32 %v40, %v153
  %v155 = vpop.f32.mrb[0].mxu0
  %v156 = vpop.f32.mrb[0].mxu0
  %v157 = vadd.f32 %v40, %v156
  %v158 = vpop.f32.mrb[0].mxu0
  %159 = vmatprep.mubr.bf16.mxu0 0
  %160 = vmatmul.mubr.bf16.gmra.mrb[0].mxu0 %v99
  %v161 = vpop.f32.mrb[0].mxu0
  %v162 = vadd.f32 %v40, %v161
  %v163 = vpop.f32.mrb[0].mxu0
  %v164 = vpop.f32.mrb[0].mxu0
  %v165 = vadd.f32 %v40, %v164
  %v166 = vpop.f32.mrb[0].mxu0
  %167 = vmatprep.mubr.bf16.mxu0 0
  %168 = vmatmul.mubr.bf16.gmra.mrb[0].mxu0 %v102
  %v169 = vpop.f32.mrb[0].mxu0
  %v170 = vadd.f32 %v40, %v169
  %v171 = vpop.f32.mrb[0].mxu0
  %v172 = vpop.f32.mrb[0].mxu0
  %v173 = vadd.f32 %v40, %v172
  %v174 = vpop.f32.mrb[0].mxu0
  %175 = vmatprep.mubr.bf16.mxu0 0
  %176 = vmatmul.mubr.bf16.gmra.mrb[0].mxu0 %v105
  %v177 = vpop.f32.mrb[0].mxu0
  %v178 = vadd.f32 %v40, %v177
  %v179 = vpop.f32.mrb[0].mxu0
  %v180 = vpop.f32.mrb[0].mxu0
  %v181 = vadd.f32 %v40, %v180
  %v182 = vpop.f32.mrb[0].mxu0
  %183 = vmatprep.mubr.bf16.mxu0 0
  %184 = vmatmul.mubr.bf16.gmra.mrb[0].mxu0 %v108
  %v185 = vpop.f32.mrb[0].mxu0
  %v186 = vadd.f32 %v40, %v185
  %v187 = vpop.f32.mrb[0].mxu0
  %v188 = vpop.f32.mrb[0].mxu0
  %v189 = vadd.f32 %v40, %v188
  %v190 = vpop.f32.mrb[0].mxu0
  %191 = vmatprep.mubr.bf16.mxu0 0
  %192 = vmatmul.mubr.bf16.gmra.mrb[0].mxu0 %v111
  %v193 = vpop.f32.mrb[0].mxu0
  %v194 = vadd.f32 %v40, %v193
  %v195 = vpop.f32.mrb[0].mxu0
  %v196 = vpop.f32.mrb[0].mxu0
  %v197 = vadd.f32 %v40, %v196
  %v198 = vpop.f32.mrb[0].mxu0
  %199 = vmatprep.mubr.bf16.mxu0 0
  %200 = vmatmul.mubr.bf16.gmra.mrb[0].mxu0 %v114
  %v201 = vpop.f32.mrb[0].mxu0
  %v202 = vadd.f32 %v40, %v201
  %v203 = vpop.f32.mrb[0].mxu0
  %v204 = vpop.f32.mrb[0].mxu0
  %v205 = vadd.f32 %v40, %v204
  %v206 = vpop.f32.mrb[0].mxu0
  %207 = vmatprep.mubr.bf16.mxu0 0
  %208 = vmatmul.mubr.bf16.gmra.mrb[0].mxu0 %v117
  %v209 = vpop.f32.mrb[0].mxu0
  %v210 = vadd.f32 %v40, %v209
  %v211 = vpop.f32.mrb[0].mxu0
  %v212 = vpop.f32.mrb[0].mxu0
  %v213 = vadd.f32 %v40, %v212
  %v214 = vpop.f32.mrb[0].mxu0
  %215 = vdwg.mxu0
  %v216 = vmax.f32 %v154, 0.0
  %v217 = vmax.f32 %v157, 0.0
  %v218 = vmax.f32 %v162, 0.0
  %v219 = vmax.f32 %v165, 0.0
  %v220 = vmax.f32 %v170, 0.0
  %v221 = vmax.f32 %v173, 0.0
  %v222 = vmax.f32 %v178, 0.0
  %v223 = vmax.f32 %v181, 0.0
  %v224 = vmax.f32 %v186, 0.0
  %v225 = vmax.f32 %v189, 0.0
  %v226 = vmax.f32 %v194, 0.0
  %v227 = vmax.f32 %v197, 0.0
  %v228 = vmax.f32 %v202, 0.0
  %v229 = vmax.f32 %v205, 0.0
  %v230 = vmax.f32 %v210, 0.0
  %v231 = vmax.f32 %v213, 0.0
  %v232 = vmin.f32 %v216, 6.0
  %v233 = vmin.f32 %v217, 6.0
  %v234 = vmin.f32 %v218, 6.0
  %v235 = vmin.f32 %v219, 6.0
  %v236 = vmin.f32 %v220, 6.0
  %v237 = vmin.f32 %v221, 6.0
  %v238 = vmin.f32 %v222, 6.0
  %v239 = vmin.f32 %v223, 6.0
  %v240 = vmin.f32 %v224, 6.0
  %v241 = vmin.f32 %v225, 6.0
  %v242 = vmin.f32 %v226, 6.0
  %v243 = vmin.f32 %v227, 6.0
  %v244 = vmin.f32 %v228, 6.0
  %v245 = vmin.f32 %v229, 6.0
  %v246 = vmin.f32 %v230, 6.0
  %v247 = vmin.f32 %v231, 6.0
  %v248 = vpack.c.bf16 %v233, %v232
  %v249 = vpack.c.bf16 %v235, %v234
  %v250 = vpack.c.bf16 %v237, %v236
  %v251 = vpack.c.bf16 %v239, %v238
  %v252 = vpack.c.bf16 %v241, %v240
  %v253 = vpack.c.bf16 %v243, %v242
  %v254 = vpack.c.bf16 %v245, %v244
  %v255 = vpack.c.bf16 %v247, %v246
  %v264 = vunpack.c.l.b16 %v248
  %v265 = vunpack.c.h.b16 %v248
  %v266 = vunpack.c.l.b16 %v249
  %v267 = vunpack.c.h.b16 %v249
  %v268 = vunpack.c.l.b16 %v250
  %v269 = vunpack.c.h.b16 %v250
  %v270 = vunpack.c.l.b16 %v251
  %v271 = vunpack.c.h.b16 %v251
  %v272 = vunpack.c.l.b16 %v252
  %v273 = vunpack.c.h.b16 %v252
  %v274 = vunpack.c.l.b16 %v253
  %v275 = vunpack.c.h.b16 %v253
  %v276 = vunpack.c.l.b16 %v254
  %v277 = vunpack.c.h.b16 %v254
  %v278 = vunpack.c.l.b16 %v255
  %v279 = vunpack.c.h.b16 %v255
  %v280 = vpack.c.b16 %v264, %v264
  %v281 = vpack.c.b16 %v265, %v265
  %v282 = vpack.c.b16 %v266, %v266
  %v283 = vpack.c.b16 %v267, %v267
  %v284 = vpack.c.b16 %v268, %v268
  %v285 = vpack.c.b16 %v269, %v269
  %v286 = vpack.c.b16 %v270, %v270
  %v287 = vpack.c.b16 %v271, %v271
  %v288 = vpack.c.b16 %v272, %v272
  %v289 = vpack.c.b16 %v273, %v273
  %v290 = vpack.c.b16 %v274, %v274
  %v291 = vpack.c.b16 %v275, %v275
  %v292 = vpack.c.b16 %v276, %v276
  %v293 = vpack.c.b16 %v277, %v277
  %v294 = vpack.c.b16 %v278, %v278
  %v295 = vpack.c.b16 %v279, %v279
  %vm312 = vcmask 257024
  %313 = vst.msk [vmem:[%s3] sm:$0xf] %vm312, %v280
  %314 = vst.msk [vmem:[%s3 + $0x4] sm:$0xf] %vm312, %v281
  %315 = vst.msk [vmem:[%s3 + $0x8] sm:$0xf] %vm312, %v282
  %316 = vst.msk [vmem:[%s3 + $0xc] sm:$0xf] %vm312, %v283
  %317 = vst.msk [vmem:[%s3 + $0x10] sm:$0xf] %vm312, %v284
  %318 = vst.msk [vmem:[%s3 + $0x14] sm:$0xf] %vm312, %v285
  %319 = vst.msk [vmem:[%s3 + $0x18] sm:$0xf] %vm312, %v286
  %320 = vst.msk [vmem:[%s3 + $0x1c] sm:$0xf] %vm312, %v287
  %321 = vst.msk [vmem:[%s3 + $0x20] sm:$0xf] %vm312, %v288
  %322 = vst.msk [vmem:[%s3 + $0x24] sm:$0xf] %vm312, %v289
  %323 = vst.msk [vmem:[%s3 + $0x28] sm:$0xf] %vm312, %v290
  %324 = vst.msk [vmem:[%s3 + $0x2c] sm:$0xf] %vm312, %v291
  %325 = vst.msk [vmem:[%s3 + $0x30] sm:$0xf] %vm312, %v292
  %326 = vst.msk [vmem:[%s3 + $0x34] sm:$0xf] %vm312, %v293
  %327 = vst.msk [vmem:[%s3 + $0x38] sm:$0xf] %vm312, %v294
  %328 = vst.msk [vmem:[%s3 + $0x3c] sm:$0xf] %vm312, %v295
  // Predicated region
  $region14: #{_lambda_.5} parent=0 // pred_check
    _
  $region15: #{_lambda_.5} parent=0 // pred_check_branch
    %330 = sbr.rel (0) target = $region17
  $region16: #{_lambda_.5} parent=0 // pred_region
    _
  $region17: #{_lambda_.5} parent=0 // pred_fallthru
    _
  // Predicated region
  $region18: #{_lambda_.5} parent=0 // pred_check
    _
  $region19: #{_lambda_.5} parent=0 // pred_check_branch
    %332 = sbr.rel (0) target = $region21
  $region20: #{_lambda_.5} parent=0 // pred_region
    _
  $region21: #{_lambda_.5} parent=0 // pred_fallthru
    _

// kernel: _lambda_.6
$region0: #{_lambda_.6}
  #allocation0 [shape = 'u32[]', space=smem, size = 0x4, offset = 0x4, fixed_abs, tag = 'smem constant byte address 0x4 - core index']
  #allocation1 [shape = 'u32[144,128]{1,0:T(1,128)}', space=vmem, size = 0x12000, scoped, tag = 'internal scratch']
  %s0 = inlined_call_operand.vmem [shape: bf16[2,10,10,32], index: 0, kind: input, shape index: {}, may-alias: {0,1,2}]
  %s1 = inlined_call_operand.vmem [shape: bf16[2,10,10,32], index: 1, kind: input, shape index: {}, may-alias: {0,1,2}]
  %s2 = inlined_call_operand.vmem [shape: bf16[2,10,10,32], index: 2, kind: input, shape index: {}, may-alias: {0,1,2}]
  %s3 = inlined_call_operand.vmem [shape: bf16[32,32], index: 3, kind: input, shape index: {}]
  %s4 = inlined_call_operand.vmem [shape: f32[1,32], index: 4, kind: input, shape index: {}]
  %s5 = inlined_call_operand.vmem [shape: f32[9,32], index: 5, kind: input, shape index: {}]
  %s6 = inlined_call_operand.vmem [shape: f32[1,32], index: 6, kind: input, shape index: {}]
  %s7 = inlined_call_operand.vmem [shape: bf16[32,16], index: 7, kind: input, shape index: {}]
  %s8 = inlined_call_operand.vmem [shape: f32[1,16], index: 8, kind: input, shape index: {}]
  %s9 = inlined_call_operand.vmem [shape: bf16[2,8,8,16], index: 9, kind: output, shape index: {}]
  %s10 = sld [smem:[#allocation0]]
  $region69: #{_lambda_.6} parent=0
    _
  %s12 = ssub.s32 1, %s10
  %s13 = scalar_select 0, %s12, %s10
  loop: start=0, step=1, limit=18
  $region2: #{_lambda_.6} parent=0 // loop_pre_header
    _
  $region3: #{_lambda_.6} parent=0 // loop_header
    %s15 = sphi 0, %s19
    %p16 = scmp.ge.s32.totalorder %s15, 18
    %s22 = sphi 0, %s34
    %s23 = sphi 0, %s30
    %s24 = sphi 0, %s22
    %s25 = sphi 0, %s23
    %s26 = sphi 0, %s24
    %s27 = sphi 0, %s25
    %s39 = sphi 0, %s41
    %s42 = sphi 0, %s39
    %s43 = sphi 0, %s42
    %s59 = sphi 0, %s43
    %s69 = sphi 0, %s71
    %s72 = sphi 0, %s69
    %s73 = sphi 0, %s72
    %s89 = sphi 0, %s73
    %s99 = sphi 0, %s101
    %s102 = sphi 0, %s99
    %s103 = sphi 0, %s102
    %s119 = sphi 0, %s103
    %s123 = sphi 0, %s123
    %s125 = sphi 0, %s123
    %s126 = sphi 0, %s125
    %s140 = sphi 0, %s126
    %s144 = sphi 0, %s144
    %s146 = sphi 0, %s144
    %s147 = sphi 0, %s146
    %s161 = sphi 0, %s147
    %s165 = sphi 0, %s165
    %s167 = sphi 0, %s165
    %s168 = sphi 0, %s167
    %s182 = sphi 0, %s168
    %s186 = sphi 0, %s186
    %s188 = sphi 0, %s186
    %s189 = sphi 0, %s188
    %s203 = sphi 0, %s189
    %s207 = sphi 0, %s207
    %s209 = sphi 0, %s207
    %s210 = sphi 0, %s209
    %s224 = sphi 0, %s210
    %s228 = sphi 0, %s228
    %s230 = sphi 0, %s228
    %s231 = sphi 0, %s230
    %s245 = sphi 0, %s231
    %s253 = sphi 0, %s255
    %s256 = sphi 0, %s253
    %s257 = sphi 0, %s256
    %s273 = sphi 0, %s257
  $region4: #{_lambda_.6} parent=0 // loop_header_branch
    %18 = sbr.rel (%p16) target = $region8
  $region5: #{_lambda_.6} parent=0 // loop_body
    %s20 = ssub.s32 %s15, 1
    %s21 = ssub.s32 %s15, 2
    %s28 = sadd.s32 1, %s23
    %p29 = scmp.ge.s32.totalorder %s28, 8
    %s30 = scalar_select %p29, 0, %s28
    %s31 = sadd.s32 1, %s22
    %s32 = scalar_select %p29, %s31, %s22
    %p33 = scmp.ge.s32.totalorder %s32, 2
    %s34 = scalar_select %p33, 0, %s32
    %s35 = ssub.s32 %s22, %s34
    %s36 = ssub.s32 %s23, %s30
    %s37 = sor.u32 %s35, %s36
    %p38 = scmp.eq.s32.totalorder %s37, 0
    %s40 = sadd.s32 %s39, 1
    %s41 = scalar_select %p38, %s39, %s40
    %p44 = pneg %p38
    %p45 = scmp.eq.s32.totalorder %s15, 15
    %p46 = por %p44, %p45
    %p47 = scmp.ne.s32.totalorder %s39, %s42
    %p48 = scmp.eq.s32.totalorder %s15, 0
    %p49 = por %p47, %p48
    %p50 = scmp.ne.s32.totalorder %s39, %s42
    %p51 = scmp.eq.s32.totalorder %s20, 15
    %p52 = por %p50, %p51
    %p53 = scmp.ne.s32.totalorder %s42, %s43
    %p54 = scmp.eq.s32.totalorder %s20, 0
    %p55 = por %p53, %p54
    %p56 = scmp.ne.s32.totalorder %s42, %s43
    %p57 = scmp.eq.s32.totalorder %s21, 15
    %p58 = por %p56, %p57
    %p60 = scmp.ne.s32.totalorder %s43, %s59
    %p61 = scmp.eq.s32.totalorder %s21, 0
    %p62 = por %p60, %p61
    %s63 = sadd.s32 %s23, 1
    %s64 = sadd.s32 %s30, 1
    %s65 = ssub.s32 %s22, %s34
    %s66 = ssub.s32 %s63, %s64
    %s67 = sor.u32 %s65, %s66
    %p68 = scmp.eq.s32.totalorder %s67, 0
    %s70 = sadd.s32 %s69, 1
    %s71 = scalar_select %p68, %s69, %s70
    %p74 = pneg %p68
    %p75 = scmp.eq.s32.totalorder %s15, 15
    %p76 = por %p74, %p75
    %p77 = scmp.ne.s32.totalorder %s69, %s72
    %p78 = scmp.eq.s32.totalorder %s15, 0
    %p79 = por %p77, %p78
    %p80 = scmp.ne.s32.totalorder %s69, %s72
    %p81 = scmp.eq.s32.totalorder %s20, 15
    %p82 = por %p80, %p81
    %p83 = scmp.ne.s32.totalorder %s72, %s73
    %p84 = scmp.eq.s32.totalorder %s20, 0
    %p85 = por %p83, %p84
    %p86 = scmp.ne.s32.totalorder %s72, %s73
    %p87 = scmp.eq.s32.totalorder %s21, 15
    %p88 = por %p86, %p87
    %p90 = scmp.ne.s32.totalorder %s73, %s89
    %p91 = scmp.eq.s32.totalorder %s21, 0
    %p92 = por %p90, %p91
    %s93 = sadd.s32 %s23, 2
    %s94 = sadd.s32 %s30, 2
    %s95 = ssub.s32 %s22, %s34
    %s96 = ssub.s32 %s93, %s94
    %s97 = sor.u32 %s95, %s96
    %p98 = scmp.eq.s32.totalorder %s97, 0
    %s100 = sadd.s32 %s99, 1
    %s101 = scalar_select %p98, %s99, %s100
    %p104 = pneg %p98
    %p105 = scmp.eq.s32.totalorder %s15, 15
    %p106 = por %p104, %p105
    %p107 = scmp.ne.s32.totalorder %s99, %s102
    %p108 = scmp.eq.s32.totalorder %s15, 0
    %p109 = por %p107, %p108
    %p110 = scmp.ne.s32.totalorder %s99, %s102
    %p111 = scmp.eq.s32.totalorder %s20, 15
    %p112 = por %p110, %p111
    %p113 = scmp.ne.s32.totalorder %s102, %s103
    %p114 = scmp.eq.s32.totalorder %s20, 0
    %p115 = por %p113, %p114
    %p116 = scmp.ne.s32.totalorder %s102, %s103
    %p117 = scmp.eq.s32.totalorder %s21, 15
    %p118 = por %p116, %p117
    %p120 = scmp.ne.s32.totalorder %s103, %s119
    %p121 = scmp.eq.s32.totalorder %s21, 0
    %p122 = por %p120, %p121
    %s124 = sadd.s32 %s123, 1
    %p127 = scmp.eq.s32.totalorder %s15, 15
    %p128 = scmp.ne.s32.totalorder %s123, %s125
    %p129 = scmp.eq.s32.totalorder %s15, 0
    %p130 = por %p128, %p129
    %p131 = scmp.ne.s32.totalorder %s123, %s125
    %p132 = scmp.eq.s32.totalorder %s20, 15
    %p133 = por %p131, %p132
    %p134 = scmp.ne.s32.totalorder %s125, %s126
    %p135 = scmp.eq.s32.totalorder %s20, 0
    %p136 = por %p134, %p135
    %p137 = scmp.ne.s32.totalorder %s125, %s126
    %p138 = scmp.eq.s32.totalorder %s21, 15
    %p139 = por %p137, %p138
    %p141 = scmp.ne.s32.totalorder %s126, %s140
    %p142 = scmp.eq.s32.totalorder %s21, 0
    %p143 = por %p141, %p142
    %s145 = sadd.s32 %s144, 1
    %p148 = scmp.eq.s32.totalorder %s15, 15
    %p149 = scmp.ne.s32.totalorder %s144, %s146
    %p150 = scmp.eq.s32.totalorder %s15, 0
    %p151 = por %p149, %p150
    %p152 = scmp.ne.s32.totalorder %s144, %s146
    %p153 = scmp.eq.s32.totalorder %s20, 15
    %p154 = por %p152, %p153
    %p155 = scmp.ne.s32.totalorder %s146, %s147
    %p156 = scmp.eq.s32.totalorder %s20, 0
    %p157 = por %p155, %p156
    %p158 = scmp.ne.s32.totalorder %s146, %s147
    %p159 = scmp.eq.s32.totalorder %s21, 15
    %p160 = por %p158, %p159
    %p162 = scmp.ne.s32.totalorder %s147, %s161
    %p163 = scmp.eq.s32.totalorder %s21, 0
    %p164 = por %p162, %p163
    %s166 = sadd.s32 %s165, 1
    %p169 = scmp.eq.s32.totalorder %s15, 15
    %p170 = scmp.ne.s32.totalorder %s165, %s167
    %p171 = scmp.eq.s32.totalorder %s15, 0
    %p172 = por %p170, %p171
    %p173 = scmp.ne.s32.totalorder %s165, %s167
    %p174 = scmp.eq.s32.totalorder %s20, 15
    %p175 = por %p173, %p174
    %p176 = scmp.ne.s32.totalorder %s167, %s168
    %p177 = scmp.eq.s32.totalorder %s20, 0
    %p178 = por %p176, %p177
    %p179 = scmp.ne.s32.totalorder %s167, %s168
    %p180 = scmp.eq.s32.totalorder %s21, 15
    %p181 = por %p179, %p180
    %p183 = scmp.ne.s32.totalorder %s168, %s182
    %p184 = scmp.eq.s32.totalorder %s21, 0
    %p185 = por %p183, %p184
    %s187 = sadd.s32 %s186, 1
    %p190 = scmp.eq.s32.totalorder %s15, 15
    %p191 = scmp.ne.s32.totalorder %s186, %s188
    %p192 = scmp.eq.s32.totalorder %s15, 0
    %p193 = por %p191, %p192
    %p194 = scmp.ne.s32.totalorder %s186, %s188
    %p195 = scmp.eq.s32.totalorder %s20, 15
    %p196 = por %p194, %p195
    %p197 = scmp.ne.s32.totalorder %s188, %s189
    %p198 = scmp.eq.s32.totalorder %s20, 0
    %p199 = por %p197, %p198
    %p200 = scmp.ne.s32.totalorder %s188, %s189
    %p201 = scmp.eq.s32.totalorder %s21, 15
    %p202 = por %p200, %p201
    %p204 = scmp.ne.s32.totalorder %s189, %s203
    %p205 = scmp.eq.s32.totalorder %s21, 0
    %p206 = por %p204, %p205
    %s208 = sadd.s32 %s207, 1
    %p211 = scmp.eq.s32.totalorder %s15, 15
    %p212 = scmp.ne.s32.totalorder %s207, %s209
    %p213 = scmp.eq.s32.totalorder %s15, 0
    %p214 = por %p212, %p213
    %p215 = scmp.ne.s32.totalorder %s207, %s209
    %p216 = scmp.eq.s32.totalorder %s20, 15
    %p217 = por %p215, %p216
    %p218 = scmp.ne.s32.totalorder %s209, %s210
    %p219 = scmp.eq.s32.totalorder %s20, 0
    %p220 = por %p218, %p219
    %p221 = scmp.ne.s32.totalorder %s209, %s210
    %p222 = scmp.eq.s32.totalorder %s21, 15
    %p223 = por %p221, %p222
    %p225 = scmp.ne.s32.totalorder %s210, %s224
    %p226 = scmp.eq.s32.totalorder %s21, 0
    %p227 = por %p225, %p226
    %s229 = sadd.s32 %s228, 1
    %p232 = scmp.eq.s32.totalorder %s15, 15
    %p233 = scmp.ne.s32.totalorder %s228, %s230
    %p234 = scmp.eq.s32.totalorder %s15, 0
    %p235 = por %p233, %p234
    %p236 = scmp.ne.s32.totalorder %s228, %s230
    %p237 = scmp.eq.s32.totalorder %s20, 15
    %p238 = por %p236, %p237
    %p239 = scmp.ne.s32.totalorder %s230, %s231
    %p240 = scmp.eq.s32.totalorder %s20, 0
    %p241 = por %p239, %p240
    %p242 = scmp.ne.s32.totalorder %s230, %s231
    %p243 = scmp.eq.s32.totalorder %s21, 15
    %p244 = por %p242, %p243
    %p246 = scmp.ne.s32.totalorder %s231, %s245
    %p247 = scmp.eq.s32.totalorder %s21, 0
    %p248 = por %p246, %p247
    %s249 = ssub.s32 %s22, %s34
    %s250 = ssub.s32 %s23, %s30
    %s251 = sor.u32 %s249, %s250
    %p252 = scmp.eq.s32.totalorder %s251, 0
    %s254 = sadd.s32 %s253, 1
    %s255 = scalar_select %p252, %s253, %s254
    %p258 = pneg %p252
    %p259 = scmp.eq.s32.totalorder %s15, 15
    %p260 = por %p258, %p259
    %p261 = scmp.ne.s32.totalorder %s253, %s256
    %p262 = scmp.eq.s32.totalorder %s15, 0
    %p263 = por %p261, %p262
    %p264 = scmp.ne.s32.totalorder %s253, %s256
    %p265 = scmp.eq.s32.totalorder %s20, 15
    %p266 = por %p264, %p265
    %p267 = scmp.ne.s32.totalorder %s256, %s257
    %p268 = scmp.eq.s32.totalorder %s20, 0
    %p269 = por %p267, %p268
    %p270 = scmp.ne.s32.totalorder %s256, %s257
    %p271 = scmp.eq.s32.totalorder %s21, 15
    %p272 = por %p270, %p271
    %p274 = scmp.ne.s32.totalorder %s257, %s273
    %p275 = scmp.eq.s32.totalorder %s21, 0
    %p276 = por %p274, %p275
    %p277 = scmp.le.s32.totalorder 1, %s15
    %p278 = scmp.lt.s32.totalorder %s15, 17
    %p279 = pnand %p277, %p278
    %p280 = pneg %p279
    // Predicated region
    $region9: #{_lambda_.6} parent=5 // pred_check
      _
    $region10: #{_lambda_.6} parent=5 // pred_check_branch
      %282 = sbr.rel (%p279) target = $region12
    $region11: #{_lambda_.6} parent=5 // pred_region
      %s283 = ssub.s32 %s15, 1
      // Predicated region
      $region13: #{_lambda_.6} parent=11 // pred_check
        %p284 = pneg %p136
      $region14: #{_lambda_.6} parent=11 // pred_check_branch
        %286 = sbr.rel (%p284) target = $region16
      $region15: #{_lambda_.6} parent=11 // pred_region
        _
      $region16: #{_lambda_.6} parent=11 // pred_fallthru
        _
      // Predicated region
      $region17: #{_lambda_.6} parent=11 // pred_check
        %p287 = pneg %p157
      $region18: #{_lambda_.6} parent=11 // pred_check_branch
        %289 = sbr.rel (%p287) target = $region20
      $region19: #{_lambda_.6} parent=11 // pred_region
        _
      $region20: #{_lambda_.6} parent=11 // pred_fallthru
        _
      // Predicated region
      $region21: #{_lambda_.6} parent=11 // pred_check
        %p290 = pneg %p178
      $region22: #{_lambda_.6} parent=11 // pred_check_branch
        %292 = sbr.rel (%p290) target = $region24
      $region23: #{_lambda_.6} parent=11 // pred_region
        _
      $region24: #{_lambda_.6} parent=11 // pred_fallthru
        _
      // Predicated region
      $region25: #{_lambda_.6} parent=11 // pred_check
        %p293 = pneg %p199
      $region26: #{_lambda_.6} parent=11 // pred_check_branch
        %295 = sbr.rel (%p293) target = $region28
      $region27: #{_lambda_.6} parent=11 // pred_region
        _
      $region28: #{_lambda_.6} parent=11 // pred_fallthru
        _
      // Predicated region
      $region29: #{_lambda_.6} parent=11 // pred_check
        %p296 = pneg %p220
      $region30: #{_lambda_.6} parent=11 // pred_check_branch
        %298 = sbr.rel (%p296) target = $region32
      $region31: #{_lambda_.6} parent=11 // pred_region
        _
      $region32: #{_lambda_.6} parent=11 // pred_fallthru
        _
      // Predicated region
      $region33: #{_lambda_.6} parent=11 // pred_check
        %p299 = pneg %p241
      $region34: #{_lambda_.6} parent=11 // pred_check_branch
        %301 = sbr.rel (%p299) target = $region36
      $region35: #{_lambda_.6} parent=11 // pred_region
        _
      $region36: #{_lambda_.6} parent=11 // pred_fallthru
        _
    $region12: #{_lambda_.6} parent=5 // pred_fallthru
      _
    %p302 = scmp.lt.s32.totalorder %s15, 16
    // Predicated region
    $region37: #{_lambda_.6} parent=5 // pred_check
      %p303 = pneg %p302
    $region38: #{_lambda_.6} parent=5 // pred_check_branch
      %305 = sbr.rel (%p303) target = $region40
    $region39: #{_lambda_.6} parent=5 // pred_region
      // Predicated region
      $region41: #{_lambda_.6} parent=39 // pred_check
        %p306 = pneg %p49
      $region42: #{_lambda_.6} parent=39 // pred_check_branch
        %308 = sbr.rel (%p306) target = $region44
      $region43: #{_lambda_.6} parent=39 // pred_region
        %p309 = scmp.lt.s32.totalorder %s22, 1
        %s310 = scalar_select %p309, %s22, 1
        %p311 = scmp.lt.s32.totalorder %s23, 9
        %s312 = scalar_select %p311, %s23, 9
        %s313 = smul.addr %s312, 2
        %s314 = smul.addr %s310, 20
        %s315 = sadd.s32 %s313, %s314
        %s316 = smul.addr %s315, 4
        %s317 = scalar_lea.vmem %s0, %s316
      $region44: #{_lambda_.6} parent=39 // pred_fallthru
        _
      // Predicated region
      $region45: #{_lambda_.6} parent=39 // pred_check
        %p318 = pneg %p79
      $region46: #{_lambda_.6} parent=39 // pred_check_branch
        %320 = sbr.rel (%p318) target = $region48
      $region47: #{_lambda_.6} parent=39 // pred_region
        %s321 = sadd.s32 %s23, 1
        %p322 = scmp.lt.s32.totalorder %s22, 1
        %s323 = scalar_select %p322, %s22, 1
        %p324 = scmp.lt.s32.totalorder %s321, 9
        %s325 = scalar_select %p324, %s321, 9
        %s326 = smul.addr %s325, 2
        %s327 = smul.addr %s323, 20
        %s328 = sadd.s32 %s326, %s327
        %s329 = smul.addr %s328, 4
        %s330 = scalar_lea.vmem %s1, %s329
        %s331 = sadd.s32 %s23, 1
      $region48: #{_lambda_.6} parent=39 // pred_fallthru
        _
      // Predicated region
      $region49: #{_lambda_.6} parent=39 // pred_check
        %p332 = pneg %p109
      $region50: #{_lambda_.6} parent=39 // pred_check_branch
        %334 = sbr.rel (%p332) target = $region52
      $region51: #{_lambda_.6} parent=39 // pred_region
        %s335 = sadd.s32 %s23, 2
        %p336 = scmp.lt.s32.totalorder %s22, 1
        %s337 = scalar_select %p336, %s22, 1
        %p338 = scmp.lt.s32.totalorder %s335, 9
        %s339 = scalar_select %p338, %s335, 9
        %s340 = smul.addr %s339, 2
        %s341 = smul.addr %s337, 20
        %s342 = sadd.s32 %s340, %s341
        %s343 = smul.addr %s342, 4
        %s344 = scalar_lea.vmem %s2, %s343
        %s345 = sadd.s32 %s23, 2
      $region52: #{_lambda_.6} parent=39 // pred_fallthru
        _
    $region40: #{_lambda_.6} parent=5 // pred_fallthru
      _
    %p346 = scmp.le.s32.totalorder 1, %s15
    %p347 = scmp.lt.s32.totalorder %s15, 17
    %p348 = pnand %p346, %p347
    %p349 = pneg %p348
    // Predicated region
    $region53: #{_lambda_.6} parent=5 // pred_check
      _
    $region54: #{_lambda_.6} parent=5 // pred_check_branch
      %351 = sbr.rel (%p348) target = $region56
    $region55: #{_lambda_.6} parent=5 // pred_region
      %s352 = ssub.s32 %s15, 1
      %p353 = scmp.lt.s32.totalorder %s24, 1
      %s354 = scalar_select %p353, %s24, 1
      %p355 = scmp.lt.s32.totalorder %s25, 9
      %s356 = scalar_select %p355, %s25, 9
      %s357 = smul.addr %s356, 2
      %s358 = smul.addr %s354, 20
      %s359 = sadd.s32 %s357, %s358
      %s360 = smul.addr %s359, 4
      %s361 = scalar_lea.vmem %s0, %s360
      %p362 = pneg %p55
      %p363 = pneg %p52
      %s364 = sadd.s32 %s25, 1
      %p365 = scmp.lt.s32.totalorder %s24, 1
      %s366 = scalar_select %p365, %s24, 1
      %p367 = scmp.lt.s32.totalorder %s364, 9
      %s368 = scalar_select %p367, %s364, 9
      %s369 = smul.addr %s368, 2
      %s370 = smul.addr %s366, 20
      %s371 = sadd.s32 %s369, %s370
      %s372 = smul.addr %s371, 4
      %s373 = scalar_lea.vmem %s1, %s372
      %p374 = pneg %p85
      %p375 = pneg %p82
      %s376 = sadd.s32 %s25, 2
      %p377 = scmp.lt.s32.totalorder %s24, 1
      %s378 = scalar_select %p377, %s24, 1
      %p379 = scmp.lt.s32.totalorder %s376, 9
      %s380 = scalar_select %p379, %s376, 9
      %s381 = smul.addr %s380, 2
      %s382 = smul.addr %s378, 20
      %s383 = sadd.s32 %s381, %s382
      %s384 = smul.addr %s383, 4
      %s385 = scalar_lea.vmem %s2, %s384
      %p386 = pneg %p115
      %p387 = pneg %p112
      %p388 = pneg %p136
      %p389 = pneg %p133
      %p390 = pneg %p157
      %p391 = pneg %p154
      %p392 = pneg %p178
      %p393 = pneg %p175
      %p394 = pneg %p199
      %p395 = pneg %p196
      %p396 = pneg %p220
      %p397 = pneg %p217
      %p398 = pneg %p241
      %p399 = pneg %p238
      %p400 = pneg %p269
      %p401 = pneg %p266
      %p402 = scmp.lt.s32.totalorder %s24, 1
      %s403 = scalar_select %p402, %s24, 1
      %p404 = scmp.lt.s32.totalorder %s25, 7
      %s405 = scalar_select %p404, %s25, 7
      %s406 = smul.addr %s403, 8
      %s407 = sadd.s32 %s405, %s406
      %s408 = smul.addr %s407, 4
      %s409 = scalar_lea.vmem %s9, %s408
      %p410 = scmp.lt.s32.totalorder %s24, 1
      %s411 = scalar_select %p410, %s24, 1
      %p412 = scmp.lt.s32.totalorder %s25, 9
      %s413 = scalar_select %p412, %s25, 9
      %s414 = smul.addr %s413, 2
      %s415 = smul.addr %s411, 20
      %s416 = sadd.s32 %s414, %s415
      %s417 = smul.addr %s416, 4
      %s418 = scalar_lea.vmem %s0, %s417
      %s419 = sadd.s32 %s25, 1
      %p420 = scmp.lt.s32.totalorder %s24, 1
      %s421 = scalar_select %p420, %s24, 1
      %p422 = scmp.lt.s32.totalorder %s419, 9
      %s423 = scalar_select %p422, %s419, 9
      %s424 = smul.addr %s423, 2
      %s425 = smul.addr %s421, 20
      %s426 = sadd.s32 %s424, %s425
      %s427 = smul.addr %s426, 4
      %s428 = scalar_lea.vmem %s1, %s427
      %s429 = sadd.s32 %s25, 1
      %s430 = sadd.s32 %s25, 2
      %p431 = scmp.lt.s32.totalorder %s24, 1
      %s432 = scalar_select %p431, %s24, 1
      %p433 = scmp.lt.s32.totalorder %s430, 9
      %s434 = scalar_select %p433, %s430, 9
      %s435 = smul.addr %s434, 2
      %s436 = smul.addr %s432, 20
      %s437 = sadd.s32 %s435, %s436
      %s438 = smul.addr %s437, 4
      %s439 = scalar_lea.vmem %s2, %s438
      %s440 = sadd.s32 %s25, 2
      %p441 = scmp.lt.s32.totalorder %s24, 1
      %s442 = scalar_select %p441, %s24, 1
      %p443 = scmp.lt.s32.totalorder %s25, 7
      %s444 = scalar_select %p443, %s25, 7
      %s445 = smul.addr %s442, 8
      %s446 = sadd.s32 %s444, %s445
      %s447 = smul.addr %s446, 4
      %s448 = scalar_lea.vmem %s9, %s447
      %v450 = vld [vmem:[%s3] sm:$0xf]
      %v451 = vld [vmem:[%s3 + $0x4] sm:$0xf]
      %v452 = vld [vmem:[%s3 + $0x8] sm:$0xf]
      %v453 = vld [vmem:[%s3 + $0xc] sm:$0xf]
      %v454 = vld [vmem:[%s4] sm:$0x1]
      %v455 = vld [vmem:[%s5] sm:$0xff]
      %v456 = vld [vmem:[%s5 + $0x8] sm:$0x1]
      %v457 = vld [vmem:[%s418] sm:$0xf]
      %v458 = vld [vmem:[%s418 + $0x4] sm:$0x1]
      %v460 = vlaneseq
      %v461 = vshrl.u32 %v460, 7
      %v462 = vsub.s32 0, %v461
      %v463 = vrot.slane %v454, %v462
      %v467 = vunpack.c.l.b16 %v457
      %v468 = vunpack.c.l.b16 %v458
      %v469 = vpack.c.b16 %v468, %v467
      %v474 = vunpack.c.l.b16 %v450
      %v475 = vunpack.c.l.b16 %v451
      %v476 = vunpack.c.l.b16 %v452
      %v477 = vunpack.c.l.b16 %v453
      %v478 = vpack.c.b16 %v475, %v474
      %v479 = vpack.c.b16 %v477, %v476
      %vm482 = vcmask 261120
      %v484 = vsel %vm482, %v469, 0
      %486 = vmatprep.subr.bf16.mxu0 0
      %487 = vmatpush1.bf16.msra.mxu0 %v478
      %488 = vmatprep.subr.bf16.mxu0 0
      %489 = vmatpush1.bf16.msra.mxu0 %v479
      %490 = vmatprep.subr.bf16.mxu0 0
      %491 = vmatpush1.bf16.msra.mxu0 0
      %492 = vmatprep.subr.bf16.mxu0 0
      %493 = vmatpush1.bf16.msra.mxu0 0
      %494 = vmatprep.subr.bf16.mxu0 0
      %495 = vmatpush1.bf16.msra.mxu0 0
      %496 = vmatprep.subr.bf16.mxu0 0
      %497 = vmatpush1.bf16.msra.mxu0 0
      %498 = vmatprep.subr.bf16.mxu0 0
      %499 = vmatpush1.bf16.msra.mxu0 0
      %500 = vmatprep.subr.bf16.mxu0 0
      %501 = vmatpush1.bf16.msra.mxu0 0
      %502 = vmatprep.subr.bf16.mxu0 0
      %503 = vmatpush1.bf16.msra.mxu0 0
      %504 = vmatprep.subr.bf16.mxu0 0
      %505 = vmatpush1.bf16.msra.mxu0 0
      %506 = vmatprep.subr.bf16.mxu0 0
      %507 = vmatpush1.bf16.msra.mxu0 0
      %508 = vmatprep.subr.bf16.mxu0 0
      %509 = vmatpush1.bf16.msra.mxu0 0
      %510 = vmatprep.subr.bf16.mxu0 0
      %511 = vmatpush1.bf16.msra.mxu0 0
      %512 = vmatprep.subr.bf16.mxu0 0
      %513 = vmatpush1.bf16.msra.mxu0 0
      %514 = vmatprep.subr.bf16.mxu0 0
      %515 = vmatpush1.bf16.msra.mxu0 0
      %516 = vmatprep.subr.bf16.mxu0 0
      %517 = vmatpush1.bf16.msra.mxu0 0
      %518 = vmatprep.mubr.bf16.mxu0 0
      %519 = vmatmul.mubr.bf16.gmra.mrb[0].mxu0 %v484
      %v520 = vpop.f32.mrb[0].mxu0
      %v521 = vadd.f32 %v463, %v520
      %v522 = vpop.f32.mrb[0].mxu0
      %v523 = vpop.f32.mrb[0].mxu0
      %v524 = vadd.f32 %v463, %v523
      %v525 = vpop.f32.mrb[0].mxu0
      %526 = vdwg.mxu0
      %v527 = vmax.f32 %v521, 0.0
      %v528 = vmax.f32 %v524, 0.0
      %v529 = vmin.f32 %v527, 6.0
      %v530 = vmin.f32 %v528, 6.0
      %p531 = scmp.ge.s32.totalorder %s25, 1
      %p532 = scmp.le.s32.totalorder %s25, 8
      %p533 = pnand %p531, %p532
      %p534 = pneg %p533
      %v535 = vlaneseq
      %v536 = vshrl.u32 %v535, 7
      %v537 = vadd.s32 %v536, 8
      %vm538 = vcmp.ge.s32.totalorder %v536, 1
      %vm539 = vcmp.ge.s32.totalorder %v537, 1
      %vm540 = vcmp.le.s32.totalorder %v536, 8
      %vm541 = vcmp.le.s32.totalorder %v537, 8
      %vm542 = vmand %vm538, %vm540
      %vm543 = vmand %vm539, %vm541
      %s544 = scalar_select %p534, 1, 0
      %v545 = vstv %s544
      %vm546 = vcmp.eq.s32.totalorder %v545, 1
      %vm547 = vmand %vm546, %vm542
      %vm548 = vmand %vm546, %vm543
      %v549 = vsel %vm547, 1, 0
      %v550 = vsel %vm548, 1, 0
      %vm551 = vcmp.eq.s32.totalorder %v549, 1
      %vm552 = vcmp.eq.s32.totalorder %v550, 1
      %v553 = vsel %vm551, %v529, 0.0
      %v554 = vsel %vm552, %v530, 0.0
      %v555 = vld [vmem:[%s428] sm:$0xf]
      %v556 = vld [vmem:[%s428 + $0x4] sm:$0x1]
      %v559 = vunpack.c.l.b16 %v555
      %v560 = vunpack.c.l.b16 %v556
      %v561 = vpack.c.b16 %v560, %v559
      %v563 = vsel %vm482, %v561, 0
      %565 = vmatprep.subr.bf16.mxu0 0
      %566 = vmatpush1.bf16.msra.mxu0 %v478
      %567 = vmatprep.subr.bf16.mxu0 0
      %568 = vmatpush1.bf16.msra.mxu0 %v479
      %569 = vmatprep.subr.bf16.mxu0 0
      %570 = vmatpush1.bf16.msra.mxu0 0
      %571 = vmatprep.subr.bf16.mxu0 0
      %572 = vmatpush1.bf16.msra.mxu0 0
      %573 = vmatprep.subr.bf16.mxu0 0
      %574 = vmatpush1.bf16.msra.mxu0 0
      %575 = vmatprep.subr.bf16.mxu0 0
      %576 = vmatpush1.bf16.msra.mxu0 0
      %577 = vmatprep.subr.bf16.mxu0 0
      %578 = vmatpush1.bf16.msra.mxu0 0
      %579 = vmatprep.subr.bf16.mxu0 0
      %580 = vmatpush1.bf16.msra.mxu0 0
      %581 = vmatprep.subr.bf16.mxu0 0
      %582 = vmatpush1.bf16.msra.mxu0 0
      %583 = vmatprep.subr.bf16.mxu0 0
      %584 = vmatpush1.bf16.msra.mxu0 0
      %585 = vmatprep.subr.bf16.mxu0 0
      %586 = vmatpush1.bf16.msra.mxu0 0
      %587 = vmatprep.subr.bf16.mxu0 0
      %588 = vmatpush1.bf16.msra.mxu0 0
      %589 = vmatprep.subr.bf16.mxu0 0
      %590 = vmatpush1.bf16.msra.mxu0 0
      %591 = vmatprep.subr.bf16.mxu0 0
      %592 = vmatpush1.bf16.msra.mxu0 0
      %593 = vmatprep.subr.bf16.mxu0 0
      %594 = vmatpush1.bf16.msra.mxu0 0
      %595 = vmatprep.subr.bf16.mxu0 0
      %596 = vmatpush1.bf16.msra.mxu0 0
      %597 = vmatprep.mubr.bf16.mxu0 0
      %598 = vmatmul.mubr.bf16.gmra.mrb[0].mxu0 %v563
      %v599 = vpop.f32.mrb[0].mxu0
      %v600 = vadd.f32 %v463, %v599
      %v601 = vpop.f32.mrb[0].mxu0
      %v602 = vpop.f32.mrb[0].mxu0
      %v603 = vadd.f32 %v463, %v602
      %v604 = vpop.f32.mrb[0].mxu0
      %605 = vdwg.mxu0
      %v606 = vmax.f32 %v600, 0.0
      %v607 = vmax.f32 %v603, 0.0
      %v608 = vmin.f32 %v606, 6.0
      %v609 = vmin.f32 %v607, 6.0
      %s610 = sadd.s32 %s25, 1
      %p611 = scmp.ge.s32.totalorder %s610, 1
      %p612 = scmp.le.s32.totalorder %s610, 8
      %p613 = pnand %p611, %p612
      %p614 = pneg %p613
      %s615 = scalar_select %p614, 1, 0
      %v616 = vstv %s615
      %vm617 = vcmp.eq.s32.totalorder %v616, 1
      %vm618 = vmand %vm617, %vm542
      %vm619 = vmand %vm617, %vm543
      %v620 = vsel %vm618, 1, 0
      %v621 = vsel %vm619, 1, 0
      %vm622 = vcmp.eq.s32.totalorder %v620, 1
      %vm623 = vcmp.eq.s32.totalorder %v621, 1
      %v624 = vsel %vm622, %v608, 0.0
      %v625 = vsel %vm623, %v609, 0.0
      %v626 = vld [vmem:[%s439] sm:$0xf]
      %v627 = vld [vmem:[%s439 + $0x4] sm:$0x1]
      %v630 = vunpack.c.l.b16 %v626
      %v631 = vunpack.c.l.b16 %v627
      %v632 = vpack.c.b16 %v631, %v630
      %v634 = vsel %vm482, %v632, 0
      %636 = vmatprep.subr.bf16.mxu0 0
      %637 = vmatpush1.bf16.msra.mxu0 %v478
      %638 = vmatprep.subr.bf16.mxu0 0
      %639 = vmatpush1.bf16.msra.mxu0 %v479
      %640 = vmatprep.subr.bf16.mxu0 0
      %641 = vmatpush1.bf16.msra.mxu0 0
      %642 = vmatprep.subr.bf16.mxu0 0
      %643 = vmatpush1.bf16.msra.mxu0 0
      %644 = vmatprep.subr.bf16.mxu0 0
      %645 = vmatpush1.bf16.msra.mxu0 0
      %646 = vmatprep.subr.bf16.mxu0 0
      %647 = vmatpush1.bf16.msra.mxu0 0
      %648 = vmatprep.subr.bf16.mxu0 0
      %649 = vmatpush1.bf16.msra.mxu0 0
      %650 = vmatprep.subr.bf16.mxu0 0
      %651 = vmatpush1.bf16.msra.mxu0 0
      %652 = vmatprep.subr.bf16.mxu0 0
      %653 = vmatpush1.bf16.msra.mxu0 0
      %654 = vmatprep.subr.bf16.mxu0 0
      %655 = vmatpush1.bf16.msra.mxu0 0
      %656 = vmatprep.subr.bf16.mxu0 0
      %657 = vmatpush1.bf16.msra.mxu0 0
      %658 = vmatprep.subr.bf16.mxu0 0
      %659 = vmatpush1.bf16.msra.mxu0 0
      %660 = vmatprep.subr.bf16.mxu0 0
      %661 = vmatpush1.bf16.msra.mxu0 0
      %662 = vmatprep.subr.bf16.mxu0 0
      %663 = vmatpush1.bf16.msra.mxu0 0
      %664 = vmatprep.subr.bf16.mxu0 0
      %665 = vmatpush1.bf16.msra.mxu0 0
      %666 = vmatprep.subr.bf16.mxu0 0
      %667 = vmatpush1.bf16.msra.mxu0 0
      %668 = vmatprep.mubr.bf16.mxu0 0
      %669 = vmatmul.mubr.bf16.gmra.mrb[0].mxu0 %v634
      %v670 = vpop.f32.mrb[0].mxu0
      %v671 = vadd.f32 %v463, %v670
      %v672 = vpop.f32.mrb[0].mxu0
      %v673 = vpop.f32.mrb[0].mxu0
      %v674 = vadd.f32 %v463, %v673
      %v675 = vpop.f32.mrb[0].mxu0
      %676 = vdwg.mxu0
      %v677 = vmax.f32 %v671, 0.0
      %v678 = vmax.f32 %v674, 0.0
      %v679 = vmin.f32 %v677, 6.0
      %v680 = vmin.f32 %v678, 6.0
      %s681 = sadd.s32 %s25, 2
      %p682 = scmp.ge.s32.totalorder %s681, 1
      %p683 = scmp.le.s32.totalorder %s681, 8
      %p684 = pnand %p682, %p683
      %p685 = pneg %p684
      %s686 = scalar_select %p685, 1, 0
      %v687 = vstv %s686
      %vm688 = vcmp.eq.s32.totalorder %v687, 1
      %vm689 = vmand %vm688, %vm542
      %vm690 = vmand %vm688, %vm543
      %v691 = vsel %vm689, 1, 0
      %v692 = vsel %vm690, 1, 0
      %vm693 = vcmp.eq.s32.totalorder %v691, 1
      %vm694 = vcmp.eq.s32.totalorder %v692, 1
      %v695 = vsel %vm693, %v679, 0.0
      %v696 = vsel %vm694, %v680, 0.0
      %v697 = vlaneseq
      %v698 = vshrl.u32 %v697, 7
      %v699 = vsub.s32 0, %v698
      %v700 = vrot.slane %v455, %v699
      %v701 = vmul.f32 %v553, %v700
      %v702 = vadd.f32 %v701, 0.0
      %v703 = vlaneseq
      %v704 = vshrl.u32 %v703, 7
      %v705 = vsub.s32 1, %v704
      %v706 = vrot.slane %v455, %v705
      %v707 = vmul.f32 %v553, %v706
      %v708 = vmul.f32 %v554, %v706
      %vm711 = vcmask 1046528
      %v712 = vrot.slane %v707, 1
      %v713 = vrot.slane %v708, 1
      %v714 = vsel %vm711, %v712, %v713
      %v716 = vadd.f32 %v702, %v714
      %v717 = vlaneseq
      %v718 = vshrl.u32 %v717, 7
      %v719 = vsub.s32 2, %v718
      %v720 = vrot.slane %v455, %v719
      %v721 = vmul.f32 %v553, %v720
      %v722 = vmul.f32 %v554, %v720
      %vm725 = vcmask 1045504
      %v726 = vrot.slane %v721, 2
      %v727 = vrot.slane %v722, 2
      %v728 = vsel %vm725, %v726, %v727
      %v730 = vadd.f32 %v716, %v728
      %v731 = vlaneseq
      %v732 = vshrl.u32 %v731, 7
      %v733 = vsub.s32 3, %v732
      %v734 = vrot.slane %v455, %v733
      %v735 = vmul.f32 %v624, %v734
      %v736 = vadd.f32 %v730, %v735
      %v737 = vlaneseq
      %v738 = vshrl.u32 %v737, 7
      %v739 = vsub.s32 4, %v738
      %v740 = vrot.slane %v455, %v739
      %v741 = vmul.f32 %v624, %v740
      %v742 = vmul.f32 %v625, %v740
      %v745 = vrot.slane %v741, 1
      %v746 = vrot.slane %v742, 1
      %v747 = vsel %vm711, %v745, %v746
      %v749 = vadd.f32 %v736, %v747
      %v750 = vlaneseq
      %v751 = vshrl.u32 %v750, 7
      %v752 = vsub.s32 5, %v751
      %v753 = vrot.slane %v455, %v752
      %v754 = vmul.f32 %v624, %v753
      %v755 = vmul.f32 %v625, %v753
      %v758 = vrot.slane %v754, 2
      %v759 = vrot.slane %v755, 2
      %v760 = vsel %vm725, %v758, %v759
      %v762 = vadd.f32 %v749, %v760
      %v763 = vlaneseq
      %v764 = vshrl.u32 %v763, 7
      %v765 = vsub.s32 6, %v764
      %v766 = vrot.slane %v455, %v765
      %v767 = vmul.f32 %v695, %v766
      %v768 = vadd.f32 %v762, %v767
      %v769 = vlaneseq
      %v770 = vshrl.u32 %v769, 7
      %v771 = vsub.s32 7, %v770
      %v772 = vrot.slane %v455, %v771
      %v773 = vmul.f32 %v695, %v772
      %v774 = vmul.f32 %v696, %v772
      %v777 = vrot.slane %v773, 1
      %v778 = vrot.slane %v774, 1
      %v779 = vsel %vm711, %v777, %v778
      %v781 = vadd.f32 %v768, %v779
      %v782 = vlaneseq
      %v783 = vshrl.u32 %v782, 7
      %v784 = vsub.s32 0, %v783
      %v785 = vrot.slane %v456, %v784
      %v786 = vmul.f32 %v695, %v785
      %v787 = vmul.f32 %v696, %v785
      %v790 = vrot.slane %v786, 2
      %v791 = vrot.slane %v787, 2
      %v792 = vsel %vm725, %v790, %v791
      %v794 = vadd.f32 %v781, %v792
      %v795 = vld [vmem:[%s6] sm:$0x1]
      %v797 = vlaneseq
      %v798 = vshrl.u32 %v797, 7
      %v799 = vsub.s32 0, %v798
      %v800 = vrot.slane %v795, %v799
      %v802 = vadd.f32 %v794, %v800
      %v803 = vmax.f32 %v802, 0.0
      %v804 = vmin.f32 %v803, 6.0
      %v805 = vpack.c.bf16 %v804, %v804
      %v806 = vld [vmem:[%s7] sm:$0xf]
      %v807 = vld [vmem:[%s7 + $0x4] sm:$0xf]
      %v808 = vld [vmem:[%s7 + $0x8] sm:$0xf]
      %v809 = vld [vmem:[%s7 + $0xc] sm:$0xf]
      %v810 = vld [vmem:[%s8] sm:$0x1]
      %v812 = vlaneseq
      %v813 = vshrl.u32 %v812, 7
      %v814 = vsub.s32 0, %v813
      %v815 = vrot.slane %v810, %v814
      %v821 = vunpack.c.l.b16 %v806
      %v822 = vunpack.c.l.b16 %v807
      %v823 = vunpack.c.l.b16 %v808
      %v824 = vunpack.c.l.b16 %v809
      %v825 = vpack.c.b16 %v822, %v821
      %v826 = vpack.c.b16 %v824, %v823
      %v830 = vsel %vm482, %v805, 0
      %832 = vmatprep.subr.bf16.mxu0 0
      %833 = vmatpush1.bf16.msra.mxu0 %v825
      %834 = vmatprep.subr.bf16.mxu0 0
      %835 = vmatpush1.bf16.msra.mxu0 %v826
      %836 = vmatprep.subr.bf16.mxu0 0
      %837 = vmatpush1.bf16.msra.mxu0 0
      %838 = vmatprep.subr.bf16.mxu0 0
      %839 = vmatpush1.bf16.msra.mxu0 0
      %840 = vmatprep.subr.bf16.mxu0 0
      %841 = vmatpush1.bf16.msra.mxu0 0
      %842 = vmatprep.subr.bf16.mxu0 0
      %843 = vmatpush1.bf16.msra.mxu0 0
      %844 = vmatprep.subr.bf16.mxu0 0
      %845 = vmatpush1.bf16.msra.mxu0 0
      %846 = vmatprep.subr.bf16.mxu0 0
      %847 = vmatpush1.bf16.msra.mxu0 0
      %848 = vmatprep.subr.bf16.mxu0 0
      %849 = vmatpush1.bf16.msra.mxu0 0
      %850 = vmatprep.subr.bf16.mxu0 0
      %851 = vmatpush1.bf16.msra.mxu0 0
      %852 = vmatprep.subr.bf16.mxu0 0
      %853 = vmatpush1.bf16.msra.mxu0 0
      %854 = vmatprep.subr.bf16.mxu0 0
      %855 = vmatpush1.bf16.msra.mxu0 0
      %856 = vmatprep.subr.bf16.mxu0 0
      %857 = vmatpush1.bf16.msra.mxu0 0
      %858 = vmatprep.subr.bf16.mxu0 0
      %859 = vmatpush1.bf16.msra.mxu0 0
      %860 = vmatprep.subr.bf16.mxu0 0
      %861 = vmatpush1.bf16.msra.mxu0 0
      %862 = vmatprep.subr.bf16.mxu0 0
      %863 = vmatpush1.bf16.msra.mxu0 0
      %864 = vmatprep.mubr.bf16.mxu0 0
      %865 = vmatmul.mubr.bf16.gmra.mrb[0].mxu0 %v830
      %v866 = vpop.f32.mrb[0].mxu0
      %v867 = vadd.f32 %v815, %v866
      %v868 = vpop.f32.mrb[0].mxu0
      %v869 = vpop.f32.mrb[0].mxu0
      %v870 = vpop.f32.mrb[0].mxu0
      %871 = vdwg.mxu0
      %v872 = vpack.c.bf16 %v867, %v867
      %vm873 = vcmask 125952
      %874 = vst.msk [vmem:[%s448] sm:$0xf] %vm873, %v872
      %p875 = scmp.lt.s32.totalorder %s24, 1
      %s876 = scalar_select %p875, %s24, 1
      %p877 = scmp.lt.s32.totalorder %s25, 7
      %s878 = scalar_select %p877, %s25, 7
      %s879 = smul.addr %s876, 8
      %s880 = sadd.s32 %s878, %s879
      %s881 = smul.addr %s880, 4
      %s882 = scalar_lea.vmem %s9, %s881
      // Predicated region
      $region57: #{_lambda_.6} parent=55 // pred_check
        %p883 = pneg %p266
      $region58: #{_lambda_.6} parent=55 // pred_check_branch
        %885 = sbr.rel (%p883) target = $region60
      $region59: #{_lambda_.6} parent=55 // pred_region
        _
      $region60: #{_lambda_.6} parent=55 // pred_fallthru
        _
    $region56: #{_lambda_.6} parent=5 // pred_fallthru
      _
    %p886 = scmp.le.s32.totalorder 2, %s15
    // Predicated region
    $region61: #{_lambda_.6} parent=5 // pred_check
      %p887 = pneg %p886
    $region62: #{_lambda_.6} parent=5 // pred_check_branch
      %889 = sbr.rel (%p887) target = $region64
    $region63: #{_lambda_.6} parent=5 // pred_region
      %s890 = ssub.s32 %s15, 2
      // Predicated region
      $region65: #{_lambda_.6} parent=63 // pred_check
        %p891 = pneg %p272
      $region66: #{_lambda_.6} parent=63 // pred_check_branch
        %893 = sbr.rel (%p891) target = $region68
      $region67: #{_lambda_.6} parent=63 // pred_region
        %p894 = scmp.lt.s32.totalorder %s26, 1
        %s895 = scalar_select %p894, %s26, 1
        %p896 = scmp.lt.s32.totalorder %s27, 7
        %s897 = scalar_select %p896, %s27, 7
        %s898 = smul.addr %s895, 8
        %s899 = sadd.s32 %s897, %s898
        %s900 = smul.addr %s899, 4
        %s901 = scalar_lea.vmem %s9, %s900
      $region68: #{_lambda_.6} parent=63 // pred_fallthru
        _
    $region64: #{_lambda_.6} parent=5 // pred_fallthru
      _
  $region6: #{_lambda_.6} parent=0 // loop_footer
    %s19 = sadd.s32 1, %s15
  $region7: #{_lambda_.6} parent=0 // loop_footer_branch
    %14 = sbr.rel target = $region3
  $region8: #{_lambda_.6} parent=0 // loop_exit
    _

// kernel: _lambda_.8
$region0: #{_lambda_.8}
  #allocation0 [shape = 'u32[]', space=smem, size = 0x4, offset = 0x4, fixed_abs, tag = 'smem constant byte address 0x4 - core index']
  #allocation1 [shape = 'u32[144,128]{1,0:T(1,128)}', space=vmem, size = 0x12000, scoped, tag = 'internal scratch']
  %s0 = inlined_call_operand.vmem [shape: bf16[2,6,6,24], index: 0, kind: input, shape index: {}, may-alias: {0,1,2}]
  %s1 = inlined_call_operand.vmem [shape: bf16[2,6,6,24], index: 1, kind: input, shape index: {}, may-alias: {0,1,2}]
  %s2 = inlined_call_operand.vmem [shape: bf16[2,6,6,24], index: 2, kind: input, shape index: {}, may-alias: {0,1,2}]
  %s3 = inlined_call_operand.vmem [shape: bf16[24,144], index: 3, kind: input, shape index: {}]
  %s4 = inlined_call_operand.vmem [shape: f32[1,144], index: 4, kind: input, shape index: {}]
  %s5 = inlined_call_operand.vmem [shape: f32[9,144], index: 5, kind: input, shape index: {}]
  %s6 = inlined_call_operand.vmem [shape: f32[1,144], index: 6, kind: input, shape index: {}]
  %s7 = inlined_call_operand.vmem [shape: bf16[144,24], index: 7, kind: input, shape index: {}]
  %s8 = inlined_call_operand.vmem [shape: f32[1,24], index: 8, kind: input, shape index: {}]
  %s9 = inlined_call_operand.vmem [shape: bf16[2,4,4,24], index: 9, kind: input, shape index: {}]
  %s10 = inlined_call_operand.vmem [shape: bf16[2,4,4,24], index: 10, kind: output, shape index: {}]
  %s11 = sld [smem:[#allocation0]]
  $region73: #{_lambda_.8} parent=0
    _
  %s13 = ssub.s32 1, %s11
  %s14 = scalar_select 0, %s13, %s11
  loop: start=0, step=1, limit=10
  $region2: #{_lambda_.8} parent=0 // loop_pre_header
    _
  $region3: #{_lambda_.8} parent=0 // loop_header
    %s16 = sphi 0, %s20
    %p17 = scmp.ge.s32.totalorder %s16, 10
    %s23 = sphi 0, %s35
    %s24 = sphi 0, %s31
    %s25 = sphi 0, %s23
    %s26 = sphi 0, %s24
    %s27 = sphi 0, %s25
    %s28 = sphi 0, %s26
    %s40 = sphi 0, %s42
    %s43 = sphi 0, %s40
    %s44 = sphi 0, %s43
    %s60 = sphi 0, %s44
    %s70 = sphi 0, %s72
    %s73 = sphi 0, %s70
    %s74 = sphi 0, %s73
    %s90 = sphi 0, %s74
    %s100 = sphi 0, %s102
    %s103 = sphi 0, %s100
    %s104 = sphi 0, %s103
    %s120 = sphi 0, %s104
    %s124 = sphi 0, %s124
    %s126 = sphi 0, %s124
    %s127 = sphi 0, %s126
    %s141 = sphi 0, %s127
    %s145 = sphi 0, %s145
    %s147 = sphi 0, %s145
    %s148 = sphi 0, %s147
    %s162 = sphi 0, %s148
    %s166 = sphi 0, %s166
    %s168 = sphi 0, %s166
    %s169 = sphi 0, %s168
    %s183 = sphi 0, %s169
    %s187 = sphi 0, %s187
    %s189 = sphi 0, %s187
    %s190 = sphi 0, %s189
    %s204 = sphi 0, %s190
    %s208 = sphi 0, %s208
    %s210 = sphi 0, %s208
    %s211 = sphi 0, %s210
    %s225 = sphi 0, %s211
    %s229 = sphi 0, %s229
    %s231 = sphi 0, %s229
    %s232 = sphi 0, %s231
    %s246 = sphi 0, %s232
    %s254 = sphi 0, %s256
    %s257 = sphi 0, %s254
    %s258 = sphi 0, %s257
    %s274 = sphi 0, %s258
    %s282 = sphi 0, %s284
    %s285 = sphi 0, %s282
    %s286 = sphi 0, %s285
    %s302 = sphi 0, %s286
  $region4: #{_lambda_.8} parent=0 // loop_header_branch
    %19 = sbr.rel (%p17) target = $region8
  $region5: #{_lambda_.8} parent=0 // loop_body
    %s21 = ssub.s32 %s16, 1
    %s22 = ssub.s32 %s16, 2
    %s29 = sadd.s32 1, %s24
    %p30 = scmp.ge.s32.totalorder %s29, 4
    %s31 = scalar_select %p30, 0, %s29
    %s32 = sadd.s32 1, %s23
    %s33 = scalar_select %p30, %s32, %s23
    %p34 = scmp.ge.s32.totalorder %s33, 2
    %s35 = scalar_select %p34, 0, %s33
    %s36 = ssub.s32 %s23, %s35
    %s37 = ssub.s32 %s24, %s31
    %s38 = sor.u32 %s36, %s37
    %p39 = scmp.eq.s32.totalorder %s38, 0
    %s41 = sadd.s32 %s40, 1
    %s42 = scalar_select %p39, %s40, %s41
    %p45 = pneg %p39
    %p46 = scmp.eq.s32.totalorder %s16, 7
    %p47 = por %p45, %p46
    %p48 = scmp.ne.s32.totalorder %s40, %s43
    %p49 = scmp.eq.s32.totalorder %s16, 0
    %p50 = por %p48, %p49
    %p51 = scmp.ne.s32.totalorder %s40, %s43
    %p52 = scmp.eq.s32.totalorder %s21, 7
    %p53 = por %p51, %p52
    %p54 = scmp.ne.s32.totalorder %s43, %s44
    %p55 = scmp.eq.s32.totalorder %s21, 0
    %p56 = por %p54, %p55
    %p57 = scmp.ne.s32.totalorder %s43, %s44
    %p58 = scmp.eq.s32.totalorder %s22, 7
    %p59 = por %p57, %p58
    %p61 = scmp.ne.s32.totalorder %s44, %s60
    %p62 = scmp.eq.s32.totalorder %s22, 0
    %p63 = por %p61, %p62
    %s64 = sadd.s32 %s24, 1
    %s65 = sadd.s32 %s31, 1
    %s66 = ssub.s32 %s23, %s35
    %s67 = ssub.s32 %s64, %s65
    %s68 = sor.u32 %s66, %s67
    %p69 = scmp.eq.s32.totalorder %s68, 0
    %s71 = sadd.s32 %s70, 1
    %s72 = scalar_select %p69, %s70, %s71
    %p75 = pneg %p69
    %p76 = scmp.eq.s32.totalorder %s16, 7
    %p77 = por %p75, %p76
    %p78 = scmp.ne.s32.totalorder %s70, %s73
    %p79 = scmp.eq.s32.totalorder %s16, 0
    %p80 = por %p78, %p79
    %p81 = scmp.ne.s32.totalorder %s70, %s73
    %p82 = scmp.eq.s32.totalorder %s21, 7
    %p83 = por %p81, %p82
    %p84 = scmp.ne.s32.totalorder %s73, %s74
    %p85 = scmp.eq.s32.totalorder %s21, 0
    %p86 = por %p84, %p85
    %p87 = scmp.ne.s32.totalorder %s73, %s74
    %p88 = scmp.eq.s32.totalorder %s22, 7
    %p89 = por %p87, %p88
    %p91 = scmp.ne.s32.totalorder %s74, %s90
    %p92 = scmp.eq.s32.totalorder %s22, 0
    %p93 = por %p91, %p92
    %s94 = sadd.s32 %s24, 2
    %s95 = sadd.s32 %s31, 2
    %s96 = ssub.s32 %s23, %s35
    %s97 = ssub.s32 %s94, %s95
    %s98 = sor.u32 %s96, %s97
    %p99 = scmp.eq.s32.totalorder %s98, 0
    %s101 = sadd.s32 %s100, 1
    %s102 = scalar_select %p99, %s100, %s101
    %p105 = pneg %p99
    %p106 = scmp.eq.s32.totalorder %s16, 7
    %p107 = por %p105, %p106
    %p108 = scmp.ne.s32.totalorder %s100, %s103
    %p109 = scmp.eq.s32.totalorder %s16, 0
    %p110 = por %p108, %p109
    %p111 = scmp.ne.s32.totalorder %s100, %s103
    %p112 = scmp.eq.s32.totalorder %s21, 7
    %p113 = por %p111, %p112
    %p114 = scmp.ne.s32.totalorder %s103, %s104
    %p115 = scmp.eq.s32.totalorder %s21, 0
    %p116 = por %p114, %p115
    %p117 = scmp.ne.s32.totalorder %s103, %s104
    %p118 = scmp.eq.s32.totalorder %s22, 7
    %p119 = por %p117, %p118
    %p121 = scmp.ne.s32.totalorder %s104, %s120
    %p122 = scmp.eq.s32.totalorder %s22, 0
    %p123 = por %p121, %p122
    %s125 = sadd.s32 %s124, 1
    %p128 = scmp.eq.s32.totalorder %s16, 7
    %p129 = scmp.ne.s32.totalorder %s124, %s126
    %p130 = scmp.eq.s32.totalorder %s16, 0
    %p131 = por %p129, %p130
    %p132 = scmp.ne.s32.totalorder %s124, %s126
    %p133 = scmp.eq.s32.totalorder %s21, 7
    %p134 = por %p132, %p133
    %p135 = scmp.ne.s32.totalorder %s126, %s127
    %p136 = scmp.eq.s32.totalorder %s21, 0
    %p137 = por %p135, %p136
    %p138 = scmp.ne.s32.totalorder %s126, %s127
    %p139 = scmp.eq.s32.totalorder %s22, 7
    %p140 = por %p138, %p139
    %p142 = scmp.ne.s32.totalorder %s127, %s141
    %p143 = scmp.eq.s32.totalorder %s22, 0
    %p144 = por %p142, %p143
    %s146 = sadd.s32 %s145, 1
    %p149 = scmp.eq.s32.totalorder %s16, 7
    %p150 = scmp.ne.s32.totalorder %s145, %s147
    %p151 = scmp.eq.s32.totalorder %s16, 0
    %p152 = por %p150, %p151
    %p153 = scmp.ne.s32.totalorder %s145, %s147
    %p154 = scmp.eq.s32.totalorder %s21, 7
    %p155 = por %p153, %p154
    %p156 = scmp.ne.s32.totalorder %s147, %s148
    %p157 = scmp.eq.s32.totalorder %s21, 0
    %p158 = por %p156, %p157
    %p159 = scmp.ne.s32.totalorder %s147, %s148
    %p160 = scmp.eq.s32.totalorder %s22, 7
    %p161 = por %p159, %p160
    %p163 = scmp.ne.s32.totalorder %s148, %s162
    %p164 = scmp.eq.s32.totalorder %s22, 0
    %p165 = por %p163, %p164
    %s167 = sadd.s32 %s166, 1
    %p170 = scmp.eq.s32.totalorder %s16, 7
    %p171 = scmp.ne.s32.totalorder %s166, %s168
    %p172 = scmp.eq.s32.totalorder %s16, 0
    %p173 = por %p171, %p172
    %p174 = scmp.ne.s32.totalorder %s166, %s168
    %p175 = scmp.eq.s32.totalorder %s21, 7
    %p176 = por %p174, %p175
    %p177 = scmp.ne.s32.totalorder %s168, %s169
    %p178 = scmp.eq.s32.totalorder %s21, 0
    %p179 = por %p177, %p178
    %p180 = scmp.ne.s32.totalorder %s168, %s169
    %p181 = scmp.eq.s32.totalorder %s22, 7
    %p182 = por %p180, %p181
    %p184 = scmp.ne.s32.totalorder %s169, %s183
    %p185 = scmp.eq.s32.totalorder %s22, 0
    %p186 = por %p184, %p185
    %s188 = sadd.s32 %s187, 1
    %p191 = scmp.eq.s32.totalorder %s16, 7
    %p192 = scmp.ne.s32.totalorder %s187, %s189
    %p193 = scmp.eq.s32.totalorder %s16, 0
    %p194 = por %p192, %p193
    %p195 = scmp.ne.s32.totalorder %s187, %s189
    %p196 = scmp.eq.s32.totalorder %s21, 7
    %p197 = por %p195, %p196
    %p198 = scmp.ne.s32.totalorder %s189, %s190
    %p199 = scmp.eq.s32.totalorder %s21, 0
    %p200 = por %p198, %p199
    %p201 = scmp.ne.s32.totalorder %s189, %s190
    %p202 = scmp.eq.s32.totalorder %s22, 7
    %p203 = por %p201, %p202
    %p205 = scmp.ne.s32.totalorder %s190, %s204
    %p206 = scmp.eq.s32.totalorder %s22, 0
    %p207 = por %p205, %p206
    %s209 = sadd.s32 %s208, 1
    %p212 = scmp.eq.s32.totalorder %s16, 7
    %p213 = scmp.ne.s32.totalorder %s208, %s210
    %p214 = scmp.eq.s32.totalorder %s16, 0
    %p215 = por %p213, %p214
    %p216 = scmp.ne.s32.totalorder %s208, %s210
    %p217 = scmp.eq.s32.totalorder %s21, 7
    %p218 = por %p216, %p217
    %p219 = scmp.ne.s32.totalorder %s210, %s211
    %p220 = scmp.eq.s32.totalorder %s21, 0
    %p221 = por %p219, %p220
    %p222 = scmp.ne.s32.totalorder %s210, %s211
    %p223 = scmp.eq.s32.totalorder %s22, 7
    %p224 = por %p222, %p223
    %p226 = scmp.ne.s32.totalorder %s211, %s225
    %p227 = scmp.eq.s32.totalorder %s22, 0
    %p228 = por %p226, %p227
    %s230 = sadd.s32 %s229, 1
    %p233 = scmp.eq.s32.totalorder %s16, 7
    %p234 = scmp.ne.s32.totalorder %s229, %s231
    %p235 = scmp.eq.s32.totalorder %s16, 0
    %p236 = por %p234, %p235
    %p237 = scmp.ne.s32.totalorder %s229, %s231
    %p238 = scmp.eq.s32.totalorder %s21, 7
    %p239 = por %p237, %p238
    %p240 = scmp.ne.s32.totalorder %s231, %s232
    %p241 = scmp.eq.s32.totalorder %s21, 0
    %p242 = por %p240, %p241
    %p243 = scmp.ne.s32.totalorder %s231, %s232
    %p244 = scmp.eq.s32.totalorder %s22, 7
    %p245 = por %p243, %p244
    %p247 = scmp.ne.s32.totalorder %s232, %s246
    %p248 = scmp.eq.s32.totalorder %s22, 0
    %p249 = por %p247, %p248
    %s250 = ssub.s32 %s23, %s35
    %s251 = ssub.s32 %s24, %s31
    %s252 = sor.u32 %s250, %s251
    %p253 = scmp.eq.s32.totalorder %s252, 0
    %s255 = sadd.s32 %s254, 1
    %s256 = scalar_select %p253, %s254, %s255
    %p259 = pneg %p253
    %p260 = scmp.eq.s32.totalorder %s16, 7
    %p261 = por %p259, %p260
    %p262 = scmp.ne.s32.totalorder %s254, %s257
    %p263 = scmp.eq.s32.totalorder %s16, 0
    %p264 = por %p262, %p263
    %p265 = scmp.ne.s32.totalorder %s254, %s257
    %p266 = scmp.eq.s32.totalorder %s21, 7
    %p267 = por %p265, %p266
    %p268 = scmp.ne.s32.totalorder %s257, %s258
    %p269 = scmp.eq.s32.totalorder %s21, 0
    %p270 = por %p268, %p269
    %p271 = scmp.ne.s32.totalorder %s257, %s258
    %p272 = scmp.eq.s32.totalorder %s22, 7
    %p273 = por %p271, %p272
    %p275 = scmp.ne.s32.totalorder %s258, %s274
    %p276 = scmp.eq.s32.totalorder %s22, 0
    %p277 = por %p275, %p276
    %s278 = ssub.s32 %s23, %s35
    %s279 = ssub.s32 %s24, %s31
    %s280 = sor.u32 %s278, %s279
    %p281 = scmp.eq.s32.totalorder %s280, 0
    %s283 = sadd.s32 %s282, 1
    %s284 = scalar_select %p281, %s282, %s283
    %p287 = pneg %p281
    %p288 = scmp.eq.s32.totalorder %s16, 7
    %p289 = por %p287, %p288
    %p290 = scmp.ne.s32.totalorder %s282, %s285
    %p291 = scmp.eq.s32.totalorder %s16, 0
    %p292 = por %p290, %p291
    %p293 = scmp.ne.s32.totalorder %s282, %s285
    %p294 = scmp.eq.s32.totalorder %s21, 7
    %p295 = por %p293, %p294
    %p296 = scmp.ne.s32.totalorder %s285, %s286
    %p297 = scmp.eq.s32.totalorder %s21, 0
    %p298 = por %p296, %p297
    %p299 = scmp.ne.s32.totalorder %s285, %s286
    %p300 = scmp.eq.s32.totalorder %s22, 7
    %p301 = por %p299, %p300
    %p303 = scmp.ne.s32.totalorder %s286, %s302
    %p304 = scmp.eq.s32.totalorder %s22, 0
    %p305 = por %p303, %p304
    %p306 = scmp.le.s32.totalorder 1, %s16
    %p307 = scmp.lt.s32.totalorder %s16, 9
    %p308 = pnand %p306, %p307
    %p309 = pneg %p308
    // Predicated region
    $region9: #{_lambda_.8} parent=5 // pred_check
      _
    $region10: #{_lambda_.8} parent=5 // pred_check_branch
      %311 = sbr.rel (%p308) target = $region12
    $region11: #{_lambda_.8} parent=5 // pred_region
      %s312 = ssub.s32 %s16, 1
      // Predicated region
      $region13: #{_lambda_.8} parent=11 // pred_check
        %p313 = pneg %p137
      $region14: #{_lambda_.8} parent=11 // pred_check_branch
        %315 = sbr.rel (%p313) target = $region16
      $region15: #{_lambda_.8} parent=11 // pred_region
        _
      $region16: #{_lambda_.8} parent=11 // pred_fallthru
        _
      // Predicated region
      $region17: #{_lambda_.8} parent=11 // pred_check
        %p316 = pneg %p158
      $region18: #{_lambda_.8} parent=11 // pred_check_branch
        %318 = sbr.rel (%p316) target = $region20
      $region19: #{_lambda_.8} parent=11 // pred_region
        _
      $region20: #{_lambda_.8} parent=11 // pred_fallthru
        _
      // Predicated region
      $region21: #{_lambda_.8} parent=11 // pred_check
        %p319 = pneg %p179
      $region22: #{_lambda_.8} parent=11 // pred_check_branch
        %321 = sbr.rel (%p319) target = $region24
      $region23: #{_lambda_.8} parent=11 // pred_region
        _
      $region24: #{_lambda_.8} parent=11 // pred_fallthru
        _
      // Predicated region
      $region25: #{_lambda_.8} parent=11 // pred_check
        %p322 = pneg %p200
      $region26: #{_lambda_.8} parent=11 // pred_check_branch
        %324 = sbr.rel (%p322) target = $region28
      $region27: #{_lambda_.8} parent=11 // pred_region
        _
      $region28: #{_lambda_.8} parent=11 // pred_fallthru
        _
      // Predicated region
      $region29: #{_lambda_.8} parent=11 // pred_check
        %p325 = pneg %p221
      $region30: #{_lambda_.8} parent=11 // pred_check_branch
        %327 = sbr.rel (%p325) target = $region32
      $region31: #{_lambda_.8} parent=11 // pred_region
        _
      $region32: #{_lambda_.8} parent=11 // pred_fallthru
        _
      // Predicated region
      $region33: #{_lambda_.8} parent=11 // pred_check
        %p328 = pneg %p242
      $region34: #{_lambda_.8} parent=11 // pred_check_branch
        %330 = sbr.rel (%p328) target = $region36
      $region35: #{_lambda_.8} parent=11 // pred_region
        _
      $region36: #{_lambda_.8} parent=11 // pred_fallthru
        _
    $region12: #{_lambda_.8} parent=5 // pred_fallthru
      _
    %p331 = scmp.lt.s32.totalorder %s16, 8
    // Predicated region
    $region37: #{_lambda_.8} parent=5 // pred_check
      %p332 = pneg %p331
    $region38: #{_lambda_.8} parent=5 // pred_check_branch
      %334 = sbr.rel (%p332) target = $region40
    $region39: #{_lambda_.8} parent=5 // pred_region
      // Predicated region
      $region41: #{_lambda_.8} parent=39 // pred_check
        %p335 = pneg %p50
      $region42: #{_lambda_.8} parent=39 // pred_check_branch
        %337 = sbr.rel (%p335) target = $region44
      $region43: #{_lambda_.8} parent=39 // pred_region
        %p338 = scmp.lt.s32.totalorder %s23, 1
        %s339 = scalar_select %p338, %s23, 1
        %p340 = scmp.lt.s32.totalorder %s24, 5
        %s341 = scalar_select %p340, %s24, 5
        %s342 = smul.addr %s339, 6
        %s343 = sadd.s32 %s341, %s342
        %s344 = smul.addr %s343, 4
        %s345 = scalar_lea.vmem %s0, %s344
      $region44: #{_lambda_.8} parent=39 // pred_fallthru
        _
      // Predicated region
      $region45: #{_lambda_.8} parent=39 // pred_check
        %p346 = pneg %p80
      $region46: #{_lambda_.8} parent=39 // pred_check_branch
        %348 = sbr.rel (%p346) target = $region48
      $region47: #{_lambda_.8} parent=39 // pred_region
        %s349 = sadd.s32 %s24, 1
        %p350 = scmp.lt.s32.totalorder %s23, 1
        %s351 = scalar_select %p350, %s23, 1
        %p352 = scmp.lt.s32.totalorder %s349, 5
        %s353 = scalar_select %p352, %s349, 5
        %s354 = smul.addr %s351, 6
        %s355 = sadd.s32 %s353, %s354
        %s356 = smul.addr %s355, 4
        %s357 = scalar_lea.vmem %s1, %s356
        %s358 = sadd.s32 %s24, 1
      $region48: #{_lambda_.8} parent=39 // pred_fallthru
        _
      // Predicated region
      $region49: #{_lambda_.8} parent=39 // pred_check
        %p359 = pneg %p110
      $region50: #{_lambda_.8} parent=39 // pred_check_branch
        %361 = sbr.rel (%p359) target = $region52
      $region51: #{_lambda_.8} parent=39 // pred_region
        %s362 = sadd.s32 %s24, 2
        %p363 = scmp.lt.s32.totalorder %s23, 1
        %s364 = scalar_select %p363, %s23, 1
        %p365 = scmp.lt.s32.totalorder %s362, 5
        %s366 = scalar_select %p365, %s362, 5
        %s367 = smul.addr %s364, 6
        %s368 = sadd.s32 %s366, %s367
        %s369 = smul.addr %s368, 4
        %s370 = scalar_lea.vmem %s2, %s369
        %s371 = sadd.s32 %s24, 2
      $region52: #{_lambda_.8} parent=39 // pred_fallthru
        _
      // Predicated region
      $region53: #{_lambda_.8} parent=39 // pred_check
        %p372 = pneg %p264
      $region54: #{_lambda_.8} parent=39 // pred_check_branch
        %374 = sbr.rel (%p372) target = $region56
      $region55: #{_lambda_.8} parent=39 // pred_region
        %p375 = scmp.lt.s32.totalorder %s23, 1
        %s376 = scalar_select %p375, %s23, 1
        %p377 = scmp.lt.s32.totalorder %s24, 3
        %s378 = scalar_select %p377, %s24, 3
        %s379 = smul.addr %s376, 4
        %s380 = sadd.s32 %s378, %s379
        %s381 = smul.addr %s380, 2
        %s382 = scalar_lea.vmem %s9, %s381
      $region56: #{_lambda_.8} parent=39 // pred_fallthru
        _
    $region40: #{_lambda_.8} parent=5 // pred_fallthru
      _
    %p383 = scmp.le.s32.totalorder 1, %s16
    %p384 = scmp.lt.s32.totalorder %s16, 9
    %p385 = pnand %p383, %p384
    %p386 = pneg %p385
    // Predicated region
    $region57: #{_lambda_.8} parent=5 // pred_check
      _
    $region58: #{_lambda_.8} parent=5 // pred_check_branch
      %388 = sbr.rel (%p385) target = $region60
    $region59: #{_lambda_.8} parent=5 // pred_region
      %s389 = ssub.s32 %s16, 1
      %p390 = scmp.lt.s32.totalorder %s25, 1
      %s391 = scalar_select %p390, %s25, 1
      %p392 = scmp.lt.s32.totalorder %s26, 5
      %s393 = scalar_select %p392, %s26, 5
      %s394 = smul.addr %s391, 6
      %s395 = sadd.s32 %s393, %s394
      %s396 = smul.addr %s395, 4
      %s397 = scalar_lea.vmem %s0, %s396
      %p398 = pneg %p56
      %p399 = pneg %p53
      %s400 = sadd.s32 %s26, 1
      %p401 = scmp.lt.s32.totalorder %s25, 1
      %s402 = scalar_select %p401, %s25, 1
      %p403 = scmp.lt.s32.totalorder %s400, 5
      %s404 = scalar_select %p403, %s400, 5
      %s405 = smul.addr %s402, 6
      %s406 = sadd.s32 %s404, %s405
      %s407 = smul.addr %s406, 4
      %s408 = scalar_lea.vmem %s1, %s407
      %p409 = pneg %p86
      %p410 = pneg %p83
      %s411 = sadd.s32 %s26, 2
      %p412 = scmp.lt.s32.totalorder %s25, 1
      %s413 = scalar_select %p412, %s25, 1
      %p414 = scmp.lt.s32.totalorder %s411, 5
      %s415 = scalar_select %p414, %s411, 5
      %s416 = smul.addr %s413, 6
      %s417 = sadd.s32 %s415, %s416
      %s418 = smul.addr %s417, 4
      %s419 = scalar_lea.vmem %s2, %s418
      %p420 = pneg %p116
      %p421 = pneg %p113
      %p422 = pneg %p137
      %p423 = pneg %p134
      %p424 = pneg %p158
      %p425 = pneg %p155
      %p426 = pneg %p179
      %p427 = pneg %p176
      %p428 = pneg %p200
      %p429 = pneg %p197
      %p430 = pneg %p221
      %p431 = pneg %p218
      %p432 = pneg %p242
      %p433 = pneg %p239
      %p434 = scmp.lt.s32.totalorder %s25, 1
      %s435 = scalar_select %p434, %s25, 1
      %p436 = scmp.lt.s32.totalorder %s26, 3
      %s437 = scalar_select %p436, %s26, 3
      %s438 = smul.addr %s435, 4
      %s439 = sadd.s32 %s437, %s438
      %s440 = smul.addr %s439, 2
      %s441 = scalar_lea.vmem %s9, %s440
      %p442 = pneg %p270
      %p443 = pneg %p267
      %p444 = pneg %p298
      %p445 = pneg %p295
      %p446 = scmp.lt.s32.totalorder %s25, 1
      %s447 = scalar_select %p446, %s25, 1
      %p448 = scmp.lt.s32.totalorder %s26, 3
      %s449 = scalar_select %p448, %s26, 3
      %s450 = smul.addr %s447, 4
      %s451 = sadd.s32 %s449, %s450
      %s452 = smul.addr %s451, 2
      %s453 = scalar_lea.vmem %s10, %s452
      %p454 = scmp.lt.s32.totalorder %s25, 1
      %s455 = scalar_select %p454, %s25, 1
      %p456 = scmp.lt.s32.totalorder %s26, 5
      %s457 = scalar_select %p456, %s26, 5
      %s458 = smul.addr %s455, 6
      %s459 = sadd.s32 %s457, %s458
      %s460 = smul.addr %s459, 4
      %s461 = scalar_lea.vmem %s0, %s460
      %s462 = sadd.s32 %s26, 1
      %p463 = scmp.lt.s32.totalorder %s25, 1
      %s464 = scalar_select %p463, %s25, 1
      %p465 = scmp.lt.s32.totalorder %s462, 5
      %s466 = scalar_select %p465, %s462, 5
      %s467 = smul.addr %s464, 6
      %s468 = sadd.s32 %s466, %s467
      %s469 = smul.addr %s468, 4
      %s470 = scalar_lea.vmem %s1, %s469
      %s471 = sadd.s32 %s26, 1
      %s472 = sadd.s32 %s26, 2
      %p473 = scmp.lt.s32.totalorder %s25, 1
      %s474 = scalar_select %p473, %s25, 1
      %p475 = scmp.lt.s32.totalorder %s472, 5
      %s476 = scalar_select %p475, %s472, 5
      %s477 = smul.addr %s474, 6
      %s478 = sadd.s32 %s476, %s477
      %s479 = smul.addr %s478, 4
      %s480 = scalar_lea.vmem %s2, %s479
      %s481 = sadd.s32 %s26, 2
      %p482 = scmp.lt.s32.totalorder %s25, 1
      %s483 = scalar_select %p482, %s25, 1
      %p484 = scmp.lt.s32.totalorder %s26, 3
      %s485 = scalar_select %p484, %s26, 3
      %s486 = smul.addr %s483, 4
      %s487 = sadd.s32 %s485, %s486
      %s488 = smul.addr %s487, 2
      %s489 = scalar_lea.vmem %s9, %s488
      %p490 = scmp.lt.s32.totalorder %s25, 1
      %s491 = scalar_select %p490, %s25, 1
      %p492 = scmp.lt.s32.totalorder %s26, 3
      %s493 = scalar_select %p492, %s26, 3
      %s494 = smul.addr %s491, 4
      %s495 = sadd.s32 %s493, %s494
      %s496 = smul.addr %s495, 2
      %s497 = scalar_lea.vmem %s10, %s496
      %v499 = vld [vmem:[%s3] sm:$0xff]
      %v500 = vld [vmem:[%s3 + $0x8] sm:$0xff]
      %v501 = vld [vmem:[%s3 + $0x10] sm:$0xff]
      %v502 = vld [vmem:[%s4] sm:$0x3]
      %v503 = vld [vmem:[%s5] sm:$0xff]
      %v504 = vld [vmem:[%s5 + $0x8] sm:$0xff]
      %v505 = vld [vmem:[%s5 + $0x10] sm:$0x1]
      %v506 = vld [vmem:[%s5 + $0x18] sm:$0x1]
      %v507 = vld [vmem:[%s461] sm:$0x7]
      %v509 = vlaneseq
      %v510 = vshrl.u32 %v509, 7
      %v511 = vsub.s32 0, %v510
      %v512 = vrot.slane %v502, %v511
      %v513 = vlaneseq
      %v514 = vshrl.u32 %v513, 7
      %v515 = vsub.s32 1, %v514
      %v516 = vrot.slane %v502, %v515
      %v522 = vunpack.c.l.b16 %v499
      %v523 = vunpack.c.h.b16 %v499
      %v524 = vunpack.c.l.b16 %v500
      %v525 = vunpack.c.h.b16 %v500
      %v526 = vunpack.c.l.b16 %v501
      %v527 = vunpack.c.h.b16 %v501
      %v528 = vpack.c.b16 %v524, %v522
      %v529 = vpack.c.b16 %v525, %v523
      %v530 = vpack.c.b16 %v526, %v526
      %v531 = vpack.c.b16 %v527, %v527
      %vm534 = vcmask 195584
      %v536 = vsel %vm534, %v507, 0
      %vm538 = vcmask 1043456
      %v540 = vsel %vm538, %v530, 0
      %v543 = vsel %vm538, %v531, 0
      %545 = vmatprep.subr.bf16.mxu0 %v529
      %546 = vmatpush1.bf16.msra.mxu0 %v528
      %547 = vmatprep.subr.bf16.mxu0 %v543
      %548 = vmatpush1.bf16.msra.mxu0 %v540
      %549 = vmatprep.subr.bf16.mxu0 0
      %550 = vmatpush1.bf16.msra.mxu0 0
      %551 = vmatprep.subr.bf16.mxu0 0
      %552 = vmatpush1.bf16.msra.mxu0 0
      %553 = vmatprep.subr.bf16.mxu0 0
      %554 = vmatpush1.bf16.msra.mxu0 0
      %555 = vmatprep.subr.bf16.mxu0 0
      %556 = vmatpush1.bf16.msra.mxu0 0
      %557 = vmatprep.subr.bf16.mxu0 0
      %558 = vmatpush1.bf16.msra.mxu0 0
      %559 = vmatprep.subr.bf16.mxu0 0
      %560 = vmatpush1.bf16.msra.mxu0 0
      %561 = vmatprep.subr.bf16.mxu0 0
      %562 = vmatpush1.bf16.msra.mxu0 0
      %563 = vmatprep.subr.bf16.mxu0 0
      %564 = vmatpush1.bf16.msra.mxu0 0
      %565 = vmatprep.subr.bf16.mxu0 0
      %566 = vmatpush1.bf16.msra.mxu0 0
      %567 = vmatprep.subr.bf16.mxu0 0
      %568 = vmatpush1.bf16.msra.mxu0 0
      %569 = vmatprep.subr.bf16.mxu0 0
      %570 = vmatpush1.bf16.msra.mxu0 0
      %571 = vmatprep.subr.bf16.mxu0 0
      %572 = vmatpush1.bf16.msra.mxu0 0
      %573 = vmatprep.subr.bf16.mxu0 0
      %574 = vmatpush1.bf16.msra.mxu0 0
      %575 = vmatprep.subr.bf16.mxu0 0
      %576 = vmatpush1.bf16.msra.mxu0 0
      %577 = vmatprep.mubr.bf16.mxu0 0
      %578 = vmatmul.mubr.bf16.gmra.mrb[0].mxu0 %v536
      %v579 = vpop.f32.mrb[0].mxu0
      %v580 = vadd.f32 %v512, %v579
      %v581 = vpop.f32.mrb[0].mxu0
      %v582 = vadd.f32 %v516, %v581
      %v583 = vpop.f32.mrb[0].mxu0
      %v584 = vpop.f32.mrb[0].mxu0
      %585 = vdwg.mxu0
      %v586 = vmax.f32 %v580, 0.0
      %v587 = vmax.f32 %v582, 0.0
      %v588 = vmin.f32 %v586, 6.0
      %v589 = vmin.f32 %v587, 6.0
      %p590 = scmp.ge.s32.totalorder %s26, 1
      %p591 = scmp.le.s32.totalorder %s26, 4
      %p592 = pnand %p590, %p591
      %p593 = pneg %p592
      %v594 = vlaneseq
      %v595 = vshrl.u32 %v594, 7
      %vm596 = vcmp.ge.s32.totalorder %v595, 1
      %vm597 = vcmp.le.s32.totalorder %v595, 4
      %vm598 = vmand %vm596, %vm597
      %s599 = scalar_select %p593, 1, 0
      %v600 = vstv %s599
      %vm601 = vcmp.eq.s32.totalorder %v600, 1
      %vm602 = vmand %vm601, %vm598
      %v603 = vsel %vm602, 1, 0
      %vm604 = vcmp.eq.s32.totalorder %v603, 1
      %v605 = vsel %vm604, %v588, 0.0
      %v606 = vsel %vm604, %v589, 0.0
      %v607 = vld [vmem:[%s470] sm:$0x7]
      %v609 = vsel %vm534, %v607, 0
      %611 = vmatprep.subr.bf16.mxu0 %v529
      %612 = vmatpush1.bf16.msra.mxu0 %v528
      %613 = vmatprep.subr.bf16.mxu0 %v543
      %614 = vmatpush1.bf16.msra.mxu0 %v540
      %615 = vmatprep.subr.bf16.mxu0 0
      %616 = vmatpush1.bf16.msra.mxu0 0
      %617 = vmatprep.subr.bf16.mxu0 0
      %618 = vmatpush1.bf16.msra.mxu0 0
      %619 = vmatprep.subr.bf16.mxu0 0
      %620 = vmatpush1.bf16.msra.mxu0 0
      %621 = vmatprep.subr.bf16.mxu0 0
      %622 = vmatpush1.bf16.msra.mxu0 0
      %623 = vmatprep.subr.bf16.mxu0 0
      %624 = vmatpush1.bf16.msra.mxu0 0
      %625 = vmatprep.subr.bf16.mxu0 0
      %626 = vmatpush1.bf16.msra.mxu0 0
      %627 = vmatprep.subr.bf16.mxu0 0
      %628 = vmatpush1.bf16.msra.mxu0 0
      %629 = vmatprep.subr.bf16.mxu0 0
      %630 = vmatpush1.bf16.msra.mxu0 0
      %631 = vmatprep.subr.bf16.mxu0 0
      %632 = vmatpush1.bf16.msra.mxu0 0
      %633 = vmatprep.subr.bf16.mxu0 0
      %634 = vmatpush1.bf16.msra.mxu0 0
      %635 = vmatprep.subr.bf16.mxu0 0
      %636 = vmatpush1.bf16.msra.mxu0 0
      %637 = vmatprep.subr.bf16.mxu0 0
      %638 = vmatpush1.bf16.msra.mxu0 0
      %639 = vmatprep.subr.bf16.mxu0 0
      %640 = vmatpush1.bf16.msra.mxu0 0
      %641 = vmatprep.subr.bf16.mxu0 0
      %642 = vmatpush1.bf16.msra.mxu0 0
      %643 = vmatprep.mubr.bf16.mxu0 0
      %644 = vmatmul.mubr.bf16.gmra.mrb[0].mxu0 %v609
      %v645 = vpop.f32.mrb[0].mxu0
      %v646 = vadd.f32 %v512, %v645
      %v647 = vpop.f32.mrb[0].mxu0
      %v648 = vadd.f32 %v516, %v647
      %v649 = vpop.f32.mrb[0].mxu0
      %v650 = vpop.f32.mrb[0].mxu0
      %651 = vdwg.mxu0
      %v652 = vmax.f32 %v646, 0.0
      %v653 = vmax.f32 %v648, 0.0
      %v654 = vmin.f32 %v652, 6.0
      %v655 = vmin.f32 %v653, 6.0
      %s656 = sadd.s32 %s26, 1
      %p657 = scmp.ge.s32.totalorder %s656, 1
      %p658 = scmp.le.s32.totalorder %s656, 4
      %p659 = pnand %p657, %p658
      %p660 = pneg %p659
      %s661 = scalar_select %p660, 1, 0
      %v662 = vstv %s661
      %vm663 = vcmp.eq.s32.totalorder %v662, 1
      %vm664 = vmand %vm663, %vm598
      %v665 = vsel %vm664, 1, 0
      %vm666 = vcmp.eq.s32.totalorder %v665, 1
      %v667 = vsel %vm666, %v654, 0.0
      %v668 = vsel %vm666, %v655, 0.0
      %v669 = vld [vmem:[%s480] sm:$0x7]
      %v671 = vsel %vm534, %v669, 0
      %673 = vmatprep.subr.bf16.mxu0 %v529
      %674 = vmatpush1.bf16.msra.mxu0 %v528
      %675 = vmatprep.subr.bf16.mxu0 %v543
      %676 = vmatpush1.bf16.msra.mxu0 %v540
      %677 = vmatprep.subr.bf16.mxu0 0
      %678 = vmatpush1.bf16.msra.mxu0 0
      %679 = vmatprep.subr.bf16.mxu0 0
      %680 = vmatpush1.bf16.msra.mxu0 0
      %681 = vmatprep.subr.bf16.mxu0 0
      %682 = vmatpush1.bf16.msra.mxu0 0
      %683 = vmatprep.subr.bf16.mxu0 0
      %684 = vmatpush1.bf16.msra.mxu0 0
      %685 = vmatprep.subr.bf16.mxu0 0
      %686 = vmatpush1.bf16.msra.mxu0 0
      %687 = vmatprep.subr.bf16.mxu0 0
      %688 = vmatpush1.bf16.msra.mxu0 0
      %689 = vmatprep.subr.bf16.mxu0 0
      %690 = vmatpush1.bf16.msra.mxu0 0
      %691 = vmatprep.subr.bf16.mxu0 0
      %692 = vmatpush1.bf16.msra.mxu0 0
      %693 = vmatprep.subr.bf16.mxu0 0
      %694 = vmatpush1.bf16.msra.mxu0 0
      %695 = vmatprep.subr.bf16.mxu0 0
      %696 = vmatpush1.bf16.msra.mxu0 0
      %697 = vmatprep.subr.bf16.mxu0 0
      %698 = vmatpush1.bf16.msra.mxu0 0
      %699 = vmatprep.subr.bf16.mxu0 0
      %700 = vmatpush1.bf16.msra.mxu0 0
      %701 = vmatprep.subr.bf16.mxu0 0
      %702 = vmatpush1.bf16.msra.mxu0 0
      %703 = vmatprep.subr.bf16.mxu0 0
      %704 = vmatpush1.bf16.msra.mxu0 0
      %705 = vmatprep.mubr.bf16.mxu0 0
      %706 = vmatmul.mubr.bf16.gmra.mrb[0].mxu0 %v671
      %v707 = vpop.f32.mrb[0].mxu0
      %v708 = vadd.f32 %v512, %v707
      %v709 = vpop.f32.mrb[0].mxu0
      %v710 = vadd.f32 %v516, %v709
      %v711 = vpop.f32.mrb[0].mxu0
      %v712 = vpop.f32.mrb[0].mxu0
      %713 = vdwg.mxu0
      %v714 = vmax.f32 %v708, 0.0
      %v715 = vmax.f32 %v710, 0.0
      %v716 = vmin.f32 %v714, 6.0
      %v717 = vmin.f32 %v715, 6.0
      %s718 = sadd.s32 %s26, 2
      %p719 = scmp.ge.s32.totalorder %s718, 1
      %p720 = scmp.le.s32.totalorder %s718, 4
      %p721 = pnand %p719, %p720
      %p722 = pneg %p721
      %s723 = scalar_select %p722, 1, 0
      %v724 = vstv %s723
      %vm725 = vcmp.eq.s32.totalorder %v724, 1
      %vm726 = vmand %vm725, %vm598
      %v727 = vsel %vm726, 1, 0
      %vm728 = vcmp.eq.s32.totalorder %v727, 1
      %v729 = vsel %vm728, %v716, 0.0
      %v730 = vsel %vm728, %v717, 0.0
      %v731 = vlaneseq
      %v732 = vshrl.u32 %v731, 7
      %v733 = vsub.s32 0, %v732
      %v734 = vrot.slane %v503, %v733
      %v735 = vlaneseq
      %v736 = vshrl.u32 %v735, 7
      %v737 = vsub.s32 0, %v736
      %v738 = vrot.slane %v504, %v737
      %v739 = vmul.f32 %v605, %v734
      %v740 = vmul.f32 %v606, %v738
      %v741 = vadd.f32 %v739, 0.0
      %v742 = vadd.f32 %v740, 0.0
      %v743 = vlaneseq
      %v744 = vshrl.u32 %v743, 7
      %v745 = vsub.s32 1, %v744
      %v746 = vrot.slane %v503, %v745
      %v747 = vlaneseq
      %v748 = vshrl.u32 %v747, 7
      %v749 = vsub.s32 1, %v748
      %v750 = vrot.slane %v504, %v749
      %v751 = vmul.f32 %v605, %v746
      %v752 = vmul.f32 %v606, %v750
      %v755 = vrot.slane %v751, 1
      %v756 = vrot.slane %v752, 1
      %v759 = vadd.f32 %v741, %v755
      %v760 = vadd.f32 %v742, %v756
      %v761 = vlaneseq
      %v762 = vshrl.u32 %v761, 7
      %v763 = vsub.s32 2, %v762
      %v764 = vrot.slane %v503, %v763
      %v765 = vlaneseq
      %v766 = vshrl.u32 %v765, 7
      %v767 = vsub.s32 2, %v766
      %v768 = vrot.slane %v504, %v767
      %v769 = vmul.f32 %v605, %v764
      %v770 = vmul.f32 %v606, %v768
      %v773 = vrot.slane %v769, 2
      %v774 = vrot.slane %v770, 2
      %v777 = vadd.f32 %v759, %v773
      %v778 = vadd.f32 %v760, %v774
      %v779 = vlaneseq
      %v780 = vshrl.u32 %v779, 7
      %v781 = vsub.s32 3, %v780
      %v782 = vrot.slane %v503, %v781
      %v783 = vlaneseq
      %v784 = vshrl.u32 %v783, 7
      %v785 = vsub.s32 3, %v784
      %v786 = vrot.slane %v504, %v785
      %v787 = vmul.f32 %v667, %v782
      %v788 = vmul.f32 %v668, %v786
      %v789 = vadd.f32 %v777, %v787
      %v790 = vadd.f32 %v778, %v788
      %v791 = vlaneseq
      %v792 = vshrl.u32 %v791, 7
      %v793 = vsub.s32 4, %v792
      %v794 = vrot.slane %v503, %v793
      %v795 = vlaneseq
      %v796 = vshrl.u32 %v795, 7
      %v797 = vsub.s32 4, %v796
      %v798 = vrot.slane %v504, %v797
      %v799 = vmul.f32 %v667, %v794
      %v800 = vmul.f32 %v668, %v798
      %v803 = vrot.slane %v799, 1
      %v804 = vrot.slane %v800, 1
      %v807 = vadd.f32 %v789, %v803
      %v808 = vadd.f32 %v790, %v804
      %v809 = vlaneseq
      %v810 = vshrl.u32 %v809, 7
      %v811 = vsub.s32 5, %v810
      %v812 = vrot.slane %v503, %v811
      %v813 = vlaneseq
      %v814 = vshrl.u32 %v813, 7
      %v815 = vsub.s32 5, %v814
      %v816 = vrot.slane %v504, %v815
      %v817 = vmul.f32 %v667, %v812
      %v818 = vmul.f32 %v668, %v816
      %v821 = vrot.slane %v817, 2
      %v822 = vrot.slane %v818, 2
      %v825 = vadd.f32 %v807, %v821
      %v826 = vadd.f32 %v808, %v822
      %v827 = vlaneseq
      %v828 = vshrl.u32 %v827, 7
      %v829 = vsub.s32 6, %v828
      %v830 = vrot.slane %v503, %v829
      %v831 = vlaneseq
      %v832 = vshrl.u32 %v831, 7
      %v833 = vsub.s32 6, %v832
      %v834 = vrot.slane %v504, %v833
      %v835 = vmul.f32 %v729, %v830
      %v836 = vmul.f32 %v730, %v834
      %v837 = vadd.f32 %v825, %v835
      %v838 = vadd.f32 %v826, %v836
      %v839 = vlaneseq
      %v840 = vshrl.u32 %v839, 7
      %v841 = vsub.s32 7, %v840
      %v842 = vrot.slane %v503, %v841
      %v843 = vlaneseq
      %v844 = vshrl.u32 %v843, 7
      %v845 = vsub.s32 7, %v844
      %v846 = vrot.slane %v504, %v845
      %v847 = vmul.f32 %v729, %v842
      %v848 = vmul.f32 %v730, %v846
      %v851 = vrot.slane %v847, 1
      %v852 = vrot.slane %v848, 1
      %v855 = vadd.f32 %v837, %v851
      %v856 = vadd.f32 %v838, %v852
      %v857 = vlaneseq
      %v858 = vshrl.u32 %v857, 7
      %v859 = vsub.s32 0, %v858
      %v860 = vrot.slane %v505, %v859
      %v861 = vlaneseq
      %v862 = vshrl.u32 %v861, 7
      %v863 = vsub.s32 0, %v862
      %v864 = vrot.slane %v506, %v863
      %v865 = vmul.f32 %v729, %v860
      %v866 = vmul.f32 %v730, %v864
      %v869 = vrot.slane %v865, 2
      %v870 = vrot.slane %v866, 2
      %v873 = vadd.f32 %v855, %v869
      %v874 = vadd.f32 %v856, %v870
      %v875 = vld [vmem:[%s6] sm:$0x3]
      %v877 = vlaneseq
      %v878 = vshrl.u32 %v877, 7
      %v879 = vsub.s32 0, %v878
      %v880 = vrot.slane %v875, %v879
      %v881 = vlaneseq
      %v882 = vshrl.u32 %v881, 7
      %v883 = vsub.s32 1, %v882
      %v884 = vrot.slane %v875, %v883
      %v887 = vadd.f32 %v873, %v880
      %v888 = vadd.f32 %v874, %v884
      %v889 = vmax.f32 %v887, 0.0
      %v890 = vmax.f32 %v888, 0.0
      %v891 = vmin.f32 %v889, 6.0
      %v892 = vmin.f32 %v890, 6.0
      %v893 = vpack.c.bf16 %v891, %v891
      %v894 = vpack.c.bf16 %v892, %v892
      %v895 = vld [vmem:[%s7] sm:$0xf]
      %v896 = vld [vmem:[%s7 + $0x4] sm:$0xf]
      %v897 = vld [vmem:[%s7 + $0x8] sm:$0xf]
      %v898 = vld [vmem:[%s7 + $0xc] sm:$0xf]
      %v899 = vld [vmem:[%s7 + $0x10] sm:$0xf]
      %v900 = vld [vmem:[%s7 + $0x14] sm:$0xf]
      %v901 = vld [vmem:[%s7 + $0x18] sm:$0xf]
      %v902 = vld [vmem:[%s7 + $0x1c] sm:$0xf]
      %v903 = vld [vmem:[%s7 + $0x20] sm:$0xf]
      %v904 = vld [vmem:[%s7 + $0x24] sm:$0xf]
      %v905 = vld [vmem:[%s7 + $0x28] sm:$0xf]
      %v906 = vld [vmem:[%s7 + $0x2c] sm:$0xf]
      %v907 = vld [vmem:[%s7 + $0x30] sm:$0xf]
      %v908 = vld [vmem:[%s7 + $0x34] sm:$0xf]
      %v909 = vld [vmem:[%s7 + $0x38] sm:$0xf]
      %v910 = vld [vmem:[%s7 + $0x3c] sm:$0xf]
      %v911 = vld [vmem:[%s7 + $0x40] sm:$0xf]
      %v912 = vld [vmem:[%s7 + $0x44] sm:$0xf]
      %v913 = vld [vmem:[%s8] sm:$0x1]
      %v915 = vlaneseq
      %v916 = vshrl.u32 %v915, 7
      %v917 = vsub.s32 0, %v916
      %v918 = vrot.slane %v913, %v917
      %v938 = vunpack.c.l.b16 %v895
      %v939 = vunpack.c.l.b16 %v896
      %v940 = vunpack.c.l.b16 %v897
      %v941 = vunpack.c.l.b16 %v898
      %v942 = vunpack.c.l.b16 %v899
      %v943 = vunpack.c.l.b16 %v900
      %v944 = vunpack.c.l.b16 %v901
      %v945 = vunpack.c.l.b16 %v902
      %v946 = vunpack.c.l.b16 %v903
      %v947 = vunpack.c.l.b16 %v904
      %v948 = vunpack.c.l.b16 %v905
      %v949 = vunpack.c.l.b16 %v906
      %v950 = vunpack.c.l.b16 %v907
      %v951 = vunpack.c.l.b16 %v908
      %v952 = vunpack.c.l.b16 %v909
      %v953 = vunpack.c.l.b16 %v910
      %v954 = vunpack.c.l.b16 %v911
      %v955 = vunpack.c.l.b16 %v912
      %v956 = vpack.c.b16 %v939, %v938
      %v957 = vpack.c.b16 %v941, %v940
      %v958 = vpack.c.b16 %v943, %v942
      %v959 = vpack.c.b16 %v945, %v944
      %v960 = vpack.c.b16 %v947, %v946
      %v961 = vpack.c.b16 %v949, %v948
      %v962 = vpack.c.b16 %v951, %v950
      %v963 = vpack.c.b16 %v953, %v952
      %v964 = vpack.c.b16 %v955, %v954
      %vm974 = vcmask 130048
      %v976 = vsel %vm974, %v894, 0
      %978 = vmatprep.subr.bf16.mxu0 0
      %979 = vmatpush1.bf16.msra.mxu0 %v956
      %980 = vmatprep.subr.bf16.mxu0 0
      %981 = vmatpush1.bf16.msra.mxu0 %v957
      %982 = vmatprep.subr.bf16.mxu0 0
      %983 = vmatpush1.bf16.msra.mxu0 %v958
      %984 = vmatprep.subr.bf16.mxu0 0
      %985 = vmatpush1.bf16.msra.mxu0 %v959
      %986 = vmatprep.subr.bf16.mxu0 0
      %987 = vmatpush1.bf16.msra.mxu0 %v960
      %988 = vmatprep.subr.bf16.mxu0 0
      %989 = vmatpush1.bf16.msra.mxu0 %v961
      %990 = vmatprep.subr.bf16.mxu0 0
      %991 = vmatpush1.bf16.msra.mxu0 %v962
      %992 = vmatprep.subr.bf16.mxu0 0
      %993 = vmatpush1.bf16.msra.mxu0 %v963
      %994 = vmatprep.subr.bf16.mxu0 0
      %995 = vmatpush1.bf16.msra.mxu0 %v964
      %996 = vmatprep.subr.bf16.mxu0 0
      %997 = vmatpush1.bf16.msra.mxu0 0
      %998 = vmatprep.subr.bf16.mxu0 0
      %999 = vmatpush1.bf16.msra.mxu0 0
      %1000 = vmatprep.subr.bf16.mxu0 0
      %1001 = vmatpush1.bf16.msra.mxu0 0
      %1002 = vmatprep.subr.bf16.mxu0 0
      %1003 = vmatpush1.bf16.msra.mxu0 0
      %1004 = vmatprep.subr.bf16.mxu0 0
      %1005 = vmatpush1.bf16.msra.mxu0 0
      %1006 = vmatprep.subr.bf16.mxu0 0
      %1007 = vmatpush1.bf16.msra.mxu0 0
      %1008 = vmatprep.subr.bf16.mxu0 0
      %1009 = vmatpush1.bf16.msra.mxu0 0
      %1010 = vmatprep.mubr.bf16.mxu0 %v976
      %1011 = vmatmul.mubr.bf16.gmra.mrb[0].mxu0 %v893
      %v1012 = vpop.f32.mrb[0].mxu0
      %v1013 = vadd.f32 %v918, %v1012
      %v1014 = vpop.f32.mrb[0].mxu0
      %v1015 = vpop.f32.mrb[0].mxu0
      %v1016 = vpop.f32.mrb[0].mxu0
      %1017 = vdwg.mxu0
      %v1018 = vld [vmem:[%s489] sm:$0x3]
      %v1019 = vunpack.c.l.bf16 %v1018
      %v1020 = vadd.f32 %v1013, %v1019
      %v1021 = vpack.c.bf16 %v1020, %v1020
      %vm1022 = vcmask 189440
      %1023 = vst.msk [vmem:[%s497] sm:$0x3] %vm1022, %v1021
      %p1024 = scmp.lt.s32.totalorder %s25, 1
      %s1025 = scalar_select %p1024, %s25, 1
      %p1026 = scmp.lt.s32.totalorder %s26, 3
      %s1027 = scalar_select %p1026, %s26, 3
      %s1028 = smul.addr %s1025, 4
      %s1029 = sadd.s32 %s1027, %s1028
      %s1030 = smul.addr %s1029, 2
      %s1031 = scalar_lea.vmem %s10, %s1030
      // Predicated region
      $region61: #{_lambda_.8} parent=59 // pred_check
        %p1032 = pneg %p295
      $region62: #{_lambda_.8} parent=59 // pred_check_branch
        %1034 = sbr.rel (%p1032) target = $region64
      $region63: #{_lambda_.8} parent=59 // pred_region
        _
      $region64: #{_lambda_.8} parent=59 // pred_fallthru
        _
    $region60: #{_lambda_.8} parent=5 // pred_fallthru
      _
    %p1035 = scmp.le.s32.totalorder 2, %s16
    // Predicated region
    $region65: #{_lambda_.8} parent=5 // pred_check
      %p1036 = pneg %p1035
    $region66: #{_lambda_.8} parent=5 // pred_check_branch
      %1038 = sbr.rel (%p1036) target = $region68
    $region67: #{_lambda_.8} parent=5 // pred_region
      %s1039 = ssub.s32 %s16, 2
      // Predicated region
      $region69: #{_lambda_.8} parent=67 // pred_check
        %p1040 = pneg %p301
      $region70: #{_lambda_.8} parent=67 // pred_check_branch
        %1042 = sbr.rel (%p1040) target = $region72
      $region71: #{_lambda_.8} parent=67 // pred_region
        %p1043 = scmp.lt.s32.totalorder %s27, 1
        %s1044 = scalar_select %p1043, %s27, 1
        %p1045 = scmp.lt.s32.totalorder %s28, 3
        %s1046 = scalar_select %p1045, %s28, 3
        %s1047 = smul.addr %s1044, 4
        %s1048 = sadd.s32 %s1046, %s1047
        %s1049 = smul.addr %s1048, 2
        %s1050 = scalar_lea.vmem %s10, %s1049
      $region72: #{_lambda_.8} parent=67 // pred_fallthru
        _
    $region68: #{_lambda_.8} parent=5 // pred_fallthru
      _
  $region6: #{_lambda_.8} parent=0 // loop_footer
    %s20 = sadd.s32 1, %s16
  $region7: #{_lambda_.8} parent=0 // loop_footer_branch
    %15 = sbr.rel target = $region3
  $region8: #{_lambda_.8} parent=0 // loop_exit
    _

// kernel: _lambda_.9
$region0: #{_lambda_.9}
  #allocation0 [shape = 'u32[]', space=smem, size = 0x4, offset = 0x4, fixed_abs, tag = 'smem constant byte address 0x4 - core index']
  #allocation1 [shape = 'u32[144,128]{1,0:T(1,128)}', space=vmem, size = 0x12000, scoped, tag = 'internal scratch']
  %s0 = inlined_call_operand.vmem [shape: bf16[32,24], index: 0, kind: input, shape index: {}]
  %s1 = inlined_call_operand.vmem [shape: bf16[24,1280], index: 1, kind: input, shape index: {}]
  %s2 = inlined_call_operand.vmem [shape: f32[1,1280], index: 2, kind: input, shape index: {}]
  %s3 = inlined_call_operand.vmem [shape: f32[32,1280], index: 3, kind: output, shape index: {}]
  %s4 = sld [smem:[#allocation0]]
  $region102: #{_lambda_.9} parent=0
    _
  %s6 = ssub.s32 1, %s4
  %s7 = scalar_select 0, %s6, %s4
  $region1: #{_lambda_.9} parent=0
    #allocation2 [shape = 'u8[24576]{0}', space=vmem, size = 0x6000, scoped, tag = 'input window, operand 1']
    #allocation3 [shape = 'u8[65536]{0}', space=vmem, size = 0x10000, scoped, tag = 'output window, operand 0']
    loop: start=0, step=1, limit=7
    $region2: #{_lambda_.9} parent=1 // loop_pre_header
      _
    $region3: #{_lambda_.9} parent=1 // loop_header
      %s9 = sphi 0, %s13
      %p10 = scmp.ge.s32.totalorder %s9, 7
      %s16 = sphi 0, %s28
      %s17 = sphi 0, %s24
      %s18 = sphi 0, %s16
      %s19 = sphi 0, %s17
      %s20 = sphi 0, %s18
      %s21 = sphi 0, %s19
      %s31 = sphi 0, %s33
      %s34 = sphi 0, %s31
      %s35 = sphi 0, %s34
      %s51 = sphi 0, %s35
      %s57 = sphi 0, %s59
      %s60 = sphi 0, %s57
      %s61 = sphi 0, %s60
      %s77 = sphi 0, %s61
      %s83 = sphi 0, %s85
      %s86 = sphi 0, %s83
      %s87 = sphi 0, %s86
      %s103 = sphi 0, %s87
      %s111 = sphi 0, %s113
      %s114 = sphi 0, %s111
      %s115 = sphi 0, %s114
      %s131 = sphi 0, %s115
    $region4: #{_lambda_.9} parent=1 // loop_header_branch
      %12 = sbr.rel (%p10) target = $region8
    $region5: #{_lambda_.9} parent=1 // loop_body
      %s14 = ssub.s32 %s9, 1
      %s15 = ssub.s32 %s9, 2
      %s22 = sadd.s32 1, %s17
      %p23 = scmp.ge.s32.totalorder %s22, 5
      %s24 = scalar_select %p23, 0, %s22
      %s25 = sadd.s32 1, %s16
      %s26 = scalar_select %p23, %s25, %s16
      %p27 = scmp.ge.s32.totalorder %s26, 1
      %s28 = scalar_select %p27, 0, %s26
      %s29 = ssub.s32 %s16, %s28
      %p30 = scmp.eq.s32.totalorder %s29, 0
      %s32 = sadd.s32 %s31, 1
      %s33 = scalar_select %p30, %s31, %s32
      %p36 = pneg %p30
      %p37 = scmp.eq.s32.totalorder %s9, 4
      %p38 = por %p36, %p37
      %p39 = scmp.ne.s32.totalorder %s31, %s34
      %p40 = scmp.eq.s32.totalorder %s9, 0
      %p41 = por %p39, %p40
      %p42 = scmp.ne.s32.totalorder %s31, %s34
      %p43 = scmp.eq.s32.totalorder %s14, 4
      %p44 = por %p42, %p43
      %p45 = scmp.ne.s32.totalorder %s34, %s35
      %p46 = scmp.eq.s32.totalorder %s14, 0
      %p47 = por %p45, %p46
      %p48 = scmp.ne.s32.totalorder %s34, %s35
      %p49 = scmp.eq.s32.totalorder %s15, 4
      %p50 = por %p48, %p49
      %p52 = scmp.ne.s32.totalorder %s35, %s51
      %p53 = scmp.eq.s32.totalorder %s15, 0
      %p54 = por %p52, %p53
      %s55 = ssub.s32 %s17, %s24
      %p56 = scmp.eq.s32.totalorder %s55, 0
      %s58 = sadd.s32 %s57, 1
      %s59 = scalar_select %p56, %s57, %s58
      %p62 = pneg %p56
      %p63 = scmp.eq.s32.totalorder %s9, 4
      %p64 = por %p62, %p63
      %p65 = scmp.ne.s32.totalorder %s57, %s60
      %p66 = scmp.eq.s32.totalorder %s9, 0
      %p67 = por %p65, %p66
      %p68 = scmp.ne.s32.totalorder %s57, %s60
      %p69 = scmp.eq.s32.totalorder %s14, 4
      %p70 = por %p68, %p69
      %p71 = scmp.ne.s32.totalorder %s60, %s61
      %p72 = scmp.eq.s32.totalorder %s14, 0
      %p73 = por %p71, %p72
      %p74 = scmp.ne.s32.totalorder %s60, %s61
      %p75 = scmp.eq.s32.totalorder %s15, 4
      %p76 = por %p74, %p75
      %p78 = scmp.ne.s32.totalorder %s61, %s77
      %p79 = scmp.eq.s32.totalorder %s15, 0
      %p80 = por %p78, %p79
      %s81 = ssub.s32 %s17, %s24
      %p82 = scmp.eq.s32.totalorder %s81, 0
      %s84 = sadd.s32 %s83, 1
      %s85 = scalar_select %p82, %s83, %s84
      %p88 = pneg %p82
      %p89 = scmp.eq.s32.totalorder %s9, 4
      %p90 = por %p88, %p89
      %p91 = scmp.ne.s32.totalorder %s83, %s86
      %p92 = scmp.eq.s32.totalorder %s9, 0
      %p93 = por %p91, %p92
      %p94 = scmp.ne.s32.totalorder %s83, %s86
      %p95 = scmp.eq.s32.totalorder %s14, 4
      %p96 = por %p94, %p95
      %p97 = scmp.ne.s32.totalorder %s86, %s87
      %p98 = scmp.eq.s32.totalorder %s14, 0
      %p99 = por %p97, %p98
      %p100 = scmp.ne.s32.totalorder %s86, %s87
      %p101 = scmp.eq.s32.totalorder %s15, 4
      %p102 = por %p100, %p101
      %p104 = scmp.ne.s32.totalorder %s87, %s103
      %p105 = scmp.eq.s32.totalorder %s15, 0
      %p106 = por %p104, %p105
      %s107 = ssub.s32 %s16, %s28
      %s108 = ssub.s32 %s17, %s24
      %s109 = sor.u32 %s107, %s108
      %p110 = scmp.eq.s32.totalorder %s109, 0
      %s112 = sadd.s32 %s111, 1
      %s113 = scalar_select %p110, %s111, %s112
      %p116 = pneg %p110
      %p117 = scmp.eq.s32.totalorder %s9, 4
      %p118 = por %p116, %p117
      %p119 = scmp.ne.s32.totalorder %s111, %s114
      %p120 = scmp.eq.s32.totalorder %s9, 0
      %p121 = por %p119, %p120
      %p122 = scmp.ne.s32.totalorder %s111, %s114
      %p123 = scmp.eq.s32.totalorder %s14, 4
      %p124 = por %p122, %p123
      %p125 = scmp.ne.s32.totalorder %s114, %s115
      %p126 = scmp.eq.s32.totalorder %s14, 0
      %p127 = por %p125, %p126
      %p128 = scmp.ne.s32.totalorder %s114, %s115
      %p129 = scmp.eq.s32.totalorder %s15, 4
      %p130 = por %p128, %p129
      %p132 = scmp.ne.s32.totalorder %s115, %s131
      %p133 = scmp.eq.s32.totalorder %s15, 0
      %p134 = por %p132, %p133
      %p135 = scmp.le.s32.totalorder 1, %s9
      %p136 = scmp.lt.s32.totalorder %s9, 6
      %p137 = pnand %p135, %p136
      %p138 = pneg %p137
      // Predicated region
      $region9: #{_lambda_.9} parent=5 // pred_check
        _
      $region10: #{_lambda_.9} parent=5 // pred_check_branch
        %140 = sbr.rel (%p137) target = $region12
      $region11: #{_lambda_.9} parent=5 // pred_region
        %s141 = ssub.s32 %s9, 1
        // Predicated region
        $region13: #{_lambda_.9} parent=11 // pred_check
          %p142 = pneg %p47
        $region14: #{_lambda_.9} parent=11 // pred_check_branch
          %144 = sbr.rel (%p142) target = $region16
        $region15: #{_lambda_.9} parent=11 // pred_region
          %s145 = smul.u32 4, %s18
          %p146 = scmp.lt.s32.totalorder %s145, 3
          %s147 = scalar_select %p146, %s145, 3
          %s148 = smul.addr %s147, 4
          %s149 = scalar_lea.vmem %s0, %s148
          %s150 = smul.u32 4, %s18
        $region16: #{_lambda_.9} parent=11 // pred_fallthru
          _
      $region12: #{_lambda_.9} parent=5 // pred_fallthru
        _
      %p151 = scmp.lt.s32.totalorder %s9, 5
      // Predicated region
      $region17: #{_lambda_.9} parent=5 // pred_check
        %p152 = pneg %p151
      $region18: #{_lambda_.9} parent=5 // pred_check_branch
        %154 = sbr.rel (%p152) target = $region20
      $region19: #{_lambda_.9} parent=5 // pred_region
        // Predicated region
        $region21: #{_lambda_.9} parent=19 // pred_check
          %p155 = pneg %p67
        $region22: #{_lambda_.9} parent=19 // pred_check_branch
          %157 = sbr.rel (%p155) target = $region24
        $region23: #{_lambda_.9} parent=19 // pred_region
          %s158 = sand.u32 %s57, 1
          %s159 = sand.u32 %s57, 1
          %s160 = smul.addr %s159, 24
          %s161 = scalar_lea.vmem [#allocation2], %s160
          %s162 = smul.u32 2, %s17
          %s163 = smul.addr %s162, 4
          %s164 = scalar_lea.vmem %s1, %s163
          // Predicated region
          $region25: #{_lambda_.9} parent=23 // pred_check
            _
          $region26: #{_lambda_.9} parent=23 // pred_check_branch
            %166 = sbr.rel (0) target = $region28
          $region27: #{_lambda_.9} parent=23 // pred_region
            // Predicated region
            $region29: #{_lambda_.9} parent=27 // pred_check
              _
            $region30: #{_lambda_.9} parent=27 // pred_check_branch
              %168 = sbr.rel (0) target = $region32
            $region31: #{_lambda_.9} parent=27 // pred_region
              // Predicated region
              $region44: #{_lambda_.9} parent=31 // pred_check
                _
              $region45: #{_lambda_.9} parent=31 // pred_check_branch
                %187 = sbr.rel (0) target = $region47
              $region46: #{_lambda_.9} parent=31 // pred_region
                loop: start=0, step=1, limit=1
                $region48: #{_lambda_.9} parent=46 // loop_pre_header
                  _
                $region49: #{_lambda_.9} parent=46 // loop_header
                  %s189 = sphi 0, %s193
                  %p190 = scmp.ge.s32.totalorder %s189, 1
                  %s194 = sphi %s164, %s164
                  %s195 = sphi %s161, %s161
                $region50: #{_lambda_.9} parent=46 // loop_header_branch
                  %192 = sbr.rel (%p190) target = $region54
                $region51: #{_lambda_.9} parent=46 // loop_body
                  %v196 = vld [vmem:[%s194] sm:$0xff]
                  %197 = vst [vmem:[%s195] sm:$0xff] %v196
                  %v198 = vld [vmem:[%s194 + $0x28] sm:$0xff]
                  %199 = vst [vmem:[%s195 + $0x8] sm:$0xff] %v198
                  %v200 = vld [vmem:[%s194 + $0x50] sm:$0xff]
                  %201 = vst [vmem:[%s195 + $0x10] sm:$0xff] %v200
                $region52: #{_lambda_.9} parent=46 // loop_footer
                  %s193 = sadd.s32 1, %s189
                $region53: #{_lambda_.9} parent=46 // loop_footer_branch
                  %188 = sbr.rel target = $region49
                $region54: #{_lambda_.9} parent=46 // loop_exit
                  _
              $region47: #{_lambda_.9} parent=31 // pred_fallthru
                _
              // Predicated region
              $region55: #{_lambda_.9} parent=31 // pred_check
                _
              $region56: #{_lambda_.9} parent=31 // pred_check_branch
                %203 = sbr.rel target = $region58
              $region57: #{_lambda_.9} parent=31 // pred_region
                _
              $region58: #{_lambda_.9} parent=31 // pred_fallthru
                _
            $region32: #{_lambda_.9} parent=27 // pred_fallthru
              _
            // Predicated region
            $region33: #{_lambda_.9} parent=27 // pred_check
              _
            $region34: #{_lambda_.9} parent=27 // pred_check_branch
              %170 = sbr.rel target = $region36
            $region35: #{_lambda_.9} parent=27 // pred_region
              loop: start=0, step=1, limit=1
              $region37: #{_lambda_.9} parent=35 // loop_pre_header
                _
              $region38: #{_lambda_.9} parent=35 // loop_header
                %s173 = sphi 0, %s177
                %p174 = scmp.ge.s32.totalorder %s173, 1
                %s178 = sphi %s164, %s164
                %s179 = sphi %s161, %s161
              $region39: #{_lambda_.9} parent=35 // loop_header_branch
                %176 = sbr.rel (%p174) target = $region43
              $region40: #{_lambda_.9} parent=35 // loop_body
                %v180 = vld [vmem:[%s178] sm:$0xff]
                %181 = vst [vmem:[%s179] sm:$0xff] %v180
                %v182 = vld [vmem:[%s178 + $0x28] sm:$0xff]
                %183 = vst [vmem:[%s179 + $0x8] sm:$0xff] %v182
                %v184 = vld [vmem:[%s178 + $0x50] sm:$0xff]
                %185 = vst [vmem:[%s179 + $0x10] sm:$0xff] %v184
              $region41: #{_lambda_.9} parent=35 // loop_footer
                %s177 = sadd.s32 1, %s173
              $region42: #{_lambda_.9} parent=35 // loop_footer_branch
                %172 = sbr.rel target = $region38
              $region43: #{_lambda_.9} parent=35 // loop_exit
                _
            $region36: #{_lambda_.9} parent=27 // pred_fallthru
              _
          $region28: #{_lambda_.9} parent=23 // pred_fallthru
            _
          %204 = vnop
        $region24: #{_lambda_.9} parent=19 // pred_fallthru
          _
        // Predicated region
        $region59: #{_lambda_.9} parent=19 // pred_check
          %p205 = pneg %p93
        $region60: #{_lambda_.9} parent=19 // pred_check_branch
          %207 = sbr.rel (%p205) target = $region62
        $region61: #{_lambda_.9} parent=19 // pred_region
          %s208 = smul.u32 2, %s17
          %p209 = scmp.lt.s32.totalorder %s208, 9
          %s210 = scalar_select %p209, %s208, 9
          %s211 = scalar_lea.vmem %s2, %s210
          %s212 = smul.u32 2, %s17
        $region62: #{_lambda_.9} parent=19 // pred_fallthru
          _
      $region20: #{_lambda_.9} parent=5 // pred_fallthru
        _
      %p213 = scmp.le.s32.totalorder 1, %s9
      %p214 = scmp.lt.s32.totalorder %s9, 6
      %p215 = pnand %p213, %p214
      %p216 = pneg %p215
      // Predicated region
      $region63: #{_lambda_.9} parent=5 // pred_check
        _
      $region64: #{_lambda_.9} parent=5 // pred_check_branch
        %218 = sbr.rel (%p215) target = $region66
      $region65: #{_lambda_.9} parent=5 // pred_region
        %s219 = ssub.s32 %s9, 1
        %s220 = sand.u32 %s60, 1
        %s221 = sand.u32 %s60, 1
        %s222 = smul.addr %s221, 24
        %s223 = scalar_lea.vmem [#allocation2], %s222
        // Predicated region
        $region67: #{_lambda_.9} parent=65 // pred_check
          %p224 = pneg %p73
        $region68: #{_lambda_.9} parent=65 // pred_check_branch
          %226 = sbr.rel (%p224) target = $region70
        $region69: #{_lambda_.9} parent=65 // pred_region
          _
        $region70: #{_lambda_.9} parent=65 // pred_fallthru
          _
        %s227 = smul.u32 4, %s18
        %p228 = scmp.lt.s32.totalorder %s227, 3
        %s229 = scalar_select %p228, %s227, 3
        %s230 = smul.addr %s229, 4
        %s231 = scalar_lea.vmem %s0, %s230
        %p232 = pneg %p47
        %p233 = pneg %p44
        %s234 = sand.u32 %s60, 1
        %s235 = sand.u32 %s60, 1
        %s236 = smul.addr %s235, 24
        %s237 = scalar_lea.vmem [#allocation2], %s236
        %p238 = pneg %p73
        %p239 = pneg %p70
        %s240 = smul.u32 2, %s19
        %p241 = scmp.lt.s32.totalorder %s240, 9
        %s242 = scalar_select %p241, %s240, 9
        %s243 = scalar_lea.vmem %s2, %s242
        %p244 = pneg %p99
        %p245 = pneg %p96
        %p246 = pneg %p127
        %p247 = pneg %p124
        %s248 = sand.u32 %s114, 1
        %s249 = sand.u32 %s114, 1
        %s250 = smul.addr %s249, 64
        %s251 = scalar_lea.vmem [#allocation3], %s250
        %s252 = smul.u32 4, %s18
        %p253 = scmp.lt.s32.totalorder %s252, 3
        %s254 = scalar_select %p253, %s252, 3
        %s255 = smul.addr %s254, 4
        %s256 = scalar_lea.vmem %s0, %s255
        %s257 = smul.u32 4, %s18
        %s258 = smul.u32 2, %s19
        %s259 = smul.u32 2, %s19
        %p260 = scmp.lt.s32.totalorder %s259, 9
        %s261 = scalar_select %p260, %s259, 9
        %s262 = scalar_lea.vmem %s2, %s261
        %s263 = smul.u32 2, %s19
        %s264 = smul.u32 4, %s18
        %s265 = smul.u32 2, %s19
        %v267 = vld [vmem:[%s256] sm:$0xf]
        %v268 = vld [vmem:[%s256 + $0x4] sm:$0xf]
        %v269 = vld [vmem:[%s256 + $0x8] sm:$0xf]
        %v270 = vld [vmem:[%s256 + $0xc] sm:$0xf]
        %v271 = vld [vmem:[%s223] sm:$0xff]
        %v272 = vld [vmem:[%s223 + $0x8] sm:$0xff]
        %v273 = vld [vmem:[%s223 + $0x10] sm:$0xff]
        %v274 = vld [vmem:[%s262] sm:$0x3]
        %v276 = vlaneseq
        %v277 = vshrl.u32 %v276, 7
        %v278 = vsub.s32 0, %v277
        %v279 = vrot.slane %v274, %v278
        %v280 = vlaneseq
        %v281 = vshrl.u32 %v280, 7
        %v282 = vsub.s32 1, %v281
        %v283 = vrot.slane %v274, %v282
        %v290 = vunpack.c.l.b16 %v267
        %v291 = vunpack.c.l.b16 %v268
        %v292 = vunpack.c.l.b16 %v269
        %v293 = vunpack.c.l.b16 %v270
        %v294 = vpack.c.b16 %v291, %v290
        %v295 = vpack.c.b16 %v293, %v292
        %v299 = vunpack.c.l.b16 %v271
        %v300 = vunpack.c.h.b16 %v271
        %v301 = vunpack.c.l.b16 %v272
        %v302 = vunpack.c.h.b16 %v272
        %v303 = vunpack.c.l.b16 %v273
        %v304 = vunpack.c.h.b16 %v273
        %v305 = vpack.c.b16 %v301, %v299
        %v306 = vpack.c.b16 %v302, %v300
        %v307 = vpack.c.b16 %v303, %v303
        %v308 = vpack.c.b16 %v304, %v304
        %vm311 = vcmask 195584
        %v313 = vsel %vm311, %v294, 0
        %v316 = vsel %vm311, %v295, 0
        %vm318 = vcmask 1043456
        %v320 = vsel %vm318, %v307, 0
        %v323 = vsel %vm318, %v308, 0
        %325 = vmatprep.subr.bf16.mxu0 %v306
        %326 = vmatpush1.bf16.msra.mxu0 %v305
        %327 = vmatprep.subr.bf16.mxu0 %v323
        %328 = vmatpush1.bf16.msra.mxu0 %v320
        %329 = vmatprep.subr.bf16.mxu0 0
        %330 = vmatpush1.bf16.msra.mxu0 0
        %331 = vmatprep.subr.bf16.mxu0 0
        %332 = vmatpush1.bf16.msra.mxu0 0
        %333 = vmatprep.subr.bf16.mxu0 0
        %334 = vmatpush1.bf16.msra.mxu0 0
        %335 = vmatprep.subr.bf16.mxu0 0
        %336 = vmatpush1.bf16.msra.mxu0 0
        %337 = vmatprep.subr.bf16.mxu0 0
        %338 = vmatpush1.bf16.msra.mxu0 0
        %339 = vmatprep.subr.bf16.mxu0 0
        %340 = vmatpush1.bf16.msra.mxu0 0
        %341 = vmatprep.subr.bf16.mxu0 0
        %342 = vmatpush1.bf16.msra.mxu0 0
        %343 = vmatprep.subr.bf16.mxu0 0
        %344 = vmatpush1.bf16.msra.mxu0 0
        %345 = vmatprep.subr.bf16.mxu0 0
        %346 = vmatpush1.bf16.msra.mxu0 0
        %347 = vmatprep.subr.bf16.mxu0 0
        %348 = vmatpush1.bf16.msra.mxu0 0
        %349 = vmatprep.subr.bf16.mxu0 0
        %350 = vmatpush1.bf16.msra.mxu0 0
        %351 = vmatprep.subr.bf16.mxu0 0
        %352 = vmatpush1.bf16.msra.mxu0 0
        %353 = vmatprep.subr.bf16.mxu0 0
        %354 = vmatpush1.bf16.msra.mxu0 0
        %355 = vmatprep.subr.bf16.mxu0 0
        %356 = vmatpush1.bf16.msra.mxu0 0
        %357 = vmatprep.mubr.bf16.mxu0 0
        %358 = vmatmul.mubr.bf16.gmra.mrb[0].mxu0 %v313
        %v359 = vpop.f32.mrb[0].mxu0
        %v360 = vadd.f32 %v279, %v359
        %v361 = vpop.f32.mrb[0].mxu0
        %v362 = vadd.f32 %v283, %v361
        %v363 = vpop.f32.mrb[0].mxu0
        %v364 = vadd.f32 %v279, %v363
        %v365 = vpop.f32.mrb[0].mxu0
        %v366 = vadd.f32 %v283, %v365
        %367 = vmatprep.mubr.bf16.mxu0 0
        %368 = vmatmul.mubr.bf16.gmra.mrb[0].mxu0 %v316
        %v369 = vpop.f32.mrb[0].mxu0
        %v370 = vadd.f32 %v279, %v369
        %v371 = vpop.f32.mrb[0].mxu0
        %v372 = vadd.f32 %v283, %v371
        %v373 = vpop.f32.mrb[0].mxu0
        %v374 = vadd.f32 %v279, %v373
        %v375 = vpop.f32.mrb[0].mxu0
        %v376 = vadd.f32 %v283, %v375
        %377 = vdwg.mxu0
        %v378 = vmax.f32 %v360, 0.0
        %v379 = vmax.f32 %v362, 0.0
        %v380 = vmax.f32 %v364, 0.0
        %v381 = vmax.f32 %v366, 0.0
        %v382 = vmax.f32 %v370, 0.0
        %v383 = vmax.f32 %v372, 0.0
        %v384 = vmax.f32 %v374, 0.0
        %v385 = vmax.f32 %v376, 0.0
        %v386 = vmin.f32 %v378, 6.0
        %v387 = vmin.f32 %v379, 6.0
        %v388 = vmin.f32 %v380, 6.0
        %v389 = vmin.f32 %v381, 6.0
        %v390 = vmin.f32 %v382, 6.0
        %v391 = vmin.f32 %v383, 6.0
        %v392 = vmin.f32 %v384, 6.0
        %v393 = vmin.f32 %v385, 6.0
        %394 = vst [vmem:[%s251] sm:$0xff] %v386
        %395 = vst [vmem:[%s251 + $0x8] sm:$0xff] %v387
        %396 = vst [vmem:[%s251 + $0x10] sm:$0xff] %v388
        %397 = vst [vmem:[%s251 + $0x18] sm:$0xff] %v389
        %398 = vst [vmem:[%s251 + $0x20] sm:$0xff] %v390
        %399 = vst [vmem:[%s251 + $0x28] sm:$0xff] %v391
        %400 = vst [vmem:[%s251 + $0x30] sm:$0xff] %v392
        %401 = vst [vmem:[%s251 + $0x38] sm:$0xff] %v393
        %s402 = sand.u32 %s114, 1
        %s403 = sand.u32 %s114, 1
        %s404 = smul.addr %s403, 64
        %s405 = scalar_lea.vmem [#allocation3], %s404
        // Predicated region
        $region71: #{_lambda_.9} parent=65 // pred_check
          %p406 = pneg %p124
        $region72: #{_lambda_.9} parent=65 // pred_check_branch
          %408 = sbr.rel (%p406) target = $region74
        $region73: #{_lambda_.9} parent=65 // pred_region
          %s409 = smul.u32 4, %s18
          %s410 = smul.u32 2, %s19
          %s411 = smul.addr %s409, 10
          %s412 = sadd.s32 %s410, %s411
          %s413 = smul.addr %s412, 8
          %s414 = scalar_lea.vmem %s3, %s413
          // Predicated region
          $region75: #{_lambda_.9} parent=73 // pred_check
            _
          $region76: #{_lambda_.9} parent=73 // pred_check_branch
            %416 = sbr.rel (0) target = $region78
          $region77: #{_lambda_.9} parent=73 // pred_region
            // Predicated region
            $region79: #{_lambda_.9} parent=77 // pred_check
              _
            $region80: #{_lambda_.9} parent=77 // pred_check_branch
              %418 = sbr.rel (0) target = $region82
            $region81: #{_lambda_.9} parent=77 // pred_region
              loop: start=0, step=1, limit=1
              $region83: #{_lambda_.9} parent=81 // loop_pre_header
                _
              $region84: #{_lambda_.9} parent=81 // loop_header
                %s420 = sphi 0, %s424
                %p421 = scmp.ge.s32.totalorder %s420, 1
                %s425 = sphi %s405, %s405
                %s426 = sphi %s414, %s414
              $region85: #{_lambda_.9} parent=81 // loop_header_branch
                %423 = sbr.rel (%p421) target = $region89
              $region86: #{_lambda_.9} parent=81 // loop_body
                %v427 = vld [vmem:[%s425] sm:$0xff]
                %428 = vst [vmem:[%s426] sm:$0xff] %v427
                %v429 = vld [vmem:[%s425 + $0x8] sm:$0xff]
                %430 = vst [vmem:[%s426 + $0x8] sm:$0xff] %v429
                %v431 = vld [vmem:[%s425 + $0x10] sm:$0xff]
                %432 = vst [vmem:[%s426 + $0x50] sm:$0xff] %v431
                %v433 = vld [vmem:[%s425 + $0x18] sm:$0xff]
                %434 = vst [vmem:[%s426 + $0x58] sm:$0xff] %v433
                %v435 = vld [vmem:[%s425 + $0x20] sm:$0xff]
                %436 = vst [vmem:[%s426 + $0xa0] sm:$0xff] %v435
                %v437 = vld [vmem:[%s425 + $0x28] sm:$0xff]
                %438 = vst [vmem:[%s426 + $0xa8] sm:$0xff] %v437
                %v439 = vld [vmem:[%s425 + $0x30] sm:$0xff]
                %440 = vst [vmem:[%s426 + $0xf0] sm:$0xff] %v439
                %v441 = vld [vmem:[%s425 + $0x38] sm:$0xff]
                %442 = vst [vmem:[%s426 + $0xf8] sm:$0xff] %v441
              $region87: #{_lambda_.9} parent=81 // loop_footer
                %s424 = sadd.s32 1, %s420
              $region88: #{_lambda_.9} parent=81 // loop_footer_branch
                %419 = sbr.rel target = $region84
              $region89: #{_lambda_.9} parent=81 // loop_exit
                _
            $region82: #{_lambda_.9} parent=77 // pred_fallthru
              _
            // Predicated region
            $region90: #{_lambda_.9} parent=77 // pred_check
              _
            $region91: #{_lambda_.9} parent=77 // pred_check_branch
              %444 = sbr.rel target = $region93
            $region92: #{_lambda_.9} parent=77 // pred_region
              _
            $region93: #{_lambda_.9} parent=77 // pred_fallthru
              _
          $region78: #{_lambda_.9} parent=73 // pred_fallthru
            _
          %445 = vnop
        $region74: #{_lambda_.9} parent=65 // pred_fallthru
          _
      $region66: #{_lambda_.9} parent=5 // pred_fallthru
        _
      %p446 = scmp.le.s32.totalorder 2, %s9
      // Predicated region
      $region94: #{_lambda_.9} parent=5 // pred_check
        %p447 = pneg %p446
      $region95: #{_lambda_.9} parent=5 // pred_check_branch
        %449 = sbr.rel (%p447) target = $region97
      $region96: #{_lambda_.9} parent=5 // pred_region
        %s450 = ssub.s32 %s9, 2
        // Predicated region
        $region98: #{_lambda_.9} parent=96 // pred_check
          %p451 = pneg %p130
        $region99: #{_lambda_.9} parent=96 // pred_check_branch
          %453 = sbr.rel (%p451) target = $region101
        $region100: #{_lambda_.9} parent=96 // pred_region
          %s454 = sand.u32 %s115, 1
          %s455 = sand.u32 %s115, 1
          %s456 = smul.addr %s455, 64
          %s457 = scalar_lea.vmem [#allocation3], %s456
        $region101: #{_lambda_.9} parent=96 // pred_fallthru
          _
      $region97: #{_lambda_.9} parent=5 // pred_fallthru
        _
    $region6: #{_lambda_.9} parent=1 // loop_footer
      %s13 = sadd.s32 1, %s9
    $region7: #{_lambda_.9} parent=1 // loop_footer_branch
      %8 = sbr.rel target = $region3
    $region8: #{_lambda_.9} parent=1 // loop_exit
      _

// kernel: _lambda_.7
$region0: #{_lambda_.7}
  #allocation0 [shape = 'u32[]', space=smem, size = 0x4, offset = 0x4, fixed_abs, tag = 'smem constant byte address 0x4 - core index']
  #allocation1 [shape = 'u32[144,128]{1,0:T(1,128)}', space=vmem, size = 0x12000, scoped, tag = 'internal scratch']
  %s0 = inlined_call_operand.vmem [shape: bf16[2,10,5,16], index: 0, kind: input, shape index: {}, may-alias: {0,2,4}]
  %s1 = inlined_call_operand.vmem [shape: bf16[2,10,5,16], index: 1, kind: input, shape index: {}, may-alias: {1,3,5}]
  %s2 = inlined_call_operand.vmem [shape: bf16[2,10,5,16], index: 2, kind: input, shape index: {}, may-alias: {0,2,4}]
  %s3 = inlined_call_operand.vmem [shape: bf16[2,10,5,16], index: 3, kind: input, shape index: {}, may-alias: {1,3,5}]
  %s4 = inlined_call_operand.vmem [shape: bf16[2,10,5,16], index: 4, kind: input, shape index: {}, may-alias: {0,2,4}]
  %s5 = inlined_call_operand.vmem [shape: bf16[2,10,5,16], index: 5, kind: input, shape index: {}, may-alias: {1,3,5}]
  %s6 = inlined_call_operand.vmem [shape: bf16[16,96], index: 6, kind: input, shape index: {}]
  %s7 = inlined_call_operand.vmem [shape: f32[1,96], index: 7, kind: input, shape index: {}]
  %s8 = inlined_call_operand.vmem [shape: f32[9,96], index: 8, kind: input, shape index: {}]
  %s9 = inlined_call_operand.vmem [shape: f32[1,96], index: 9, kind: input, shape index: {}]
  %s10 = inlined_call_operand.vmem [shape: bf16[96,24], index: 10, kind: input, shape index: {}]
  %s11 = inlined_call_operand.vmem [shape: f32[1,24], index: 11, kind: input, shape index: {}]
  %s12 = inlined_call_operand.vmem [shape: bf16[2,4,4,24], index: 12, kind: output, shape index: {}]
  %s13 = sld [smem:[#allocation0]]
  $region81: #{_lambda_.7} parent=0
    _
  %s15 = ssub.s32 1, %s13
  %s16 = scalar_select 0, %s15, %s13
  loop: start=0, step=1, limit=10
  $region2: #{_lambda_.7} parent=0 // loop_pre_header
    _
  $region3: #{_lambda_.7} parent=0 // loop_header
    %s18 = sphi 0, %s22
    %p19 = scmp.ge.s32.totalorder %s18, 10
    %s25 = sphi 0, %s37
    %s26 = sphi 0, %s33
    %s27 = sphi 0, %s25
    %s28 = sphi 0, %s26
    %s29 = sphi 0, %s27
    %s30 = sphi 0, %s28
    %s44 = sphi 0, %s46
    %s47 = sphi 0, %s44
    %s48 = sphi 0, %s47
    %s64 = sphi 0, %s48
    %s74 = sphi 0, %s76
    %s77 = sphi 0, %s74
    %s78 = sphi 0, %s77
    %s94 = sphi 0, %s78
    %s106 = sphi 0, %s108
    %s109 = sphi 0, %s106
    %s110 = sphi 0, %s109
    %s126 = sphi 0, %s110
    %s138 = sphi 0, %s140
    %s141 = sphi 0, %s138
    %s142 = sphi 0, %s141
    %s158 = sphi 0, %s142
    %s170 = sphi 0, %s172
    %s173 = sphi 0, %s170
    %s174 = sphi 0, %s173
    %s190 = sphi 0, %s174
    %s202 = sphi 0, %s204
    %s205 = sphi 0, %s202
    %s206 = sphi 0, %s205
    %s222 = sphi 0, %s206
    %s226 = sphi 0, %s226
    %s228 = sphi 0, %s226
    %s229 = sphi 0, %s228
    %s243 = sphi 0, %s229
    %s247 = sphi 0, %s247
    %s249 = sphi 0, %s247
    %s250 = sphi 0, %s249
    %s264 = sphi 0, %s250
    %s268 = sphi 0, %s268
    %s270 = sphi 0, %s268
    %s271 = sphi 0, %s270
    %s285 = sphi 0, %s271
    %s289 = sphi 0, %s289
    %s291 = sphi 0, %s289
    %s292 = sphi 0, %s291
    %s306 = sphi 0, %s292
    %s310 = sphi 0, %s310
    %s312 = sphi 0, %s310
    %s313 = sphi 0, %s312
    %s327 = sphi 0, %s313
    %s331 = sphi 0, %s331
    %s333 = sphi 0, %s331
    %s334 = sphi 0, %s333
    %s348 = sphi 0, %s334
    %s356 = sphi 0, %s358
    %s359 = sphi 0, %s356
    %s360 = sphi 0, %s359
    %s376 = sphi 0, %s360
  $region4: #{_lambda_.7} parent=0 // loop_header_branch
    %21 = sbr.rel (%p19) target = $region8
  $region5: #{_lambda_.7} parent=0 // loop_body
    %s23 = ssub.s32 %s18, 1
    %s24 = ssub.s32 %s18, 2
    %s31 = sadd.s32 1, %s26
    %p32 = scmp.ge.s32.totalorder %s31, 4
    %s33 = scalar_select %p32, 0, %s31
    %s34 = sadd.s32 1, %s25
    %s35 = scalar_select %p32, %s34, %s25
    %p36 = scmp.ge.s32.totalorder %s35, 2
    %s37 = scalar_select %p36, 0, %s35
    %s38 = smul.u32 %s26, 2
    %s39 = smul.u32 %s33, 2
    %s40 = ssub.s32 %s25, %s37
    %s41 = ssub.s32 %s38, %s39
    %s42 = sor.u32 %s40, %s41
    %p43 = scmp.eq.s32.totalorder %s42, 0
    %s45 = sadd.s32 %s44, 1
    %s46 = scalar_select %p43, %s44, %s45
    %p49 = pneg %p43
    %p50 = scmp.eq.s32.totalorder %s18, 7
    %p51 = por %p49, %p50
    %p52 = scmp.ne.s32.totalorder %s44, %s47
    %p53 = scmp.eq.s32.totalorder %s18, 0
    %p54 = por %p52, %p53
    %p55 = scmp.ne.s32.totalorder %s44, %s47
    %p56 = scmp.eq.s32.totalorder %s23, 7
    %p57 = por %p55, %p56
    %p58 = scmp.ne.s32.totalorder %s47, %s48
    %p59 = scmp.eq.s32.totalorder %s23, 0
    %p60 = por %p58, %p59
    %p61 = scmp.ne.s32.totalorder %s47, %s48
    %p62 = scmp.eq.s32.totalorder %s24, 7
    %p63 = por %p61, %p62
    %p65 = scmp.ne.s32.totalorder %s48, %s64
    %p66 = scmp.eq.s32.totalorder %s24, 0
    %p67 = por %p65, %p66
    %s68 = smul.u32 %s26, 2
    %s69 = smul.u32 %s33, 2
    %s70 = ssub.s32 %s25, %s37
    %s71 = ssub.s32 %s68, %s69
    %s72 = sor.u32 %s70, %s71
    %p73 = scmp.eq.s32.totalorder %s72, 0
    %s75 = sadd.s32 %s74, 1
    %s76 = scalar_select %p73, %s74, %s75
    %p79 = pneg %p73
    %p80 = scmp.eq.s32.totalorder %s18, 7
    %p81 = por %p79, %p80
    %p82 = scmp.ne.s32.totalorder %s74, %s77
    %p83 = scmp.eq.s32.totalorder %s18, 0
    %p84 = por %p82, %p83
    %p85 = scmp.ne.s32.totalorder %s74, %s77
    %p86 = scmp.eq.s32.totalorder %s23, 7
    %p87 = por %p85, %p86
    %p88 = scmp.ne.s32.totalorder %s77, %s78
    %p89 = scmp.eq.s32.totalorder %s23, 0
    %p90 = por %p88, %p89
    %p91 = scmp.ne.s32.totalorder %s77, %s78
    %p92 = scmp.eq.s32.totalorder %s24, 7
    %p93 = por %p91, %p92
    %p95 = scmp.ne.s32.totalorder %s78, %s94
    %p96 = scmp.eq.s32.totalorder %s24, 0
    %p97 = por %p95, %p96
    %s98 = smul.u32 %s26, 2
    %s99 = sadd.s32 %s98, 1
    %s100 = smul.u32 %s33, 2
    %s101 = sadd.s32 %s100, 1
    %s102 = ssub.s32 %s25, %s37
    %s103 = ssub.s32 %s99, %s101
    %s104 = sor.u32 %s102, %s103
    %p105 = scmp.eq.s32.totalorder %s104, 0
    %s107 = sadd.s32 %s106, 1
    %s108 = scalar_select %p105, %s106, %s107
    %p111 = pneg %p105
    %p112 = scmp.eq.s32.totalorder %s18, 7
    %p113 = por %p111, %p112
    %p114 = scmp.ne.s32.totalorder %s106, %s109
    %p115 = scmp.eq.s32.totalorder %s18, 0
    %p116 = por %p114, %p115
    %p117 = scmp.ne.s32.totalorder %s106, %s109
    %p118 = scmp.eq.s32.totalorder %s23, 7
    %p119 = por %p117, %p118
    %p120 = scmp.ne.s32.totalorder %s109, %s110
    %p121 = scmp.eq.s32.totalorder %s23, 0
    %p122 = por %p120, %p121
    %p123 = scmp.ne.s32.totalorder %s109, %s110
    %p124 = scmp.eq.s32.totalorder %s24, 7
    %p125 = por %p123, %p124
    %p127 = scmp.ne.s32.totalorder %s110, %s126
    %p128 = scmp.eq.s32.totalorder %s24, 0
    %p129 = por %p127, %p128
    %s130 = smul.u32 %s26, 2
    %s131 = sadd.s32 %s130, 1
    %s132 = smul.u32 %s33, 2
    %s133 = sadd.s32 %s132, 1
    %s134 = ssub.s32 %s25, %s37
    %s135 = ssub.s32 %s131, %s133
    %s136 = sor.u32 %s134, %s135
    %p137 = scmp.eq.s32.totalorder %s136, 0
    %s139 = sadd.s32 %s138, 1
    %s140 = scalar_select %p137, %s138, %s139
    %p143 = pneg %p137
    %p144 = scmp.eq.s32.totalorder %s18, 7
    %p145 = por %p143, %p144
    %p146 = scmp.ne.s32.totalorder %s138, %s141
    %p147 = scmp.eq.s32.totalorder %s18, 0
    %p148 = por %p146, %p147
    %p149 = scmp.ne.s32.totalorder %s138, %s141
    %p150 = scmp.eq.s32.totalorder %s23, 7
    %p151 = por %p149, %p150
    %p152 = scmp.ne.s32.totalorder %s141, %s142
    %p153 = scmp.eq.s32.totalorder %s23, 0
    %p154 = por %p152, %p153
    %p155 = scmp.ne.s32.totalorder %s141, %s142
    %p156 = scmp.eq.s32.totalorder %s24, 7
    %p157 = por %p155, %p156
    %p159 = scmp.ne.s32.totalorder %s142, %s158
    %p160 = scmp.eq.s32.totalorder %s24, 0
    %p161 = por %p159, %p160
    %s162 = smul.u32 %s26, 2
    %s163 = sadd.s32 %s162, 2
    %s164 = smul.u32 %s33, 2
    %s165 = sadd.s32 %s164, 2
    %s166 = ssub.s32 %s25, %s37
    %s167 = ssub.s32 %s163, %s165
    %s168 = sor.u32 %s166, %s167
    %p169 = scmp.eq.s32.totalorder %s168, 0
    %s171 = sadd.s32 %s170, 1
    %s172 = scalar_select %p169, %s170, %s171
    %p175 = pneg %p169
    %p176 = scmp.eq.s32.totalorder %s18, 7
    %p177 = por %p175, %p176
    %p178 = scmp.ne.s32.totalorder %s170, %s173
    %p179 = scmp.eq.s32.totalorder %s18, 0
    %p180 = por %p178, %p179
    %p181 = scmp.ne.s32.totalorder %s170, %s173
    %p182 = scmp.eq.s32.totalorder %s23, 7
    %p183 = por %p181, %p182
    %p184 = scmp.ne.s32.totalorder %s173, %s174
    %p185 = scmp.eq.s32.totalorder %s23, 0
    %p186 = por %p184, %p185
    %p187 = scmp.ne.s32.totalorder %s173, %s174
    %p188 = scmp.eq.s32.totalorder %s24, 7
    %p189 = por %p187, %p188
    %p191 = scmp.ne.s32.totalorder %s174, %s190
    %p192 = scmp.eq.s32.totalorder %s24, 0
    %p193 = por %p191, %p192
    %s194 = smul.u32 %s26, 2
    %s195 = sadd.s32 %s194, 2
    %s196 = smul.u32 %s33, 2
    %s197 = sadd.s32 %s196, 2
    %s198 = ssub.s32 %s25, %s37
    %s199 = ssub.s32 %s195, %s197
    %s200 = sor.u32 %s198, %s199
    %p201 = scmp.eq.s32.totalorder %s200, 0
    %s203 = sadd.s32 %s202, 1
    %s204 = scalar_select %p201, %s202, %s203
    %p207 = pneg %p201
    %p208 = scmp.eq.s32.totalorder %s18, 7
    %p209 = por %p207, %p208
    %p210 = scmp.ne.s32.totalorder %s202, %s205
    %p211 = scmp.eq.s32.totalorder %s18, 0
    %p212 = por %p210, %p211
    %p213 = scmp.ne.s32.totalorder %s202, %s205
    %p214 = scmp.eq.s32.totalorder %s23, 7
    %p215 = por %p213, %p214
    %p216 = scmp.ne.s32.totalorder %s205, %s206
    %p217 = scmp.eq.s32.totalorder %s23, 0
    %p218 = por %p216, %p217
    %p219 = scmp.ne.s32.totalorder %s205, %s206
    %p220 = scmp.eq.s32.totalorder %s24, 7
    %p221 = por %p219, %p220
    %p223 = scmp.ne.s32.totalorder %s206, %s222
    %p224 = scmp.eq.s32.totalorder %s24, 0
    %p225 = por %p223, %p224
    %s227 = sadd.s32 %s226, 1
    %p230 = scmp.eq.s32.totalorder %s18, 7
    %p231 = scmp.ne.s32.totalorder %s226, %s228
    %p232 = scmp.eq.s32.totalorder %s18, 0
    %p233 = por %p231, %p232
    %p234 = scmp.ne.s32.totalorder %s226, %s228
    %p235 = scmp.eq.s32.totalorder %s23, 7
    %p236 = por %p234, %p235
    %p237 = scmp.ne.s32.totalorder %s228, %s229
    %p238 = scmp.eq.s32.totalorder %s23, 0
    %p239 = por %p237, %p238
    %p240 = scmp.ne.s32.totalorder %s228, %s229
    %p241 = scmp.eq.s32.totalorder %s24, 7
    %p242 = por %p240, %p241
    %p244 = scmp.ne.s32.totalorder %s229, %s243
    %p245 = scmp.eq.s32.totalorder %s24, 0
    %p246 = por %p244, %p245
    %s248 = sadd.s32 %s247, 1
    %p251 = scmp.eq.s32.totalorder %s18, 7
    %p252 = scmp.ne.s32.totalorder %s247, %s249
    %p253 = scmp.eq.s32.totalorder %s18, 0
    %p254 = por %p252, %p253
    %p255 = scmp.ne.s32.totalorder %s247, %s249
    %p256 = scmp.eq.s32.totalorder %s23, 7
    %p257 = por %p255, %p256
    %p258 = scmp.ne.s32.totalorder %s249, %s250
    %p259 = scmp.eq.s32.totalorder %s23, 0
    %p260 = por %p258, %p259
    %p261 = scmp.ne.s32.totalorder %s249, %s250
    %p262 = scmp.eq.s32.totalorder %s24, 7
    %p263 = por %p261, %p262
    %p265 = scmp.ne.s32.totalorder %s250, %s264
    %p266 = scmp.eq.s32.totalorder %s24, 0
    %p267 = por %p265, %p266
    %s269 = sadd.s32 %s268, 1
    %p272 = scmp.eq.s32.totalorder %s18, 7
    %p273 = scmp.ne.s32.totalorder %s268, %s270
    %p274 = scmp.eq.s32.totalorder %s18, 0
    %p275 = por %p273, %p274
    %p276 = scmp.ne.s32.totalorder %s268, %s270
    %p277 = scmp.eq.s32.totalorder %s23, 7
    %p278 = por %p276, %p277
    %p279 = scmp.ne.s32.totalorder %s270, %s271
    %p280 = scmp.eq.s32.totalorder %s23, 0
    %p281 = por %p279, %p280
    %p282 = scmp.ne.s32.totalorder %s270, %s271
    %p283 = scmp.eq.s32.totalorder %s24, 7
    %p284 = por %p282, %p283
    %p286 = scmp.ne.s32.totalorder %s271, %s285
    %p287 = scmp.eq.s32.totalorder %s24, 0
    %p288 = por %p286, %p287
    %s290 = sadd.s32 %s289, 1
    %p293 = scmp.eq.s32.totalorder %s18, 7
    %p294 = scmp.ne.s32.totalorder %s289, %s291
    %p295 = scmp.eq.s32.totalorder %s18, 0
    %p296 = por %p294, %p295
    %p297 = scmp.ne.s32.totalorder %s289, %s291
    %p298 = scmp.eq.s32.totalorder %s23, 7
    %p299 = por %p297, %p298
    %p300 = scmp.ne.s32.totalorder %s291, %s292
    %p301 = scmp.eq.s32.totalorder %s23, 0
    %p302 = por %p300, %p301
    %p303 = scmp.ne.s32.totalorder %s291, %s292
    %p304 = scmp.eq.s32.totalorder %s24, 7
    %p305 = por %p303, %p304
    %p307 = scmp.ne.s32.totalorder %s292, %s306
    %p308 = scmp.eq.s32.totalorder %s24, 0
    %p309 = por %p307, %p308
    %s311 = sadd.s32 %s310, 1
    %p314 = scmp.eq.s32.totalorder %s18, 7
    %p315 = scmp.ne.s32.totalorder %s310, %s312
    %p316 = scmp.eq.s32.totalorder %s18, 0
    %p317 = por %p315, %p316
    %p318 = scmp.ne.s32.totalorder %s310, %s312
    %p319 = scmp.eq.s32.totalorder %s23, 7
    %p320 = por %p318, %p319
    %p321 = scmp.ne.s32.totalorder %s312, %s313
    %p322 = scmp.eq.s32.totalorder %s23, 0
    %p323 = por %p321, %p322
    %p324 = scmp.ne.s32.totalorder %s312, %s313
    %p325 = scmp.eq.s32.totalorder %s24, 7
    %p326 = por %p324, %p325
    %p328 = scmp.ne.s32.totalorder %s313, %s327
    %p329 = scmp.eq.s32.totalorder %s24, 0
    %p330 = por %p328, %p329
    %s332 = sadd.s32 %s331, 1
    %p335 = scmp.eq.s32.totalorder %s18, 7
    %p336 = scmp.ne.s32.totalorder %s331, %s333
    %p337 = scmp.eq.s32.totalorder %s18, 0
    %p338 = por %p336, %p337
    %p339 = scmp.ne.s32.totalorder %s331, %s333
    %p340 = scmp.eq.s32.totalorder %s23, 7
    %p341 = por %p339, %p340
    %p342 = scmp.ne.s32.totalorder %s333, %s334
    %p343 = scmp.eq.s32.totalorder %s23, 0
    %p344 = por %p342, %p343
    %p345 = scmp.ne.s32.totalorder %s333, %s334
    %p346 = scmp.eq.s32.totalorder %s24, 7
    %p347 = por %p345, %p346
    %p349 = scmp.ne.s32.totalorder %s334, %s348
    %p350 = scmp.eq.s32.totalorder %s24, 0
    %p351 = por %p349, %p350
    %s352 = ssub.s32 %s25, %s37
    %s353 = ssub.s32 %s26, %s33
    %s354 = sor.u32 %s352, %s353
    %p355 = scmp.eq.s32.totalorder %s354, 0
    %s357 = sadd.s32 %s356, 1
    %s358 = scalar_select %p355, %s356, %s357
    %p361 = pneg %p355
    %p362 = scmp.eq.s32.totalorder %s18, 7
    %p363 = por %p361, %p362
    %p364 = scmp.ne.s32.totalorder %s356, %s359
    %p365 = scmp.eq.s32.totalorder %s18, 0
    %p366 = por %p364, %p365
    %p367 = scmp.ne.s32.totalorder %s356, %s359
    %p368 = scmp.eq.s32.totalorder %s23, 7
    %p369 = por %p367, %p368
    %p370 = scmp.ne.s32.totalorder %s359, %s360
    %p371 = scmp.eq.s32.totalorder %s23, 0
    %p372 = por %p370, %p371
    %p373 = scmp.ne.s32.totalorder %s359, %s360
    %p374 = scmp.eq.s32.totalorder %s24, 7
    %p375 = por %p373, %p374
    %p377 = scmp.ne.s32.totalorder %s360, %s376
    %p378 = scmp.eq.s32.totalorder %s24, 0
    %p379 = por %p377, %p378
    %p380 = scmp.le.s32.totalorder 1, %s18
    %p381 = scmp.lt.s32.totalorder %s18, 9
    %p382 = pnand %p380, %p381
    %p383 = pneg %p382
    // Predicated region
    $region9: #{_lambda_.7} parent=5 // pred_check
      _
    $region10: #{_lambda_.7} parent=5 // pred_check_branch
      %385 = sbr.rel (%p382) target = $region12
    $region11: #{_lambda_.7} parent=5 // pred_region
      %s386 = ssub.s32 %s18, 1
      // Predicated region
      $region13: #{_lambda_.7} parent=11 // pred_check
        %p387 = pneg %p239
      $region14: #{_lambda_.7} parent=11 // pred_check_branch
        %389 = sbr.rel (%p387) target = $region16
      $region15: #{_lambda_.7} parent=11 // pred_region
        _
      $region16: #{_lambda_.7} parent=11 // pred_fallthru
        _
      // Predicated region
      $region17: #{_lambda_.7} parent=11 // pred_check
        %p390 = pneg %p260
      $region18: #{_lambda_.7} parent=11 // pred_check_branch
        %392 = sbr.rel (%p390) target = $region20
      $region19: #{_lambda_.7} parent=11 // pred_region
        _
      $region20: #{_lambda_.7} parent=11 // pred_fallthru
        _
      // Predicated region
      $region21: #{_lambda_.7} parent=11 // pred_check
        %p393 = pneg %p281
      $region22: #{_lambda_.7} parent=11 // pred_check_branch
        %395 = sbr.rel (%p393) target = $region24
      $region23: #{_lambda_.7} parent=11 // pred_region
        _
      $region24: #{_lambda_.7} parent=11 // pred_fallthru
        _
      // Predicated region
      $region25: #{_lambda_.7} parent=11 // pred_check
        %p396 = pneg %p302
      $region26: #{_lambda_.7} parent=11 // pred_check_branch
        %398 = sbr.rel (%p396) target = $region28
      $region27: #{_lambda_.7} parent=11 // pred_region
        _
      $region28: #{_lambda_.7} parent=11 // pred_fallthru
        _
      // Predicated region
      $region29: #{_lambda_.7} parent=11 // pred_check
        %p399 = pneg %p323
      $region30: #{_lambda_.7} parent=11 // pred_check_branch
        %401 = sbr.rel (%p399) target = $region32
      $region31: #{_lambda_.7} parent=11 // pred_region
        _
      $region32: #{_lambda_.7} parent=11 // pred_fallthru
        _
      // Predicated region
      $region33: #{_lambda_.7} parent=11 // pred_check
        %p402 = pneg %p344
      $region34: #{_lambda_.7} parent=11 // pred_check_branch
        %404 = sbr.rel (%p402) target = $region36
      $region35: #{_lambda_.7} parent=11 // pred_region
        _
      $region36: #{_lambda_.7} parent=11 // pred_fallthru
        _
    $region12: #{_lambda_.7} parent=5 // pred_fallthru
      _
    %p405 = scmp.lt.s32.totalorder %s18, 8
    // Predicated region
    $region37: #{_lambda_.7} parent=5 // pred_check
      %p406 = pneg %p405
    $region38: #{_lambda_.7} parent=5 // pred_check_branch
      %408 = sbr.rel (%p406) target = $region40
    $region39: #{_lambda_.7} parent=5 // pred_region
      // Predicated region
      $region41: #{_lambda_.7} parent=39 // pred_check
        %p409 = pneg %p54
      $region42: #{_lambda_.7} parent=39 // pred_check_branch
        %411 = sbr.rel (%p409) target = $region44
      $region43: #{_lambda_.7} parent=39 // pred_region
        %s412 = smul.u32 %s26, 2
        %p413 = scmp.lt.s32.totalorder %s25, 1
        %s414 = scalar_select %p413, %s25, 1
        %p415 = scmp.lt.s32.totalorder %s412, 9
        %s416 = scalar_select %p415, %s412, 9
        %s417 = smul.addr %s414, 10
        %s418 = sadd.s32 %s416, %s417
        %s419 = smul.addr %s418, 4
        %s420 = scalar_lea.vmem %s0, %s419
        %s421 = smul.u32 %s26, 2
      $region44: #{_lambda_.7} parent=39 // pred_fallthru
        _
      // Predicated region
      $region45: #{_lambda_.7} parent=39 // pred_check
        %p422 = pneg %p84
      $region46: #{_lambda_.7} parent=39 // pred_check_branch
        %424 = sbr.rel (%p422) target = $region48
      $region47: #{_lambda_.7} parent=39 // pred_region
        %s425 = smul.u32 %s26, 2
        %p426 = scmp.lt.s32.totalorder %s25, 1
        %s427 = scalar_select %p426, %s25, 1
        %p428 = scmp.lt.s32.totalorder %s425, 9
        %s429 = scalar_select %p428, %s425, 9
        %s430 = smul.addr %s427, 10
        %s431 = sadd.s32 %s429, %s430
        %s432 = smul.addr %s431, 4
        %s433 = scalar_lea.vmem %s1, %s432
        %s434 = smul.u32 %s26, 2
      $region48: #{_lambda_.7} parent=39 // pred_fallthru
        _
      // Predicated region
      $region49: #{_lambda_.7} parent=39 // pred_check
        %p435 = pneg %p116
      $region50: #{_lambda_.7} parent=39 // pred_check_branch
        %437 = sbr.rel (%p435) target = $region52
      $region51: #{_lambda_.7} parent=39 // pred_region
        %s438 = smul.u32 %s26, 2
        %s439 = sadd.s32 %s438, 1
        %p440 = scmp.lt.s32.totalorder %s25, 1
        %s441 = scalar_select %p440, %s25, 1
        %p442 = scmp.lt.s32.totalorder %s439, 9
        %s443 = scalar_select %p442, %s439, 9
        %s444 = smul.addr %s441, 10
        %s445 = sadd.s32 %s443, %s444
        %s446 = smul.addr %s445, 4
        %s447 = scalar_lea.vmem %s2, %s446
        %s448 = smul.u32 %s26, 2
        %s449 = sadd.s32 %s448, 1
      $region52: #{_lambda_.7} parent=39 // pred_fallthru
        _
      // Predicated region
      $region53: #{_lambda_.7} parent=39 // pred_check
        %p450 = pneg %p148
      $region54: #{_lambda_.7} parent=39 // pred_check_branch
        %452 = sbr.rel (%p450) target = $region56
      $region55: #{_lambda_.7} parent=39 // pred_region
        %s453 = smul.u32 %s26, 2
        %s454 = sadd.s32 %s453, 1
        %p455 = scmp.lt.s32.totalorder %s25, 1
        %s456 = scalar_select %p455, %s25, 1
        %p457 = scmp.lt.s32.totalorder %s454, 9
        %s458 = scalar_select %p457, %s454, 9
        %s459 = smul.addr %s456, 10
        %s460 = sadd.s32 %s458, %s459
        %s461 = smul.addr %s460, 4
        %s462 = scalar_lea.vmem %s3, %s461
        %s463 = smul.u32 %s26, 2
        %s464 = sadd.s32 %s463, 1
      $region56: #{_lambda_.7} parent=39 // pred_fallthru
        _
      // Predicated region
      $region57: #{_lambda_.7} parent=39 // pred_check
        %p465 = pneg %p180
      $region58: #{_lambda_.7} parent=39 // pred_check_branch
        %467 = sbr.rel (%p465) target = $region60
      $region59: #{_lambda_.7} parent=39 // pred_region
        %s468 = smul.u32 %s26, 2
        %s469 = sadd.s32 %s468, 2
        %p470 = scmp.lt.s32.totalorder %s25, 1
        %s471 = scalar_select %p470, %s25, 1
        %p472 = scmp.lt.s32.totalorder %s469, 9
        %s473 = scalar_select %p472, %s469, 9
        %s474 = smul.addr %s471, 10
        %s475 = sadd.s32 %s473, %s474
        %s476 = smul.addr %s475, 4
        %s477 = scalar_lea.vmem %s4, %s476
        %s478 = smul.u32 %s26, 2
        %s479 = sadd.s32 %s478, 2
      $region60: #{_lambda_.7} parent=39 // pred_fallthru
        _
      // Predicated region
      $region61: #{_lambda_.7} parent=39 // pred_check
        %p480 = pneg %p212
      $region62: #{_lambda_.7} parent=39 // pred_check_branch
        %482 = sbr.rel (%p480) target = $region64
      $region63: #{_lambda_.7} parent=39 // pred_region
        %s483 = smul.u32 %s26, 2
        %s484 = sadd.s32 %s483, 2
        %p485 = scmp.lt.s32.totalorder %s25, 1
        %s486 = scalar_select %p485, %s25, 1
        %p487 = scmp.lt.s32.totalorder %s484, 9
        %s488 = scalar_select %p487, %s484, 9
        %s489 = smul.addr %s486, 10
        %s490 = sadd.s32 %s488, %s489
        %s491 = smul.addr %s490, 4
        %s492 = scalar_lea.vmem %s5, %s491
        %s493 = smul.u32 %s26, 2
        %s494 = sadd.s32 %s493, 2
      $region64: #{_lambda_.7} parent=39 // pred_fallthru
        _
    $region40: #{_lambda_.7} parent=5 // pred_fallthru
      _
    %p495 = scmp.le.s32.totalorder 1, %s18
    %p496 = scmp.lt.s32.totalorder %s18, 9
    %p497 = pnand %p495, %p496
    %p498 = pneg %p497
    // Predicated region
    $region65: #{_lambda_.7} parent=5 // pred_check
      _
    $region66: #{_lambda_.7} parent=5 // pred_check_branch
      %500 = sbr.rel (%p497) target = $region68
    $region67: #{_lambda_.7} parent=5 // pred_region
      %s501 = ssub.s32 %s18, 1
      %s502 = smul.u32 %s28, 2
      %p503 = scmp.lt.s32.totalorder %s27, 1
      %s504 = scalar_select %p503, %s27, 1
      %p505 = scmp.lt.s32.totalorder %s502, 9
      %s506 = scalar_select %p505, %s502, 9
      %s507 = smul.addr %s504, 10
      %s508 = sadd.s32 %s506, %s507
      %s509 = smul.addr %s508, 4
      %s510 = scalar_lea.vmem %s0, %s509
      %p511 = pneg %p60
      %p512 = pneg %p57
      %s513 = smul.u32 %s28, 2
      %p514 = scmp.lt.s32.totalorder %s27, 1
      %s515 = scalar_select %p514, %s27, 1
      %p516 = scmp.lt.s32.totalorder %s513, 9
      %s517 = scalar_select %p516, %s513, 9
      %s518 = smul.addr %s515, 10
      %s519 = sadd.s32 %s517, %s518
      %s520 = smul.addr %s519, 4
      %s521 = scalar_lea.vmem %s1, %s520
      %p522 = pneg %p90
      %p523 = pneg %p87
      %s524 = smul.u32 %s28, 2
      %s525 = sadd.s32 %s524, 1
      %p526 = scmp.lt.s32.totalorder %s27, 1
      %s527 = scalar_select %p526, %s27, 1
      %p528 = scmp.lt.s32.totalorder %s525, 9
      %s529 = scalar_select %p528, %s525, 9
      %s530 = smul.addr %s527, 10
      %s531 = sadd.s32 %s529, %s530
      %s532 = smul.addr %s531, 4
      %s533 = scalar_lea.vmem %s2, %s532
      %p534 = pneg %p122
      %p535 = pneg %p119
      %s536 = smul.u32 %s28, 2
      %s537 = sadd.s32 %s536, 1
      %p538 = scmp.lt.s32.totalorder %s27, 1
      %s539 = scalar_select %p538, %s27, 1
      %p540 = scmp.lt.s32.totalorder %s537, 9
      %s541 = scalar_select %p540, %s537, 9
      %s542 = smul.addr %s539, 10
      %s543 = sadd.s32 %s541, %s542
      %s544 = smul.addr %s543, 4
      %s545 = scalar_lea.vmem %s3, %s544
      %p546 = pneg %p154
      %p547 = pneg %p151
      %s548 = smul.u32 %s28, 2
      %s549 = sadd.s32 %s548, 2
      %p550 = scmp.lt.s32.totalorder %s27, 1
      %s551 = scalar_select %p550, %s27, 1
      %p552 = scmp.lt.s32.totalorder %s549, 9
      %s553 = scalar_select %p552, %s549, 9
      %s554 = smul.addr %s551, 10
      %s555 = sadd.s32 %s553, %s554
      %s556 = smul.addr %s555, 4
      %s557 = scalar_lea.vmem %s4, %s556
      %p558 = pneg %p186
      %p559 = pneg %p183
      %s560 = smul.u32 %s28, 2
      %s561 = sadd.s32 %s560, 2
      %p562 = scmp.lt.s32.totalorder %s27, 1
      %s563 = scalar_select %p562, %s27, 1
      %p564 = scmp.lt.s32.totalorder %s561, 9
      %s565 = scalar_select %p564, %s561, 9
      %s566 = smul.addr %s563, 10
      %s567 = sadd.s32 %s565, %s566
      %s568 = smul.addr %s567, 4
      %s569 = scalar_lea.vmem %s5, %s568
      %p570 = pneg %p218
      %p571 = pneg %p215
      %p572 = pneg %p239
      %p573 = pneg %p236
      %p574 = pneg %p260
      %p575 = pneg %p257
      %p576 = pneg %p281
      %p577 = pneg %p278
      %p578 = pneg %p302
      %p579 = pneg %p299
      %p580 = pneg %p323
      %p581 = pneg %p320
      %p582 = pneg %p344
      %p583 = pneg %p341
      %p584 = pneg %p372
      %p585 = pneg %p369
      %p586 = scmp.lt.s32.totalorder %s27, 1
      %s587 = scalar_select %p586, %s27, 1
      %p588 = scmp.lt.s32.totalorder %s28, 3
      %s589 = scalar_select %p588, %s28, 3
      %s590 = smul.addr %s587, 4
      %s591 = sadd.s32 %s589, %s590
      %s592 = smul.addr %s591, 2
      %s593 = scalar_lea.vmem %s12, %s592
      %s594 = smul.u32 %s28, 2
      %p595 = scmp.lt.s32.totalorder %s27, 1
      %s596 = scalar_select %p595, %s27, 1
      %p597 = scmp.lt.s32.totalorder %s594, 9
      %s598 = scalar_select %p597, %s594, 9
      %s599 = smul.addr %s596, 10
      %s600 = sadd.s32 %s598, %s599
      %s601 = smul.addr %s600, 4
      %s602 = scalar_lea.vmem %s0, %s601
      %s603 = smul.u32 %s28, 2
      %s604 = smul.u32 %s28, 2
      %p605 = scmp.lt.s32.totalorder %s27, 1
      %s606 = scalar_select %p605, %s27, 1
      %p607 = scmp.lt.s32.totalorder %s604, 9
      %s608 = scalar_select %p607, %s604, 9
      %s609 = smul.addr %s606, 10
      %s610 = sadd.s32 %s608, %s609
      %s611 = smul.addr %s610, 4
      %s612 = scalar_lea.vmem %s1, %s611
      %s613 = smul.u32 %s28, 2
      %s614 = smul.u32 %s28, 2
      %s615 = sadd.s32 %s614, 1
      %p616 = scmp.lt.s32.totalorder %s27, 1
      %s617 = scalar_select %p616, %s27, 1
      %p618 = scmp.lt.s32.totalorder %s615, 9
      %s619 = scalar_select %p618, %s615, 9
      %s620 = smul.addr %s617, 10
      %s621 = sadd.s32 %s619, %s620
      %s622 = smul.addr %s621, 4
      %s623 = scalar_lea.vmem %s2, %s622
      %s624 = smul.u32 %s28, 2
      %s625 = sadd.s32 %s624, 1
      %s626 = smul.u32 %s28, 2
      %s627 = sadd.s32 %s626, 1
      %p628 = scmp.lt.s32.totalorder %s27, 1
      %s629 = scalar_select %p628, %s27, 1
      %p630 = scmp.lt.s32.totalorder %s627, 9
      %s631 = scalar_select %p630, %s627, 9
      %s632 = smul.addr %s629, 10
      %s633 = sadd.s32 %s631, %s632
      %s634 = smul.addr %s633, 4
      %s635 = scalar_lea.vmem %s3, %s634
      %s636 = smul.u32 %s28, 2
      %s637 = sadd.s32 %s636, 1
      %s638 = smul.u32 %s28, 2
      %s639 = sadd.s32 %s638, 2
      %p640 = scmp.lt.s32.totalorder %s27, 1
      %s641 = scalar_select %p640, %s27, 1
      %p642 = scmp.lt.s32.totalorder %s639, 9
      %s643 = scalar_select %p642, %s639, 9
      %s644 = smul.addr %s641, 10
      %s645 = sadd.s32 %s643, %s644
      %s646 = smul.addr %s645, 4
      %s647 = scalar_lea.vmem %s4, %s646
      %s648 = smul.u32 %s28, 2
      %s649 = sadd.s32 %s648, 2
      %s650 = smul.u32 %s28, 2
      %s651 = sadd.s32 %s650, 2
      %p652 = scmp.lt.s32.totalorder %s27, 1
      %s653 = scalar_select %p652, %s27, 1
      %p654 = scmp.lt.s32.totalorder %s651, 9
      %s655 = scalar_select %p654, %s651, 9
      %s656 = smul.addr %s653, 10
      %s657 = sadd.s32 %s655, %s656
      %s658 = smul.addr %s657, 4
      %s659 = scalar_lea.vmem %s5, %s658
      %s660 = smul.u32 %s28, 2
      %s661 = sadd.s32 %s660, 2
      %p662 = scmp.lt.s32.totalorder %s27, 1
      %s663 = scalar_select %p662, %s27, 1
      %p664 = scmp.lt.s32.totalorder %s28, 3
      %s665 = scalar_select %p664, %s28, 3
      %s666 = smul.addr %s663, 4
      %s667 = sadd.s32 %s665, %s666
      %s668 = smul.addr %s667, 2
      %s669 = scalar_lea.vmem %s12, %s668
      %v671 = vld [vmem:[%s6] sm:$0xf]
      %v672 = vld [vmem:[%s6 + $0x4] sm:$0xf]
      %v673 = vld [vmem:[%s7] sm:$0x1]
      %v674 = vld [vmem:[%s8] sm:$0xff]
      %v675 = vld [vmem:[%s8 + $0x8] sm:$0x1]
      %v676 = vld [vmem:[%s602] sm:$0x7]
      %v678 = vlaneseq
      %v679 = vshrl.u32 %v678, 7
      %v680 = vsub.s32 0, %v679
      %v681 = vrot.slane %v673, %v680
      %v685 = vunpack.c.l.b16 %v671
      %v686 = vunpack.c.l.b16 %v672
      %v687 = vpack.c.b16 %v686, %v685
      %vm689 = vcmask 130048
      %v691 = vsel %vm689, %v676, 0
      %693 = vmatprep.subr.bf16.mxu0 0
      %694 = vmatpush1.bf16.msra.mxu0 %v687
      %695 = vmatprep.subr.bf16.mxu0 0
      %696 = vmatpush1.bf16.msra.mxu0 0
      %697 = vmatprep.subr.bf16.mxu0 0
      %698 = vmatpush1.bf16.msra.mxu0 0
      %699 = vmatprep.subr.bf16.mxu0 0
      %700 = vmatpush1.bf16.msra.mxu0 0
      %701 = vmatprep.subr.bf16.mxu0 0
      %702 = vmatpush1.bf16.msra.mxu0 0
      %703 = vmatprep.subr.bf16.mxu0 0
      %704 = vmatpush1.bf16.msra.mxu0 0
      %705 = vmatprep.subr.bf16.mxu0 0
      %706 = vmatpush1.bf16.msra.mxu0 0
      %707 = vmatprep.subr.bf16.mxu0 0
      %708 = vmatpush1.bf16.msra.mxu0 0
      %709 = vmatprep.subr.bf16.mxu0 0
      %710 = vmatpush1.bf16.msra.mxu0 0
      %711 = vmatprep.subr.bf16.mxu0 0
      %712 = vmatpush1.bf16.msra.mxu0 0
      %713 = vmatprep.subr.bf16.mxu0 0
      %714 = vmatpush1.bf16.msra.mxu0 0
      %715 = vmatprep.subr.bf16.mxu0 0
      %716 = vmatpush1.bf16.msra.mxu0 0
      %717 = vmatprep.subr.bf16.mxu0 0
      %718 = vmatpush1.bf16.msra.mxu0 0
      %719 = vmatprep.subr.bf16.mxu0 0
      %720 = vmatpush1.bf16.msra.mxu0 0
      %721 = vmatprep.subr.bf16.mxu0 0
      %722 = vmatpush1.bf16.msra.mxu0 0
      %723 = vmatprep.subr.bf16.mxu0 0
      %724 = vmatpush1.bf16.msra.mxu0 0
      %725 = vmatprep.mubr.bf16.mxu0 0
      %726 = vmatmul.mubr.bf16.gmra.mrb[0].mxu0 %v691
      %v727 = vpop.f32.mrb[0].mxu0
      %v728 = vadd.f32 %v681, %v727
      %v729 = vpop.f32.mrb[0].mxu0
      %v730 = vpop.f32.mrb[0].mxu0
      %v731 = vpop.f32.mrb[0].mxu0
      %732 = vdwg.mxu0
      %v733 = vmax.f32 %v728, 0.0
      %v734 = vmin.f32 %v733, 6.0
      %s735 = smul.u32 %s28, 2
      %p736 = scmp.ge.s32.totalorder %s735, 1
      %p737 = scmp.le.s32.totalorder %s735, 8
      %p738 = pnand %p736, %p737
      %p739 = pneg %p738
      %v740 = vlaneseq
      %v741 = vshrl.u32 %v740, 7
      %v742 = vmul.u32 %v741, 2
      %vm743 = vcmp.ge.s32.totalorder %v742, 1
      %vm744 = vcmp.le.s32.totalorder %v742, 8
      %vm745 = vmand %vm743, %vm744
      %s746 = scalar_select %p739, 1, 0
      %v747 = vstv %s746
      %vm748 = vcmp.eq.s32.totalorder %v747, 1
      %vm749 = vmand %vm748, %vm745
      %v750 = vsel %vm749, 1, 0
      %vm751 = vcmp.eq.s32.totalorder %v750, 1
      %v752 = vsel %vm751, %v734, 0.0
      %v753 = vld [vmem:[%s612] sm:$0x7]
      %v755 = vsel %vm689, %v753, 0
      %757 = vmatprep.subr.bf16.mxu0 0
      %758 = vmatpush1.bf16.msra.mxu0 %v687
      %759 = vmatprep.subr.bf16.mxu0 0
      %760 = vmatpush1.bf16.msra.mxu0 0
      %761 = vmatprep.subr.bf16.mxu0 0
      %762 = vmatpush1.bf16.msra.mxu0 0
      %763 = vmatprep.subr.bf16.mxu0 0
      %764 = vmatpush1.bf16.msra.mxu0 0
      %765 = vmatprep.subr.bf16.mxu0 0
      %766 = vmatpush1.bf16.msra.mxu0 0
      %767 = vmatprep.subr.bf16.mxu0 0
      %768 = vmatpush1.bf16.msra.mxu0 0
      %769 = vmatprep.subr.bf16.mxu0 0
      %770 = vmatpush1.bf16.msra.mxu0 0
      %771 = vmatprep.subr.bf16.mxu0 0
      %772 = vmatpush1.bf16.msra.mxu0 0
      %773 = vmatprep.subr.bf16.mxu0 0
      %774 = vmatpush1.bf16.msra.mxu0 0
      %775 = vmatprep.subr.bf16.mxu0 0
      %776 = vmatpush1.bf16.msra.mxu0 0
      %777 = vmatprep.subr.bf16.mxu0 0
      %778 = vmatpush1.bf16.msra.mxu0 0
      %779 = vmatprep.subr.bf16.mxu0 0
      %780 = vmatpush1.bf16.msra.mxu0 0
      %781 = vmatprep.subr.bf16.mxu0 0
      %782 = vmatpush1.bf16.msra.mxu0 0
      %783 = vmatprep.subr.bf16.mxu0 0
      %784 = vmatpush1.bf16.msra.mxu0 0
      %785 = vmatprep.subr.bf16.mxu0 0
      %786 = vmatpush1.bf16.msra.mxu0 0
      %787 = vmatprep.subr.bf16.mxu0 0
      %788 = vmatpush1.bf16.msra.mxu0 0
      %789 = vmatprep.mubr.bf16.mxu0 0
      %790 = vmatmul.mubr.bf16.gmra.mrb[0].mxu0 %v755
      %v791 = vpop.f32.mrb[0].mxu0
      %v792 = vadd.f32 %v681, %v791
      %v793 = vpop.f32.mrb[0].mxu0
      %v794 = vpop.f32.mrb[0].mxu0
      %v795 = vpop.f32.mrb[0].mxu0
      %796 = vdwg.mxu0
      %v797 = vmax.f32 %v792, 0.0
      %v798 = vmin.f32 %v797, 6.0
      %v799 = vadd.s32 %v742, 1
      %vm800 = vcmp.ge.s32.totalorder %v799, 1
      %vm801 = vcmp.le.s32.totalorder %v799, 8
      %vm802 = vmand %vm800, %vm801
      %vm803 = vmand %vm748, %vm802
      %v804 = vsel %vm803, 1, 0
      %vm805 = vcmp.eq.s32.totalorder %v804, 1
      %v806 = vsel %vm805, %v798, 0.0
      %v807 = vld [vmem:[%s623] sm:$0x7]
      %v809 = vsel %vm689, %v807, 0
      %811 = vmatprep.subr.bf16.mxu0 0
      %812 = vmatpush1.bf16.msra.mxu0 %v687
      %813 = vmatprep.subr.bf16.mxu0 0
      %814 = vmatpush1.bf16.msra.mxu0 0
      %815 = vmatprep.subr.bf16.mxu0 0
      %816 = vmatpush1.bf16.msra.mxu0 0
      %817 = vmatprep.subr.bf16.mxu0 0
      %818 = vmatpush1.bf16.msra.mxu0 0
      %819 = vmatprep.subr.bf16.mxu0 0
      %820 = vmatpush1.bf16.msra.mxu0 0
      %821 = vmatprep.subr.bf16.mxu0 0
      %822 = vmatpush1.bf16.msra.mxu0 0
      %823 = vmatprep.subr.bf16.mxu0 0
      %824 = vmatpush1.bf16.msra.mxu0 0
      %825 = vmatprep.subr.bf16.mxu0 0
      %826 = vmatpush1.bf16.msra.mxu0 0
      %827 = vmatprep.subr.bf16.mxu0 0
      %828 = vmatpush1.bf16.msra.mxu0 0
      %829 = vmatprep.subr.bf16.mxu0 0
      %830 = vmatpush1.bf16.msra.mxu0 0
      %831 = vmatprep.subr.bf16.mxu0 0
      %832 = vmatpush1.bf16.msra.mxu0 0
      %833 = vmatprep.subr.bf16.mxu0 0
      %834 = vmatpush1.bf16.msra.mxu0 0
      %835 = vmatprep.subr.bf16.mxu0 0
      %836 = vmatpush1.bf16.msra.mxu0 0
      %837 = vmatprep.subr.bf16.mxu0 0
      %838 = vmatpush1.bf16.msra.mxu0 0
      %839 = vmatprep.subr.bf16.mxu0 0
      %840 = vmatpush1.bf16.msra.mxu0 0
      %841 = vmatprep.subr.bf16.mxu0 0
      %842 = vmatpush1.bf16.msra.mxu0 0
      %843 = vmatprep.mubr.bf16.mxu0 0
      %844 = vmatmul.mubr.bf16.gmra.mrb[0].mxu0 %v809
      %v845 = vpop.f32.mrb[0].mxu0
      %v846 = vadd.f32 %v681, %v845
      %v847 = vpop.f32.mrb[0].mxu0
      %v848 = vpop.f32.mrb[0].mxu0
      %v849 = vpop.f32.mrb[0].mxu0
      %850 = vdwg.mxu0
      %v851 = vmax.f32 %v846, 0.0
      %v852 = vmin.f32 %v851, 6.0
      %s853 = sadd.s32 %s735, 1
      %p854 = scmp.ge.s32.totalorder %s853, 1
      %p855 = scmp.le.s32.totalorder %s853, 8
      %p856 = pnand %p854, %p855
      %p857 = pneg %p856
      %s858 = scalar_select %p857, 1, 0
      %v859 = vstv %s858
      %vm860 = vcmp.eq.s32.totalorder %v859, 1
      %vm861 = vmand %vm860, %vm745
      %v862 = vsel %vm861, 1, 0
      %vm863 = vcmp.eq.s32.totalorder %v862, 1
      %v864 = vsel %vm863, %v852, 0.0
      %v865 = vld [vmem:[%s635] sm:$0x7]
      %v867 = vsel %vm689, %v865, 0
      %869 = vmatprep.subr.bf16.mxu0 0
      %870 = vmatpush1.bf16.msra.mxu0 %v687
      %871 = vmatprep.subr.bf16.mxu0 0
      %872 = vmatpush1.bf16.msra.mxu0 0
      %873 = vmatprep.subr.bf16.mxu0 0
      %874 = vmatpush1.bf16.msra.mxu0 0
      %875 = vmatprep.subr.bf16.mxu0 0
      %876 = vmatpush1.bf16.msra.mxu0 0
      %877 = vmatprep.subr.bf16.mxu0 0
      %878 = vmatpush1.bf16.msra.mxu0 0
      %879 = vmatprep.subr.bf16.mxu0 0
      %880 = vmatpush1.bf16.msra.mxu0 0
      %881 = vmatprep.subr.bf16.mxu0 0
      %882 = vmatpush1.bf16.msra.mxu0 0
      %883 = vmatprep.subr.bf16.mxu0 0
      %884 = vmatpush1.bf16.msra.mxu0 0
      %885 = vmatprep.subr.bf16.mxu0 0
      %886 = vmatpush1.bf16.msra.mxu0 0
      %887 = vmatprep.subr.bf16.mxu0 0
      %888 = vmatpush1.bf16.msra.mxu0 0
      %889 = vmatprep.subr.bf16.mxu0 0
      %890 = vmatpush1.bf16.msra.mxu0 0
      %891 = vmatprep.subr.bf16.mxu0 0
      %892 = vmatpush1.bf16.msra.mxu0 0
      %893 = vmatprep.subr.bf16.mxu0 0
      %894 = vmatpush1.bf16.msra.mxu0 0
      %895 = vmatprep.subr.bf16.mxu0 0
      %896 = vmatpush1.bf16.msra.mxu0 0
      %897 = vmatprep.subr.bf16.mxu0 0
      %898 = vmatpush1.bf16.msra.mxu0 0
      %899 = vmatprep.subr.bf16.mxu0 0
      %900 = vmatpush1.bf16.msra.mxu0 0
      %901 = vmatprep.mubr.bf16.mxu0 0
      %902 = vmatmul.mubr.bf16.gmra.mrb[0].mxu0 %v867
      %v903 = vpop.f32.mrb[0].mxu0
      %v904 = vadd.f32 %v681, %v903
      %v905 = vpop.f32.mrb[0].mxu0
      %v906 = vpop.f32.mrb[0].mxu0
      %v907 = vpop.f32.mrb[0].mxu0
      %908 = vdwg.mxu0
      %v909 = vmax.f32 %v904, 0.0
      %v910 = vmin.f32 %v909, 6.0
      %vm911 = vmand %vm860, %vm802
      %v912 = vsel %vm911, 1, 0
      %vm913 = vcmp.eq.s32.totalorder %v912, 1
      %v914 = vsel %vm913, %v910, 0.0
      %v915 = vld [vmem:[%s647] sm:$0x7]
      %v917 = vsel %vm689, %v915, 0
      %919 = vmatprep.subr.bf16.mxu0 0
      %920 = vmatpush1.bf16.msra.mxu0 %v687
      %921 = vmatprep.subr.bf16.mxu0 0
      %922 = vmatpush1.bf16.msra.mxu0 0
      %923 = vmatprep.subr.bf16.mxu0 0
      %924 = vmatpush1.bf16.msra.mxu0 0
      %925 = vmatprep.subr.bf16.mxu0 0
      %926 = vmatpush1.bf16.msra.mxu0 0
      %927 = vmatprep.subr.bf16.mxu0 0
      %928 = vmatpush1.bf16.msra.mxu0 0
      %929 = vmatprep.subr.bf16.mxu0 0
      %930 = vmatpush1.bf16.msra.mxu0 0
      %931 = vmatprep.subr.bf16.mxu0 0
      %932 = vmatpush1.bf16.msra.mxu0 0
      %933 = vmatprep.subr.bf16.mxu0 0
      %934 = vmatpush1.bf16.msra.mxu0 0
      %935 = vmatprep.subr.bf16.mxu0 0
      %936 = vmatpush1.bf16.msra.mxu0 0
      %937 = vmatprep.subr.bf16.mxu0 0
      %938 = vmatpush1.bf16.msra.mxu0 0
      %939 = vmatprep.subr.bf16.mxu0 0
      %940 = vmatpush1.bf16.msra.mxu0 0
      %941 = vmatprep.subr.bf16.mxu0 0
      %942 = vmatpush1.bf16.msra.mxu0 0
      %943 = vmatprep.subr.bf16.mxu0 0
      %944 = vmatpush1.bf16.msra.mxu0 0
      %945 = vmatprep.subr.bf16.mxu0 0
      %946 = vmatpush1.bf16.msra.mxu0 0
      %947 = vmatprep.subr.bf16.mxu0 0
      %948 = vmatpush1.bf16.msra.mxu0 0
      %949 = vmatprep.subr.bf16.mxu0 0
      %950 = vmatpush1.bf16.msra.mxu0 0
      %951 = vmatprep.mubr.bf16.mxu0 0
      %952 = vmatmul.mubr.bf16.gmra.mrb[0].mxu0 %v917
      %v953 = vpop.f32.mrb[0].mxu0
      %v954 = vadd.f32 %v681, %v953
      %v955 = vpop.f32.mrb[0].mxu0
      %v956 = vpop.f32.mrb[0].mxu0
      %v957 = vpop.f32.mrb[0].mxu0
      %958 = vdwg.mxu0
      %v959 = vmax.f32 %v954, 0.0
      %v960 = vmin.f32 %v959, 6.0
      %s961 = sadd.s32 %s735, 2
      %p962 = scmp.ge.s32.totalorder %s961, 1
      %p963 = scmp.le.s32.totalorder %s961, 8
      %p964 = pnand %p962, %p963
      %p965 = pneg %p964
      %s966 = scalar_select %p965, 1, 0
      %v967 = vstv %s966
      %vm968 = vcmp.eq.s32.totalorder %v967, 1
      %vm969 = vmand %vm968, %vm745
      %v970 = vsel %vm969, 1, 0
      %vm971 = vcmp.eq.s32.totalorder %v970, 1
      %v972 = vsel %vm971, %v960, 0.0
      %v973 = vld [vmem:[%s659] sm:$0x7]
      %v975 = vsel %vm689, %v973, 0
      %977 = vmatprep.subr.bf16.mxu0 0
      %978 = vmatpush1.bf16.msra.mxu0 %v687
      %979 = vmatprep.subr.bf16.mxu0 0
      %980 = vmatpush1.bf16.msra.mxu0 0
      %981 = vmatprep.subr.bf16.mxu0 0
      %982 = vmatpush1.bf16.msra.mxu0 0
      %983 = vmatprep.subr.bf16.mxu0 0
      %984 = vmatpush1.bf16.msra.mxu0 0
      %985 = vmatprep.subr.bf16.mxu0 0
      %986 = vmatpush1.bf16.msra.mxu0 0
      %987 = vmatprep.subr.bf16.mxu0 0
      %988 = vmatpush1.bf16.msra.mxu0 0
      %989 = vmatprep.subr.bf16.mxu0 0
      %990 = vmatpush1.bf16.msra.mxu0 0
      %991 = vmatprep.subr.bf16.mxu0 0
      %992 = vmatpush1.bf16.msra.mxu0 0
      %993 = vmatprep.subr.bf16.mxu0 0
      %994 = vmatpush1.bf16.msra.mxu0 0
      %995 = vmatprep.subr.bf16.mxu0 0
      %996 = vmatpush1.bf16.msra.mxu0 0
      %997 = vmatprep.subr.bf16.mxu0 0
      %998 = vmatpush1.bf16.msra.mxu0 0
      %999 = vmatprep.subr.bf16.mxu0 0
      %1000 = vmatpush1.bf16.msra.mxu0 0
      %1001 = vmatprep.subr.bf16.mxu0 0
      %1002 = vmatpush1.bf16.msra.mxu0 0
      %1003 = vmatprep.subr.bf16.mxu0 0
      %1004 = vmatpush1.bf16.msra.mxu0 0
      %1005 = vmatprep.subr.bf16.mxu0 0
      %1006 = vmatpush1.bf16.msra.mxu0 0
      %1007 = vmatprep.subr.bf16.mxu0 0
      %1008 = vmatpush1.bf16.msra.mxu0 0
      %1009 = vmatprep.mubr.bf16.mxu0 0
      %1010 = vmatmul.mubr.bf16.gmra.mrb[0].mxu0 %v975
      %v1011 = vpop.f32.mrb[0].mxu0
      %v1012 = vadd.f32 %v681, %v1011
      %v1013 = vpop.f32.mrb[0].mxu0
      %v1014 = vpop.f32.mrb[0].mxu0
      %v1015 = vpop.f32.mrb[0].mxu0
      %1016 = vdwg.mxu0
      %v1017 = vmax.f32 %v1012, 0.0
      %v1018 = vmin.f32 %v1017, 6.0
      %vm1019 = vmand %vm968, %vm802
      %v1020 = vsel %vm1019, 1, 0
      %vm1021 = vcmp.eq.s32.totalorder %v1020, 1
      %v1022 = vsel %vm1021, %v1018, 0.0
      %v1023 = vlaneseq
      %v1024 = vshrl.u32 %v1023, 7
      %v1025 = vsub.s32 0, %v1024
      %v1026 = vrot.slane %v674, %v1025
      %v1027 = vmul.f32 %v752, %v1026
      %v1028 = vadd.f32 %v1027, 0.0
      %v1029 = vlaneseq
      %v1030 = vshrl.u32 %v1029, 7
      %v1031 = vsub.s32 1, %v1030
      %v1032 = vrot.slane %v674, %v1031
      %v1033 = vmul.f32 %v806, %v1032
      %v1034 = vadd.f32 %v1028, %v1033
      %v1035 = vlaneseq
      %v1036 = vshrl.u32 %v1035, 7
      %v1037 = vsub.s32 2, %v1036
      %v1038 = vrot.slane %v674, %v1037
      %v1039 = vmul.f32 %v752, %v1038
      %v1041 = vrot.slane %v1039, 1
      %v1043 = vadd.f32 %v1034, %v1041
      %v1044 = vlaneseq
      %v1045 = vshrl.u32 %v1044, 7
      %v1046 = vsub.s32 3, %v1045
      %v1047 = vrot.slane %v674, %v1046
      %v1048 = vmul.f32 %v864, %v1047
      %v1049 = vadd.f32 %v1043, %v1048
      %v1050 = vlaneseq
      %v1051 = vshrl.u32 %v1050, 7
      %v1052 = vsub.s32 4, %v1051
      %v1053 = vrot.slane %v674, %v1052
      %v1054 = vmul.f32 %v914, %v1053
      %v1055 = vadd.f32 %v1049, %v1054
      %v1056 = vlaneseq
      %v1057 = vshrl.u32 %v1056, 7
      %v1058 = vsub.s32 5, %v1057
      %v1059 = vrot.slane %v674, %v1058
      %v1060 = vmul.f32 %v864, %v1059
      %v1062 = vrot.slane %v1060, 1
      %v1064 = vadd.f32 %v1055, %v1062
      %v1065 = vlaneseq
      %v1066 = vshrl.u32 %v1065, 7
      %v1067 = vsub.s32 6, %v1066
      %v1068 = vrot.slane %v674, %v1067
      %v1069 = vmul.f32 %v972, %v1068
      %v1070 = vadd.f32 %v1064, %v1069
      %v1071 = vlaneseq
      %v1072 = vshrl.u32 %v1071, 7
      %v1073 = vsub.s32 7, %v1072
      %v1074 = vrot.slane %v674, %v1073
      %v1075 = vmul.f32 %v1022, %v1074
      %v1076 = vadd.f32 %v1070, %v1075
      %v1077 = vlaneseq
      %v1078 = vshrl.u32 %v1077, 7
      %v1079 = vsub.s32 0, %v1078
      %v1080 = vrot.slane %v675, %v1079
      %v1081 = vmul.f32 %v972, %v1080
      %v1083 = vrot.slane %v1081, 1
      %v1085 = vadd.f32 %v1076, %v1083
      %v1086 = vld [vmem:[%s9] sm:$0x1]
      %v1088 = vlaneseq
      %v1089 = vshrl.u32 %v1088, 7
      %v1090 = vsub.s32 0, %v1089
      %v1091 = vrot.slane %v1086, %v1090
      %v1093 = vadd.f32 %v1085, %v1091
      %v1094 = vmax.f32 %v1093, 0.0
      %v1095 = vmin.f32 %v1094, 6.0
      %v1096 = vpack.c.bf16 %v1095, %v1095
      %v1097 = vld [vmem:[%s10] sm:$0xf]
      %v1098 = vld [vmem:[%s10 + $0x4] sm:$0xf]
      %v1099 = vld [vmem:[%s10 + $0x8] sm:$0xf]
      %v1100 = vld [vmem:[%s10 + $0xc] sm:$0xf]
      %v1101 = vld [vmem:[%s10 + $0x10] sm:$0xf]
      %v1102 = vld [vmem:[%s10 + $0x14] sm:$0xf]
      %v1103 = vld [vmem:[%s10 + $0x18] sm:$0xf]
      %v1104 = vld [vmem:[%s10 + $0x1c] sm:$0xf]
      %v1105 = vld [vmem:[%s10 + $0x20] sm:$0xf]
      %v1106 = vld [vmem:[%s10 + $0x24] sm:$0xf]
      %v1107 = vld [vmem:[%s10 + $0x28] sm:$0xf]
      %v1108 = vld [vmem:[%s10 + $0x2c] sm:$0xf]
      %v1109 = vld [vmem:[%s11] sm:$0x1]
      %v1111 = vlaneseq
      %v1112 = vshrl.u32 %v1111, 7
      %v1113 = vsub.s32 0, %v1112
      %v1114 = vrot.slane %v1109, %v1113
      %v1128 = vunpack.c.l.b16 %v1097
      %v1129 = vunpack.c.l.b16 %v1098
      %v1130 = vunpack.c.l.b16 %v1099
      %v1131 = vunpack.c.l.b16 %v1100
      %v1132 = vunpack.c.l.b16 %v1101
      %v1133 = vunpack.c.l.b16 %v1102
      %v1134 = vunpack.c.l.b16 %v1103
      %v1135 = vunpack.c.l.b16 %v1104
      %v1136 = vunpack.c.l.b16 %v1105
      %v1137 = vunpack.c.l.b16 %v1106
      %v1138 = vunpack.c.l.b16 %v1107
      %v1139 = vunpack.c.l.b16 %v1108
      %v1140 = vpack.c.b16 %v1129, %v1128
      %v1141 = vpack.c.b16 %v1131, %v1130
      %v1142 = vpack.c.b16 %v1133, %v1132
      %v1143 = vpack.c.b16 %v1135, %v1134
      %v1144 = vpack.c.b16 %v1137, %v1136
      %v1145 = vpack.c.b16 %v1139, %v1138
      %vm1152 = vcmask 785408
      %v1154 = vsel %vm1152, %v1096, 0
      %1156 = vmatprep.subr.bf16.mxu0 0
      %1157 = vmatpush1.bf16.msra.mxu0 %v1140
      %1158 = vmatprep.subr.bf16.mxu0 0
      %1159 = vmatpush1.bf16.msra.mxu0 %v1141
      %1160 = vmatprep.subr.bf16.mxu0 0
      %1161 = vmatpush1.bf16.msra.mxu0 %v1142
      %1162 = vmatprep.subr.bf16.mxu0 0
      %1163 = vmatpush1.bf16.msra.mxu0 %v1143
      %1164 = vmatprep.subr.bf16.mxu0 0
      %1165 = vmatpush1.bf16.msra.mxu0 %v1144
      %1166 = vmatprep.subr.bf16.mxu0 0
      %1167 = vmatpush1.bf16.msra.mxu0 %v1145
      %1168 = vmatprep.subr.bf16.mxu0 0
      %1169 = vmatpush1.bf16.msra.mxu0 0
      %1170 = vmatprep.subr.bf16.mxu0 0
      %1171 = vmatpush1.bf16.msra.mxu0 0
      %1172 = vmatprep.subr.bf16.mxu0 0
      %1173 = vmatpush1.bf16.msra.mxu0 0
      %1174 = vmatprep.subr.bf16.mxu0 0
      %1175 = vmatpush1.bf16.msra.mxu0 0
      %1176 = vmatprep.subr.bf16.mxu0 0
      %1177 = vmatpush1.bf16.msra.mxu0 0
      %1178 = vmatprep.subr.bf16.mxu0 0
      %1179 = vmatpush1.bf16.msra.mxu0 0
      %1180 = vmatprep.subr.bf16.mxu0 0
      %1181 = vmatpush1.bf16.msra.mxu0 0
      %1182 = vmatprep.subr.bf16.mxu0 0
      %1183 = vmatpush1.bf16.msra.mxu0 0
      %1184 = vmatprep.subr.bf16.mxu0 0
      %1185 = vmatpush1.bf16.msra.mxu0 0
      %1186 = vmatprep.subr.bf16.mxu0 0
      %1187 = vmatpush1.bf16.msra.mxu0 0
      %1188 = vmatprep.mubr.bf16.mxu0 0
      %1189 = vmatmul.mubr.bf16.gmra.mrb[0].mxu0 %v1154
      %v1190 = vpop.f32.mrb[0].mxu0
      %v1191 = vadd.f32 %v1114, %v1190
      %v1192 = vpop.f32.mrb[0].mxu0
      %v1193 = vpop.f32.mrb[0].mxu0
      %v1194 = vpop.f32.mrb[0].mxu0
      %1195 = vdwg.mxu0
      %v1196 = vpack.c.bf16 %v1191, %v1191
      %vm1197 = vcmask 189440
      %1198 = vst.msk [vmem:[%s669] sm:$0x3] %vm1197, %v1196
      %p1199 = scmp.lt.s32.totalorder %s27, 1
      %s1200 = scalar_select %p1199, %s27, 1
      %p1201 = scmp.lt.s32.totalorder %s28, 3
      %s1202 = scalar_select %p1201, %s28, 3
      %s1203 = smul.addr %s1200, 4
      %s1204 = sadd.s32 %s1202, %s1203
      %s1205 = smul.addr %s1204, 2
      %s1206 = scalar_lea.vmem %s12, %s1205
      // Predicated region
      $region69: #{_lambda_.7} parent=67 // pred_check
        %p1207 = pneg %p369
      $region70: #{_lambda_.7} parent=67 // pred_check_branch
        %1209 = sbr.rel (%p1207) target = $region72
      $region71: #{_lambda_.7} parent=67 // pred_region
        _
      $region72: #{_lambda_.7} parent=67 // pred_fallthru
        _
    $region68: #{_lambda_.7} parent=5 // pred_fallthru
      _
    %p1210 = scmp.le.s32.totalorder 2, %s18
    // Predicated region
    $region73: #{_lambda_.7} parent=5 // pred_check
      %p1211 = pneg %p1210
    $region74: #{_lambda_.7} parent=5 // pred_check_branch
      %1213 = sbr.rel (%p1211) target = $region76
    $region75: #{_lambda_.7} parent=5 // pred_region
      %s1214 = ssub.s32 %s18, 2
      // Predicated region
      $region77: #{_lambda_.7} parent=75 // pred_check
        %p1215 = pneg %p375
      $region78: #{_lambda_.7} parent=75 // pred_check_branch
        %1217 = sbr.rel (%p1215) target = $region80
      $region79: #{_lambda_.7} parent=75 // pred_region
        %p1218 = scmp.lt.s32.totalorder %s29, 1
        %s1219 = scalar_select %p1218, %s29, 1
        %p1220 = scmp.lt.s32.totalorder %s30, 3
        %s1221 = scalar_select %p1220, %s30, 3
        %s1222 = smul.addr %s1219, 4
        %s1223 = sadd.s32 %s1221, %s1222
        %s1224 = smul.addr %s1223, 2
        %s1225 = scalar_lea.vmem %s12, %s1224
      $region80: #{_lambda_.7} parent=75 // pred_fallthru
        _
    $region76: #{_lambda_.7} parent=5 // pred_fallthru
      _
  $region6: #{_lambda_.7} parent=0 // loop_footer
    %s22 = sadd.s32 1, %s18
  $region7: #{_lambda_.7} parent=0 // loop_footer_branch
    %17 = sbr.rel target = $region3
  $region8: #{_lambda_.7} parent=0 // loop_exit
    _

</llo_original>
